<compile_context>
chip_gen: v5e
topology: v5e:2x2
jax: 0.10.0
libtpu: 0.0.40
codegen_flags: <defaults>
</compile_context>

<pallas_src>
import jax
import jax.numpy as jnp
from jax import lax
from jax.experimental import pallas as pl
from jax.experimental.pallas import tpu as pltpu

INPUT_DIM = 33
HIDDEN_DIM = 128
OUTPUT_DIM = 15
N_LAYERS = 2

OUT_PAD = 128          # lane-dense logits slab; sliced to OUTPUT_DIM outside
B_BLK_MAX = 128        # max batch rows per grid block (MXU row fill)
B_ALIGN = 16           # bf16 packs 16 rows/sublane tile -> batch tiles %16
T_CHUNK_MAX = 64       # time steps whose layer-0 projection is staged in VMEM
UNROLL = 4             # partial unroll of the recurrent loop (LLO visibility)


def _round_up(a, m):
    return (a + m - 1) // m * m


# ----------------------------------------------------------------------------
# Fused Pallas kernel factory: 2-layer GRU (wavefront, chunked) + softmax + FC
# ----------------------------------------------------------------------------
def _make_kernel(t_total, t_chunk, mask_tail):
    """Builds the fused kernel for static (t_total, t_chunk, mask_tail)."""

    def kernel(x_ref, h0_ref,
               wih0_ref, whh0_ref, bih0_ref, bhh0_ref,
               wih1_ref, whh1_ref, bih1_ref, bhh1_ref,
               wfc_ref, bfc_ref,
               logits_ref, hN_ref,
               gi0_sc, h0_sc, h1_sc):
        """Grid = (batch blocks [parallel], time chunks [arbitrary]).

        x_ref:     (1, t_chunk*B, D)  bf16, row = t_in_chunk*B + b
        h0_ref:    (2, B, H)          f32 initial hidden states
        wih*/whh*: (D_in|H, 3H)       bf16 (transposed vs. PyTorch)
        b*_ref:    (1, 3H)            f32
        wfc_ref:   (H, OUT_PAD) f32, bfc_ref: (1, OUT_PAD) f32
        logits_ref:(B, OUT_PAD) out, hN_ref: (2, B, H) out
        gi0_sc:    (t_chunk*B, 3H) bf16  -- staged layer-0 input projections
        h0_sc/h1_sc: (B, H) f32          -- hidden carry across time chunks
        """
        B = h0_sc.shape[0]
        H = h0_sc.shape[1]
        chunk = pl.program_id(1)
        n_chunks = pl.num_programs(1)

        # ---- carry init: load h0 into VMEM scratch at the first time chunk --
        @pl.when(chunk == 0)
        def _():
            h0_sc[...] = h0_ref[0]
            h1_sc[...] = h0_ref[1]

        # ---- hoisted bias broadcasts (weights stay as refs inside the dots) -
        bhh0 = jnp.broadcast_to(bhh0_ref[...], (B, 3 * H))
        bhh1 = jnp.broadcast_to(bhh1_ref[...], (B, 3 * H))
        bih1 = jnp.broadcast_to(bih1_ref[...], (B, 3 * H))

        # ---- layer-0 input projection for this chunk: ONE bf16 GEMM ---------
        gi0 = jnp.dot(x_ref[0], wih0_ref[...],
                      preferred_element_type=jnp.float32) + bih0_ref[...]
        gi0_sc[...] = gi0.astype(gi0_sc.dtype)

        def gru_cell(gi, gh, h_prev):
            # PyTorch gate order: r, z, n  (all gate math in f32)
            r = jax.nn.sigmoid(gi[:, 0 * H:1 * H] + gh[:, 0 * H:1 * H])
            z = jax.nn.sigmoid(gi[:, 1 * H:2 * H] + gh[:, 1 * H:2 * H])
            n = jnp.tanh(gi[:, 2 * H:3 * H] + r * gh[:, 2 * H:3 * H])
            return (1.0 - z) * n + z * h_prev

        def step(t, carry):
            h0_prev, h1_prev = carry
            row = pl.multiple_of(t * B, B)          # 16-aligned bf16 slice
            gi0_t = gi0_sc[pl.ds(row, B), :].astype(jnp.float32)
            # layer 0: only the recurrent matmul is on the serial path
            gh0 = jnp.dot(h0_prev.astype(jnp.bfloat16), whh0_ref[...],
                          preferred_element_type=jnp.float32) + bhh0
            h0_new = gru_cell(gi0_t, gh0, h0_prev)
            # layer 1 (wavefront): consumes h0_new directly
            gi1 = jnp.dot(h0_new.astype(jnp.bfloat16), wih1_ref[...],
                          preferred_element_type=jnp.float32) + bih1
            gh1 = jnp.dot(h1_prev.astype(jnp.bfloat16), whh1_ref[...],
                          preferred_element_type=jnp.float32) + bhh1
            h1_new = gru_cell(gi1, gh1, h1_prev)
            if mask_tail:
                valid = (chunk * t_chunk + t) < t_total
                h0_new = jnp.where(valid, h0_new, h0_prev)
                h1_new = jnp.where(valid, h1_new, h1_prev)
            return h0_new, h1_new

        # ---- recurrent loop over this chunk: fori_loop, partial unroll ------
        def outer(i, carry):
            base = i * UNROLL
            for j in range(UNROLL):                 # t_chunk % UNROLL == 0
                carry = step(base + j, carry)
            return carry

        h0, h1 = lax.fori_loop(0, t_chunk // UNROLL, outer,
                               (h0_sc[...], h1_sc[...]))
        h0_sc[...] = h0
        h1_sc[...] = h1

        # ---- last chunk: final hidden states + fused softmax/FC head --------
        @pl.when(chunk == n_chunks - 1)
        def _():
            hN_ref[0] = h0
            hN_ref[1] = h1
            m = jnp.max(h1, axis=-1, keepdims=True)
            e = jnp.exp(h1 - m)
            s = e * pl.reciprocal(jnp.sum(e, axis=-1, keepdims=True),
                                  approx=True)
            logits_ref[...] = jnp.dot(s, wfc_ref[...],
                                      preferred_element_type=jnp.float32) \
                              + bfc_ref[...]

    return kernel


# ----------------------------------------------------------------------------
# Parameter prep (one-time) and forward wrapper
# ----------------------------------------------------------------------------
def prepare_params(params):
    """One-time layout transform: transpose GRU weights to bf16, pad FC."""
    prepped = {"gru": []}
    for (w_ih, w_hh, b_ih, b_hh) in params["gru"]:
        prepped["gru"].append((
            jnp.asarray(w_ih.T, jnp.bfloat16),         # (D_in, 3H) MXU operand
            jnp.asarray(w_hh.T, jnp.bfloat16),         # (H, 3H)    MXU operand
            jnp.asarray(b_ih[None, :], jnp.float32),   # (1, 3H)
            jnp.asarray(b_hh[None, :], jnp.float32),   # (1, 3H)
        ))
    w_fc, b_fc = params["fc"]
    O, H = w_fc.shape
    w_fc_pad = jnp.zeros((H, OUT_PAD), jnp.float32).at[:, :O].set(w_fc.T)
    b_fc_pad = jnp.zeros((1, OUT_PAD), jnp.float32).at[0, :O].set(b_fc)
    prepped["fc"] = (w_fc_pad, b_fc_pad)
    return prepped


@jax.jit
def grunet_forward(x, h, prepped):
    """Matches GRUNet.forward: (fc(softmax(gru_out[:, -1])), h_final).

    x: (B, T, input_dim) batch-first (PyTorch), h: (n_layers, B, hidden_dim).
    """
    B, T, D = x.shape
    H = h.shape[-1]

    # Batch tiling: fill MXU rows for big batches, stay small for tiny ones;
    # 16-alignment keeps bf16 sublane packing; nb >= 2 (large B) lets the
    # "parallel" axis shard across the two v7x TensorCores.
    b_blk = min(B_BLK_MAX, _round_up(B, B_ALIGN))
    B_pad = _round_up(B, b_blk)
    nb = B_pad // b_blk

    # Time chunking: bounds gi0 staging VMEM for any T and lets BlockSpec
    # stream/overlap the next x chunk while the recurrent loop runs.
    t_chunk = min(T_CHUNK_MAX, _round_up(T, 8))
    T_pad = _round_up(T, t_chunk)
    nt = T_pad // t_chunk
    mask_tail = T_pad != T

    x_p = jnp.pad(x.astype(jnp.float32),
                  ((0, B_pad - B), (0, T_pad - T), (0, 0)))
    h_p = jnp.pad(h.astype(jnp.float32), ((0, 0), (0, B_pad - B), (0, 0)))

    # Per batch-block, time-major row layout: row = t*b_blk + b.  bf16 halves
    # the x DMA bytes; layout plumbing done once in XLA, not in-kernel.
    x_blk = (x_p.reshape(nb, b_blk, T_pad, D)
                 .transpose(0, 2, 1, 3)
                 .reshape(nb, T_pad * b_blk, D)
                 .astype(jnp.bfloat16))

    (w_ih0, w_hh0, b_ih0, b_hh0), (w_ih1, w_hh1, b_ih1, b_hh1) = prepped["gru"]
    w_fc, b_fc = prepped["fc"]

    kernel = _make_kernel(T, t_chunk, mask_tail)

    def wspec(w):                                   # whole-array weight blocks
        return pl.BlockSpec(w.shape, lambda n, t: (0, 0))

    flops = (2 * B_pad * T_pad * 3 * H * (D + 3 * H)
             + 2 * B_pad * H * OUT_PAD)
    transcendentals = B_pad * T_pad * 6 * H + B_pad * H
    bytes_accessed = (x_blk.size * 2 + h_p.size * 4
                      + (w_ih0.size + w_hh0.size + w_ih1.size + w_hh1.size) * 2
                      + (w_fc.size + b_fc.size) * 4
                      + B_pad * OUT_PAD * 4 + N_LAYERS * B_pad * H * 4)

    logits_pad, h_new_pad = pl.pallas_call(
        kernel,
        out_shape=(jax.ShapeDtypeStruct((B_pad, OUT_PAD), jnp.float32),
                   jax.ShapeDtypeStruct((N_LAYERS, B_pad, H), jnp.float32)),
        grid_spec=pltpu.PrefetchScalarGridSpec(
            num_scalar_prefetch=0,
            grid=(nb, nt),
            in_specs=[
                pl.BlockSpec((1, t_chunk * b_blk, D), lambda n, t: (n, t, 0)),
                pl.BlockSpec((N_LAYERS, b_blk, H), lambda n, t: (0, n, 0)),
                wspec(w_ih0), wspec(w_hh0), wspec(b_ih0), wspec(b_hh0),
                wspec(w_ih1), wspec(w_hh1), wspec(b_ih1), wspec(b_hh1),
                wspec(w_fc), wspec(b_fc),
            ],
            out_specs=(pl.BlockSpec((b_blk, OUT_PAD), lambda n, t: (n, 0)),
                       pl.BlockSpec((N_LAYERS, b_blk, H),
                                    lambda n, t: (0, n, 0))),
            scratch_shapes=[
                pltpu.VMEM((t_chunk * b_blk, 3 * H), jnp.bfloat16),  # gi0
                pltpu.VMEM((b_blk, H), jnp.float32),                 # h0 carry
                pltpu.VMEM((b_blk, H), jnp.float32),                 # h1 carry
            ]),
        compiler_params=pltpu.CompilerParams(
            dimension_semantics=("parallel", "arbitrary"),
            # Keep below ~48-56 MiB so the same config fits v7x's 64 MiB VMEM.
            vmem_limit_bytes=48 * 1024 * 1024),
        cost_estimate=pl.CostEstimate(
            flops=int(flops),
            transcendentals=int(transcendentals),
            bytes_accessed=int(bytes_accessed)),
    )(x_blk, h_p,
      w_ih0, w_hh0, b_ih0, b_hh0,
      w_ih1, w_hh1, b_ih1, b_hh1,
      w_fc, b_fc)

    return logits_pad[:B, :OUTPUT_DIM], h_new_pad[:, :B, :]


# ----------------------------------------------------------------------------
# Pure-JAX reference (for correctness check)
# ----------------------------------------------------------------------------
def grunet_reference(x, h, params):
    layer_in = x                                    # (B, T, D)
    h_finals = []
    for l in range(N_LAYERS):
        w_ih, w_hh, b_ih, b_hh = params["gru"][l]
        H = w_hh.shape[1]

        def cell(h_prev, x_t):
            gi = x_t @ w_ih.T + b_ih
            gh = h_prev @ w_hh.T + b_hh
            r = jax.nn.sigmoid(gi[:, :H] + gh[:, :H])
            z = jax.nn.sigmoid(gi[:, H:2 * H] + gh[:, H:2 * H])
            n = jnp.tanh(gi[:, 2 * H:] + r * gh[:, 2 * H:])
            h_new = (1.0 - z) * n + z * h_prev
            return h_new, h_new

        h_l, out_seq = lax.scan(cell, h[l], jnp.transpose(layer_in, (1, 0, 2)))
        h_finals.append(h_l)
        layer_in = jnp.transpose(out_seq, (1, 0, 2))
    w_fc, b_fc = params["fc"]
    last = layer_in[:, -1]
    s = jax.nn.softmax(last, axis=1)
    return s @ w_fc.T + b_fc, jnp.stack(h_finals, axis=0)


# ----------------------------------------------------------------------------
# Deterministic parameter init (PyTorch shapes, U(-1/sqrt(H), 1/sqrt(H)))
# ----------------------------------------------------------------------------
def init_params(key):
    k = 1.0 / jnp.sqrt(HIDDEN_DIM)
    params = {"gru": [], "fc": None}
    for l in range(N_LAYERS):
        d_in = INPUT_DIM if l == 0 else HIDDEN_DIM
        key, k1, k2, k3, k4 = jax.random.split(key, 5)
        w_ih = jax.random.uniform(k1, (3 * HIDDEN_DIM, d_in), jnp.float32, -k, k)
        w_hh = jax.random.uniform(k2, (3 * HIDDEN_DIM, HIDDEN_DIM), jnp.float32, -k, k)
        b_ih = jax.random.uniform(k3, (3 * HIDDEN_DIM,), jnp.float32, -k, k)
        b_hh = jax.random.uniform(k4, (3 * HIDDEN_DIM,), jnp.float32, -k, k)
        params["gru"].append((w_ih, w_hh, b_ih, b_hh))
    key, k1, k2 = jax.random.split(key, 3)
    w_fc = jax.random.uniform(k1, (OUTPUT_DIM, HIDDEN_DIM), jnp.float32, -k, k)
    b_fc = jax.random.uniform(k2, (OUTPUT_DIM,), jnp.float32, -k, k)
    params["fc"] = (w_fc, b_fc)
    return params


if __name__ == "__main__":
    B, T = 2, 8
    key = jax.random.PRNGKey(0)
    key, kx, kp = jax.random.split(key, 3)

    x = jax.random.normal(kx, (B, T, INPUT_DIM), jnp.float32)
    h0 = jnp.zeros((N_LAYERS, B, HIDDEN_DIM), jnp.float32)   # init_hidden()
    params = init_params(kp)
    prepped = prepare_params(params)

    out, h_new = grunet_forward(x, h0, prepped)
    jax.block_until_ready((out, h_new))

    out_ref, h_ref = grunet_reference(x, h0, params)
    assert out.shape == (B, OUTPUT_DIM) and h_new.shape == (N_LAYERS, B, HIDDEN_DIM)
    # bf16 MXU operands (f32 accumulation / gate math) -> relaxed parity tol.
    assert jnp.allclose(out, out_ref, atol=2e-2, rtol=2e-2), "fc/softmax output mismatch"
    assert jnp.allclose(h_new, h_ref, atol=2e-2, rtol=2e-2), "hidden state mismatch"

    print("KERNEL_OK")
</pallas_src>

<mosaic_0001>
module attributes {stable_mosaic.version = 11 : i64} {
  func.func @kernel(%arg0: i32, %arg1: i32, %arg2: memref<1x128x33xbf16, #tpu.memory_space<vmem>>, %arg3: memref<2x16x128xf32, #tpu.memory_space<vmem>>, %arg4: memref<33x384xbf16, #tpu.memory_space<vmem>>, %arg5: memref<128x384xbf16, #tpu.memory_space<vmem>>, %arg6: memref<1x384xf32, #tpu.memory_space<vmem>>, %arg7: memref<1x384xf32, #tpu.memory_space<vmem>>, %arg8: memref<128x384xbf16, #tpu.memory_space<vmem>>, %arg9: memref<128x384xbf16, #tpu.memory_space<vmem>>, %arg10: memref<1x384xf32, #tpu.memory_space<vmem>>, %arg11: memref<1x384xf32, #tpu.memory_space<vmem>>, %arg12: memref<128x128xf32, #tpu.memory_space<vmem>>, %arg13: memref<1x128xf32, #tpu.memory_space<vmem>>, %arg14: memref<16x128xf32, #tpu.memory_space<vmem>>, %arg15: memref<2x16x128xf32, #tpu.memory_space<vmem>>, %arg16: memref<128x384xbf16, #tpu.memory_space<vmem>>, %arg17: memref<16x128xf32, #tpu.memory_space<vmem>>, %arg18: memref<16x128xf32, #tpu.memory_space<vmem>>) attributes {dimension_semantics = [#tpu.dimension_semantics<parallel>, #tpu.dimension_semantics<arbitrary>], iteration_bounds = array<i64: 1, 1>, scalar_prefetch = 0 : i64, scratch_operands = 3 : i64, tpu.core_type = #tpu.core_type<tc>, window_params = [{transform_indices = @transform_0, window_bounds = array<i64: 1, 128, 33>}, {transform_indices = @transform_1, window_bounds = array<i64: 2, 16, 128>}, {pipeline_mode = #tpu.pipeline_mode<synchronous>, transform_indices = @transform_2, window_bounds = array<i64: 33, 384>}, {pipeline_mode = #tpu.pipeline_mode<synchronous>, transform_indices = @transform_3, window_bounds = array<i64: 128, 384>}, {pipeline_mode = #tpu.pipeline_mode<synchronous>, transform_indices = @transform_4, window_bounds = array<i64: 1, 384>}, {pipeline_mode = #tpu.pipeline_mode<synchronous>, transform_indices = @transform_5, window_bounds = array<i64: 1, 384>}, {pipeline_mode = #tpu.pipeline_mode<synchronous>, transform_indices = @transform_6, window_bounds = array<i64: 128, 384>}, {pipeline_mode = #tpu.pipeline_mode<synchronous>, transform_indices = @transform_7, window_bounds = array<i64: 128, 384>}, {pipeline_mode = #tpu.pipeline_mode<synchronous>, transform_indices = @transform_8, window_bounds = array<i64: 1, 384>}, {pipeline_mode = #tpu.pipeline_mode<synchronous>, transform_indices = @transform_9, window_bounds = array<i64: 1, 384>}, {pipeline_mode = #tpu.pipeline_mode<synchronous>, transform_indices = @transform_10, window_bounds = array<i64: 128, 128>}, {pipeline_mode = #tpu.pipeline_mode<synchronous>, transform_indices = @transform_11, window_bounds = array<i64: 1, 128>}, {transform_indices = @transform_12, window_bounds = array<i64: 16, 128>}, {transform_indices = @transform_13, window_bounds = array<i64: 2, 16, 128>}]} {
    %c0_i32 = arith.constant 0 : i32
    %0 = arith.cmpi eq, %arg1, %c0_i32 : i32
    %1 = arith.extui %0 : i1 to i32
    %c0_i32_0 = arith.constant 0 : i32
    %2 = arith.cmpi ne, %1, %c0_i32_0 : i32
    scf.if %2 {
      %c0_27 = arith.constant 0 : index
      %c0_28 = arith.constant 0 : index
      %c0_29 = arith.constant 0 : index
      %30 = vector.load %arg3[%c0_27, %c0_28, %c0_29] : memref<2x16x128xf32, #tpu.memory_space<vmem>>, vector<1x16x128xf32>
      %31 = vector.shape_cast %30 : vector<1x16x128xf32> to vector<16x128xf32>
      %c0_30 = arith.constant 0 : index
      %c0_31 = arith.constant 0 : index
      %32 = vector.load %arg17[%c0_30, %c0_31] : memref<16x128xf32, #tpu.memory_space<vmem>>, vector<16x128xf32>
      tpu.vector_store %arg17[%c0_30, %c0_31], %31 {strides = array<i32>} : memref<16x128xf32, #tpu.memory_space<vmem>>, vector<16x128xf32>,
      %c1 = arith.constant 1 : index
      %c0_32 = arith.constant 0 : index
      %c0_33 = arith.constant 0 : index
      %33 = vector.load %arg3[%c1, %c0_32, %c0_33] : memref<2x16x128xf32, #tpu.memory_space<vmem>>, vector<1x16x128xf32>
      %34 = vector.shape_cast %33 : vector<1x16x128xf32> to vector<16x128xf32>
      %c0_34 = arith.constant 0 : index
      %c0_35 = arith.constant 0 : index
      %35 = vector.load %arg18[%c0_34, %c0_35] : memref<16x128xf32, #tpu.memory_space<vmem>>, vector<16x128xf32>
      tpu.vector_store %arg18[%c0_34, %c0_35], %34 {strides = array<i32>} : memref<16x128xf32, #tpu.memory_space<vmem>>, vector<16x128xf32>,
    } else {
    }
    %c0 = arith.constant 0 : index
    %c0_1 = arith.constant 0 : index
    %3 = vector.load %arg7[%c0, %c0_1] : memref<1x384xf32, #tpu.memory_space<vmem>>, vector<1x384xf32>
    %4 = vector.shape_cast %3 : vector<1x384xf32> to vector<1x384xf32>
    %5 = vector.broadcast %4 : vector<1x384xf32> to vector<16x384xf32>
    %c0_2 = arith.constant 0 : index
    %c0_3 = arith.constant 0 : index
    %6 = vector.load %arg11[%c0_2, %c0_3] : memref<1x384xf32, #tpu.memory_space<vmem>>, vector<1x384xf32>
    %7 = vector.shape_cast %6 : vector<1x384xf32> to vector<1x384xf32>
    %8 = vector.broadcast %7 : vector<1x384xf32> to vector<16x384xf32>
    %c0_4 = arith.constant 0 : index
    %c0_5 = arith.constant 0 : index
    %9 = vector.load %arg10[%c0_4, %c0_5] : memref<1x384xf32, #tpu.memory_space<vmem>>, vector<1x384xf32>
    %10 = vector.shape_cast %9 : vector<1x384xf32> to vector<1x384xf32>
    %11 = vector.broadcast %10 : vector<1x384xf32> to vector<16x384xf32>
    %c0_6 = arith.constant 0 : index
    %c0_7 = arith.constant 0 : index
    %c0_8 = arith.constant 0 : index
    %12 = vector.load %arg2[%c0_6, %c0_7, %c0_8] : memref<1x128x33xbf16, #tpu.memory_space<vmem>>, vector<1x128x33xbf16>
    %13 = vector.shape_cast %12 : vector<1x128x33xbf16> to vector<128x33xbf16>
    %c0_9 = arith.constant 0 : index
    %c0_10 = arith.constant 0 : index
    %14 = vector.load %arg4[%c0_9, %c0_10] : memref<33x384xbf16, #tpu.memory_space<vmem>>, vector<33x384xbf16>
    %cst = arith.constant dense<0.000000e+00> : vector<128x384xf32>
    %15 = tpu.matmul %13, %14, %cst {dimension_numbers = #tpu.dot_dimension_numbers<[1], [0], [0], [1], [0, 0, 1, 1], [], []>} : vector<128x33xbf16>, vector<33x384xbf16>, vector<128x384xf32> -> vector<128x384xf32>
    %c0_11 = arith.constant 0 : index
    %c0_12 = arith.constant 0 : index
    %16 = vector.load %arg6[%c0_11, %c0_12] : memref<1x384xf32, #tpu.memory_space<vmem>>, vector<1x384xf32>
    %17 = vector.broadcast %16 : vector<1x384xf32> to vector<128x384xf32>
    %18 = arith.addf %15, %17 : vector<128x384xf32>
    %19 = arith.truncf %18 : vector<128x384xf32> to vector<128x384xbf16>
    %c0_13 = arith.constant 0 : index
    %c0_14 = arith.constant 0 : index
    %20 = vector.load %arg16[%c0_13, %c0_14] : memref<128x384xbf16, #tpu.memory_space<vmem>>, vector<128x384xbf16>
    tpu.vector_store %arg16[%c0_13, %c0_14], %19 {strides = array<i32>} : memref<128x384xbf16, #tpu.memory_space<vmem>>, vector<128x384xbf16>,
    %c0_15 = arith.constant 0 : index
    %c0_16 = arith.constant 0 : index
    %21 = vector.load %arg17[%c0_15, %c0_16] : memref<16x128xf32, #tpu.memory_space<vmem>>, vector<16x128xf32>
    %c0_17 = arith.constant 0 : index
    %c0_18 = arith.constant 0 : index
    %22 = vector.load %arg18[%c0_17, %c0_18] : memref<16x128xf32, #tpu.memory_space<vmem>>, vector<16x128xf32>
    %c0_i32_19 = arith.constant 0 : i32
    %c2_i32 = arith.constant 2 : i32
    %23 = arith.addi %c0_i32_19, %c2_i32 : i32
    %c1_i32 = arith.constant 1 : i32
    %24:2 = scf.for %arg19 = %c0_i32_19 to %23 step %c1_i32 iter_args(%arg20 = %21, %arg21 = %22) -> (vector<16x128xf32>, vector<16x128xf32>)  : i32 {
      %c4_i32 = arith.constant 4 : i32
      %30 = arith.muli %arg19, %c4_i32 : i32
      %c0_i32_27 = arith.constant 0 : i32
      %31 = arith.addi %30, %c0_i32_27 : i32
      %c16_i32 = arith.constant 16 : i32
      %32 = arith.muli %31, %c16_i32 : i32
      %33 = tpu.assume_multiple %32, 16 : i32
      %34 = arith.index_cast %33 : i32 to index
      %c0_28 = arith.constant 0 : index
      %35 = vector.load %arg16[%34, %c0_28] : memref<128x384xbf16, #tpu.memory_space<vmem>>, vector<16x384xbf16>
      %36 = arith.extf %35 : vector<16x384xbf16> to vector<16x384xf32>
      %37 = arith.truncf %arg20 : vector<16x128xf32> to vector<16x128xbf16>
      %c0_29 = arith.constant 0 : index
      %c0_30 = arith.constant 0 : index
      %38 = vector.load %arg5[%c0_29, %c0_30] : memref<128x384xbf16, #tpu.memory_space<vmem>>, vector<128x384xbf16>
      %cst_31 = arith.constant dense<0.000000e+00> : vector<16x384xf32>
      %39 = tpu.matmul %37, %38, %cst_31 {dimension_numbers = #tpu.dot_dimension_numbers<[1], [0], [0], [1], [0, 0, 1, 1], [], []>} : vector<16x128xbf16>, vector<128x384xbf16>, vector<16x384xf32> -> vector<16x384xf32>
      %40 = arith.addf %39, %5 : vector<16x384xf32>
      %41 = vector.extract_strided_slice %36 {offsets = [0, 0], sizes = [16, 128], strides = [1, 1]} : vector<16x384xf32> to vector<16x128xf32>
      %42 = vector.extract_strided_slice %40 {offsets = [0, 0], sizes = [16, 128], strides = [1, 1]} : vector<16x384xf32> to vector<16x128xf32>
      %43 = arith.addf %41, %42 : vector<16x128xf32>
      %44 = arith.negf %43 : vector<16x128xf32>
      %45 = math.exp %44 : vector<16x128xf32>
      %cst_32 = arith.constant 1.000000e+00 : f32
      %46 = vector.broadcast %cst_32 : f32 to vector<16x128xf32>
      %47 = arith.addf %46, %45 : vector<16x128xf32>
      %48 = arith.divf %46, %47 : vector<16x128xf32>
      %49 = vector.extract_strided_slice %36 {offsets = [0, 128], sizes = [16, 128], strides = [1, 1]} : vector<16x384xf32> to vector<16x128xf32>
      %50 = vector.extract_strided_slice %40 {offsets = [0, 128], sizes = [16, 128], strides = [1, 1]} : vector<16x384xf32> to vector<16x128xf32>
      %51 = arith.addf %49, %50 : vector<16x128xf32>
      %52 = arith.negf %51 : vector<16x128xf32>
      %53 = math.exp %52 : vector<16x128xf32>
      %cst_33 = arith.constant 1.000000e+00 : f32
      %54 = vector.broadcast %cst_33 : f32 to vector<16x128xf32>
      %55 = arith.addf %54, %53 : vector<16x128xf32>
      %56 = arith.divf %54, %55 : vector<16x128xf32>
      %57 = vector.extract_strided_slice %36 {offsets = [0, 256], sizes = [16, 128], strides = [1, 1]} : vector<16x384xf32> to vector<16x128xf32>
      %58 = vector.extract_strided_slice %40 {offsets = [0, 256], sizes = [16, 128], strides = [1, 1]} : vector<16x384xf32> to vector<16x128xf32>
      %59 = arith.mulf %48, %58 : vector<16x128xf32>
      %60 = arith.addf %57, %59 : vector<16x128xf32>
      %61 = math.tanh %60 : vector<16x128xf32>
      %cst_34 = arith.constant 1.000000e+00 : f32
      %62 = vector.broadcast %cst_34 : f32 to vector<16x128xf32>
      %63 = arith.subf %62, %56 : vector<16x128xf32>
      %64 = arith.mulf %63, %61 : vector<16x128xf32>
      %65 = arith.mulf %56, %arg20 : vector<16x128xf32>
      %66 = arith.addf %64, %65 : vector<16x128xf32>
      %67 = arith.truncf %66 : vector<16x128xf32> to vector<16x128xbf16>
      %c0_35 = arith.constant 0 : index
      %c0_36 = arith.constant 0 : index
      %68 = vector.load %arg8[%c0_35, %c0_36] : memref<128x384xbf16, #tpu.memory_space<vmem>>, vector<128x384xbf16>
      %cst_37 = arith.constant dense<0.000000e+00> : vector<16x384xf32>
      %69 = tpu.matmul %67, %68, %cst_37 {dimension_numbers = #tpu.dot_dimension_numbers<[1], [0], [0], [1], [0, 0, 1, 1], [], []>} : vector<16x128xbf16>, vector<128x384xbf16>, vector<16x384xf32> -> vector<16x384xf32>
      %70 = arith.addf %69, %11 : vector<16x384xf32>
      %71 = arith.truncf %arg21 : vector<16x128xf32> to vector<16x128xbf16>
      %c0_38 = arith.constant 0 : index
      %c0_39 = arith.constant 0 : index
      %72 = vector.load %arg9[%c0_38, %c0_39] : memref<128x384xbf16, #tpu.memory_space<vmem>>, vector<128x384xbf16>
      %cst_40 = arith.constant dense<0.000000e+00> : vector<16x384xf32>
      %73 = tpu.matmul %71, %72, %cst_40 {dimension_numbers = #tpu.dot_dimension_numbers<[1], [0], [0], [1], [0, 0, 1, 1], [], []>} : vector<16x128xbf16>, vector<128x384xbf16>, vector<16x384xf32> -> vector<16x384xf32>
      %74 = arith.addf %73, %8 : vector<16x384xf32>
      %75 = vector.extract_strided_slice %70 {offsets = [0, 0], sizes = [16, 128], strides = [1, 1]} : vector<16x384xf32> to vector<16x128xf32>
      %76 = vector.extract_strided_slice %74 {offsets = [0, 0], sizes = [16, 128], strides = [1, 1]} : vector<16x384xf32> to vector<16x128xf32>
      %77 = arith.addf %75, %76 : vector<16x128xf32>
      %78 = arith.negf %77 : vector<16x128xf32>
      %79 = math.exp %78 : vector<16x128xf32>
      %cst_41 = arith.constant 1.000000e+00 : f32
      %80 = vector.broadcast %cst_41 : f32 to vector<16x128xf32>
      %81 = arith.addf %80, %79 : vector<16x128xf32>
      %82 = arith.divf %80, %81 : vector<16x128xf32>
      %83 = vector.extract_strided_slice %70 {offsets = [0, 128], sizes = [16, 128], strides = [1, 1]} : vector<16x384xf32> to vector<16x128xf32>
      %84 = vector.extract_strided_slice %74 {offsets = [0, 128], sizes = [16, 128], strides = [1, 1]} : vector<16x384xf32> to vector<16x128xf32>
      %85 = arith.addf %83, %84 : vector<16x128xf32>
      %86 = arith.negf %85 : vector<16x128xf32>
      %87 = math.exp %86 : vector<16x128xf32>
      %cst_42 = arith.constant 1.000000e+00 : f32
      %88 = vector.broadcast %cst_42 : f32 to vector<16x128xf32>
      %89 = arith.addf %88, %87 : vector<16x128xf32>
      %90 = arith.divf %88, %89 : vector<16x128xf32>
      %91 = vector.extract_strided_slice %70 {offsets = [0, 256], sizes = [16, 128], strides = [1, 1]} : vector<16x384xf32> to vector<16x128xf32>
      %92 = vector.extract_strided_slice %74 {offsets = [0, 256], sizes = [16, 128], strides = [1, 1]} : vector<16x384xf32> to vector<16x128xf32>
      %93 = arith.mulf %82, %92 : vector<16x128xf32>
      %94 = arith.addf %91, %93 : vector<16x128xf32>
      %95 = math.tanh %94 : vector<16x128xf32>
      %cst_43 = arith.constant 1.000000e+00 : f32
      %96 = vector.broadcast %cst_43 : f32 to vector<16x128xf32>
      %97 = arith.subf %96, %90 : vector<16x128xf32>
      %98 = arith.mulf %97, %95 : vector<16x128xf32>
      %99 = arith.mulf %90, %arg21 : vector<16x128xf32>
      %100 = arith.addf %98, %99 : vector<16x128xf32>
      %c1_i32_44 = arith.constant 1 : i32
      %101 = arith.addi %30, %c1_i32_44 : i32
      %c16_i32_45 = arith.constant 16 : i32
      %102 = arith.muli %101, %c16_i32_45 : i32
      %103 = tpu.assume_multiple %102, 16 : i32
      %104 = arith.index_cast %103 : i32 to index
      %c0_46 = arith.constant 0 : index
      %105 = vector.load %arg16[%104, %c0_46] : memref<128x384xbf16, #tpu.memory_space<vmem>>, vector<16x384xbf16>
      %106 = arith.extf %105 : vector<16x384xbf16> to vector<16x384xf32>
      %107 = arith.truncf %66 : vector<16x128xf32> to vector<16x128xbf16>
      %c0_47 = arith.constant 0 : index
      %c0_48 = arith.constant 0 : index
      %108 = vector.load %arg5[%c0_47, %c0_48] : memref<128x384xbf16, #tpu.memory_space<vmem>>, vector<128x384xbf16>
      %cst_49 = arith.constant dense<0.000000e+00> : vector<16x384xf32>
      %109 = tpu.matmul %107, %108, %cst_49 {dimension_numbers = #tpu.dot_dimension_numbers<[1], [0], [0], [1], [0, 0, 1, 1], [], []>} : vector<16x128xbf16>, vector<128x384xbf16>, vector<16x384xf32> -> vector<16x384xf32>
      %110 = arith.addf %109, %5 : vector<16x384xf32>
      %111 = vector.extract_strided_slice %106 {offsets = [0, 0], sizes = [16, 128], strides = [1, 1]} : vector<16x384xf32> to vector<16x128xf32>
      %112 = vector.extract_strided_slice %110 {offsets = [0, 0], sizes = [16, 128], strides = [1, 1]} : vector<16x384xf32> to vector<16x128xf32>
      %113 = arith.addf %111, %112 : vector<16x128xf32>
      %114 = arith.negf %113 : vector<16x128xf32>
      %115 = math.exp %114 : vector<16x128xf32>
      %cst_50 = arith.constant 1.000000e+00 : f32
      %116 = vector.broadcast %cst_50 : f32 to vector<16x128xf32>
      %117 = arith.addf %116, %115 : vector<16x128xf32>
      %118 = arith.divf %116, %117 : vector<16x128xf32>
      %119 = vector.extract_strided_slice %106 {offsets = [0, 128], sizes = [16, 128], strides = [1, 1]} : vector<16x384xf32> to vector<16x128xf32>
      %120 = vector.extract_strided_slice %110 {offsets = [0, 128], sizes = [16, 128], strides = [1, 1]} : vector<16x384xf32> to vector<16x128xf32>
      %121 = arith.addf %119, %120 : vector<16x128xf32>
      %122 = arith.negf %121 : vector<16x128xf32>
      %123 = math.exp %122 : vector<16x128xf32>
      %cst_51 = arith.constant 1.000000e+00 : f32
      %124 = vector.broadcast %cst_51 : f32 to vector<16x128xf32>
      %125 = arith.addf %124, %123 : vector<16x128xf32>
      %126 = arith.divf %124, %125 : vector<16x128xf32>
      %127 = vector.extract_strided_slice %106 {offsets = [0, 256], sizes = [16, 128], strides = [1, 1]} : vector<16x384xf32> to vector<16x128xf32>
      %128 = vector.extract_strided_slice %110 {offsets = [0, 256], sizes = [16, 128], strides = [1, 1]} : vector<16x384xf32> to vector<16x128xf32>
      %129 = arith.mulf %118, %128 : vector<16x128xf32>
      %130 = arith.addf %127, %129 : vector<16x128xf32>
      %131 = math.tanh %130 : vector<16x128xf32>
      %cst_52 = arith.constant 1.000000e+00 : f32
      %132 = vector.broadcast %cst_52 : f32 to vector<16x128xf32>
      %133 = arith.subf %132, %126 : vector<16x128xf32>
      %134 = arith.mulf %133, %131 : vector<16x128xf32>
      %135 = arith.mulf %126, %66 : vector<16x128xf32>
      %136 = arith.addf %134, %135 : vector<16x128xf32>
      %137 = arith.truncf %136 : vector<16x128xf32> to vector<16x128xbf16>
      %c0_53 = arith.constant 0 : index
      %c0_54 = arith.constant 0 : index
      %138 = vector.load %arg8[%c0_53, %c0_54] : memref<128x384xbf16, #tpu.memory_space<vmem>>, vector<128x384xbf16>
      %cst_55 = arith.constant dense<0.000000e+00> : vector<16x384xf32>
      %139 = tpu.matmul %137, %138, %cst_55 {dimension_numbers = #tpu.dot_dimension_numbers<[1], [0], [0], [1], [0, 0, 1, 1], [], []>} : vector<16x128xbf16>, vector<128x384xbf16>, vector<16x384xf32> -> vector<16x384xf32>
      %140 = arith.addf %139, %11 : vector<16x384xf32>
      %141 = arith.truncf %100 : vector<16x128xf32> to vector<16x128xbf16>
      %c0_56 = arith.constant 0 : index
      %c0_57 = arith.constant 0 : index
      %142 = vector.load %arg9[%c0_56, %c0_57] : memref<128x384xbf16, #tpu.memory_space<vmem>>, vector<128x384xbf16>
      %cst_58 = arith.constant dense<0.000000e+00> : vector<16x384xf32>
      %143 = tpu.matmul %141, %142, %cst_58 {dimension_numbers = #tpu.dot_dimension_numbers<[1], [0], [0], [1], [0, 0, 1, 1], [], []>} : vector<16x128xbf16>, vector<128x384xbf16>, vector<16x384xf32> -> vector<16x384xf32>
      %144 = arith.addf %143, %8 : vector<16x384xf32>
      %145 = vector.extract_strided_slice %140 {offsets = [0, 0], sizes = [16, 128], strides = [1, 1]} : vector<16x384xf32> to vector<16x128xf32>
      %146 = vector.extract_strided_slice %144 {offsets = [0, 0], sizes = [16, 128], strides = [1, 1]} : vector<16x384xf32> to vector<16x128xf32>
      %147 = arith.addf %145, %146 : vector<16x128xf32>
      %148 = arith.negf %147 : vector<16x128xf32>
      %149 = math.exp %148 : vector<16x128xf32>
      %cst_59 = arith.constant 1.000000e+00 : f32
      %150 = vector.broadcast %cst_59 : f32 to vector<16x128xf32>
      %151 = arith.addf %150, %149 : vector<16x128xf32>
      %152 = arith.divf %150, %151 : vector<16x128xf32>
      %153 = vector.extract_strided_slice %140 {offsets = [0, 128], sizes = [16, 128], strides = [1, 1]} : vector<16x384xf32> to vector<16x128xf32>
      %154 = vector.extract_strided_slice %144 {offsets = [0, 128], sizes = [16, 128], strides = [1, 1]} : vector<16x384xf32> to vector<16x128xf32>
      %155 = arith.addf %153, %154 : vector<16x128xf32>
      %156 = arith.negf %155 : vector<16x128xf32>
      %157 = math.exp %156 : vector<16x128xf32>
      %cst_60 = arith.constant 1.000000e+00 : f32
      %158 = vector.broadcast %cst_60 : f32 to vector<16x128xf32>
      %159 = arith.addf %158, %157 : vector<16x128xf32>
      %160 = arith.divf %158, %159 : vector<16x128xf32>
      %161 = vector.extract_strided_slice %140 {offsets = [0, 256], sizes = [16, 128], strides = [1, 1]} : vector<16x384xf32> to vector<16x128xf32>
      %162 = vector.extract_strided_slice %144 {offsets = [0, 256], sizes = [16, 128], strides = [1, 1]} : vector<16x384xf32> to vector<16x128xf32>
      %163 = arith.mulf %152, %162 : vector<16x128xf32>
      %164 = arith.addf %161, %163 : vector<16x128xf32>
      %165 = math.tanh %164 : vector<16x128xf32>
      %cst_61 = arith.constant 1.000000e+00 : f32
      %166 = vector.broadcast %cst_61 : f32 to vector<16x128xf32>
      %167 = arith.subf %166, %160 : vector<16x128xf32>
      %168 = arith.mulf %167, %165 : vector<16x128xf32>
      %169 = arith.mulf %160, %100 : vector<16x128xf32>
      %170 = arith.addf %168, %169 : vector<16x128xf32>
      %c2_i32_62 = arith.constant 2 : i32
      %171 = arith.addi %30, %c2_i32_62 : i32
      %c16_i32_63 = arith.constant 16 : i32
      %172 = arith.muli %171, %c16_i32_63 : i32
      %173 = tpu.assume_multiple %172, 16 : i32
      %174 = arith.index_cast %173 : i32 to index
      %c0_64 = arith.constant 0 : index
      %175 = vector.load %arg16[%174, %c0_64] : memref<128x384xbf16, #tpu.memory_space<vmem>>, vector<16x384xbf16>
      %176 = arith.extf %175 : vector<16x384xbf16> to vector<16x384xf32>
      %177 = arith.truncf %136 : vector<16x128xf32> to vector<16x128xbf16>
      %c0_65 = arith.constant 0 : index
      %c0_66 = arith.constant 0 : index
      %178 = vector.load %arg5[%c0_65, %c0_66] : memref<128x384xbf16, #tpu.memory_space<vmem>>, vector<128x384xbf16>
      %cst_67 = arith.constant dense<0.000000e+00> : vector<16x384xf32>
      %179 = tpu.matmul %177, %178, %cst_67 {dimension_numbers = #tpu.dot_dimension_numbers<[1], [0], [0], [1], [0, 0, 1, 1], [], []>} : vector<16x128xbf16>, vector<128x384xbf16>, vector<16x384xf32> -> vector<16x384xf32>
      %180 = arith.addf %179, %5 : vector<16x384xf32>
      %181 = vector.extract_strided_slice %176 {offsets = [0, 0], sizes = [16, 128], strides = [1, 1]} : vector<16x384xf32> to vector<16x128xf32>
      %182 = vector.extract_strided_slice %180 {offsets = [0, 0], sizes = [16, 128], strides = [1, 1]} : vector<16x384xf32> to vector<16x128xf32>
      %183 = arith.addf %181, %182 : vector<16x128xf32>
      %184 = arith.negf %183 : vector<16x128xf32>
      %185 = math.exp %184 : vector<16x128xf32>
      %cst_68 = arith.constant 1.000000e+00 : f32
      %186 = vector.broadcast %cst_68 : f32 to vector<16x128xf32>
      %187 = arith.addf %186, %185 : vector<16x128xf32>
      %188 = arith.divf %186, %187 : vector<16x128xf32>
      %189 = vector.extract_strided_slice %176 {offsets = [0, 128], sizes = [16, 128], strides = [1, 1]} : vector<16x384xf32> to vector<16x128xf32>
      %190 = vector.extract_strided_slice %180 {offsets = [0, 128], sizes = [16, 128], strides = [1, 1]} : vector<16x384xf32> to vector<16x128xf32>
      %191 = arith.addf %189, %190 : vector<16x128xf32>
      %192 = arith.negf %191 : vector<16x128xf32>
      %193 = math.exp %192 : vector<16x128xf32>
      %cst_69 = arith.constant 1.000000e+00 : f32
      %194 = vector.broadcast %cst_69 : f32 to vector<16x128xf32>
      %195 = arith.addf %194, %193 : vector<16x128xf32>
      %196 = arith.divf %194, %195 : vector<16x128xf32>
      %197 = vector.extract_strided_slice %176 {offsets = [0, 256], sizes = [16, 128], strides = [1, 1]} : vector<16x384xf32> to vector<16x128xf32>
      %198 = vector.extract_strided_slice %180 {offsets = [0, 256], sizes = [16, 128], strides = [1, 1]} : vector<16x384xf32> to vector<16x128xf32>
      %199 = arith.mulf %188, %198 : vector<16x128xf32>
      %200 = arith.addf %197, %199 : vector<16x128xf32>
      %201 = math.tanh %200 : vector<16x128xf32>
      %cst_70 = arith.constant 1.000000e+00 : f32
      %202 = vector.broadcast %cst_70 : f32 to vector<16x128xf32>
      %203 = arith.subf %202, %196 : vector<16x128xf32>
      %204 = arith.mulf %203, %201 : vector<16x128xf32>
      %205 = arith.mulf %196, %136 : vector<16x128xf32>
      %206 = arith.addf %204, %205 : vector<16x128xf32>
      %207 = arith.truncf %206 : vector<16x128xf32> to vector<16x128xbf16>
      %c0_71 = arith.constant 0 : index
      %c0_72 = arith.constant 0 : index
      %208 = vector.load %arg8[%c0_71, %c0_72] : memref<128x384xbf16, #tpu.memory_space<vmem>>, vector<128x384xbf16>
      %cst_73 = arith.constant dense<0.000000e+00> : vector<16x384xf32>
      %209 = tpu.matmul %207, %208, %cst_73 {dimension_numbers = #tpu.dot_dimension_numbers<[1], [0], [0], [1], [0, 0, 1, 1], [], []>} : vector<16x128xbf16>, vector<128x384xbf16>, vector<16x384xf32> -> vector<16x384xf32>
      %210 = arith.addf %209, %11 : vector<16x384xf32>
      %211 = arith.truncf %170 : vector<16x128xf32> to vector<16x128xbf16>
      %c0_74 = arith.constant 0 : index
      %c0_75 = arith.constant 0 : index
      %212 = vector.load %arg9[%c0_74, %c0_75] : memref<128x384xbf16, #tpu.memory_space<vmem>>, vector<128x384xbf16>
      %cst_76 = arith.constant dense<0.000000e+00> : vector<16x384xf32>
      %213 = tpu.matmul %211, %212, %cst_76 {dimension_numbers = #tpu.dot_dimension_numbers<[1], [0], [0], [1], [0, 0, 1, 1], [], []>} : vector<16x128xbf16>, vector<128x384xbf16>, vector<16x384xf32> -> vector<16x384xf32>
      %214 = arith.addf %213, %8 : vector<16x384xf32>
      %215 = vector.extract_strided_slice %210 {offsets = [0, 0], sizes = [16, 128], strides = [1, 1]} : vector<16x384xf32> to vector<16x128xf32>
      %216 = vector.extract_strided_slice %214 {offsets = [0, 0], sizes = [16, 128], strides = [1, 1]} : vector<16x384xf32> to vector<16x128xf32>
      %217 = arith.addf %215, %216 : vector<16x128xf32>
      %218 = arith.negf %217 : vector<16x128xf32>
      %219 = math.exp %218 : vector<16x128xf32>
      %cst_77 = arith.constant 1.000000e+00 : f32
      %220 = vector.broadcast %cst_77 : f32 to vector<16x128xf32>
      %221 = arith.addf %220, %219 : vector<16x128xf32>
      %222 = arith.divf %220, %221 : vector<16x128xf32>
      %223 = vector.extract_strided_slice %210 {offsets = [0, 128], sizes = [16, 128], strides = [1, 1]} : vector<16x384xf32> to vector<16x128xf32>
      %224 = vector.extract_strided_slice %214 {offsets = [0, 128], sizes = [16, 128], strides = [1, 1]} : vector<16x384xf32> to vector<16x128xf32>
      %225 = arith.addf %223, %224 : vector<16x128xf32>
      %226 = arith.negf %225 : vector<16x128xf32>
      %227 = math.exp %226 : vector<16x128xf32>
      %cst_78 = arith.constant 1.000000e+00 : f32
      %228 = vector.broadcast %cst_78 : f32 to vector<16x128xf32>
      %229 = arith.addf %228, %227 : vector<16x128xf32>
      %230 = arith.divf %228, %229 : vector<16x128xf32>
      %231 = vector.extract_strided_slice %210 {offsets = [0, 256], sizes = [16, 128], strides = [1, 1]} : vector<16x384xf32> to vector<16x128xf32>
      %232 = vector.extract_strided_slice %214 {offsets = [0, 256], sizes = [16, 128], strides = [1, 1]} : vector<16x384xf32> to vector<16x128xf32>
      %233 = arith.mulf %222, %232 : vector<16x128xf32>
      %234 = arith.addf %231, %233 : vector<16x128xf32>
      %235 = math.tanh %234 : vector<16x128xf32>
      %cst_79 = arith.constant 1.000000e+00 : f32
      %236 = vector.broadcast %cst_79 : f32 to vector<16x128xf32>
      %237 = arith.subf %236, %230 : vector<16x128xf32>
      %238 = arith.mulf %237, %235 : vector<16x128xf32>
      %239 = arith.mulf %230, %170 : vector<16x128xf32>
      %240 = arith.addf %238, %239 : vector<16x128xf32>
      %c3_i32 = arith.constant 3 : i32
      %241 = arith.addi %30, %c3_i32 : i32
      %c16_i32_80 = arith.constant 16 : i32
      %242 = arith.muli %241, %c16_i32_80 : i32
      %243 = tpu.assume_multiple %242, 16 : i32
      %244 = arith.index_cast %243 : i32 to index
      %c0_81 = arith.constant 0 : index
      %245 = vector.load %arg16[%244, %c0_81] : memref<128x384xbf16, #tpu.memory_space<vmem>>, vector<16x384xbf16>
      %246 = arith.extf %245 : vector<16x384xbf16> to vector<16x384xf32>
      %247 = arith.truncf %206 : vector<16x128xf32> to vector<16x128xbf16>
      %c0_82 = arith.constant 0 : index
      %c0_83 = arith.constant 0 : index
      %248 = vector.load %arg5[%c0_82, %c0_83] : memref<128x384xbf16, #tpu.memory_space<vmem>>, vector<128x384xbf16>
      %cst_84 = arith.constant dense<0.000000e+00> : vector<16x384xf32>
      %249 = tpu.matmul %247, %248, %cst_84 {dimension_numbers = #tpu.dot_dimension_numbers<[1], [0], [0], [1], [0, 0, 1, 1], [], []>} : vector<16x128xbf16>, vector<128x384xbf16>, vector<16x384xf32> -> vector<16x384xf32>
      %250 = arith.addf %249, %5 : vector<16x384xf32>
      %251 = vector.extract_strided_slice %246 {offsets = [0, 0], sizes = [16, 128], strides = [1, 1]} : vector<16x384xf32> to vector<16x128xf32>
      %252 = vector.extract_strided_slice %250 {offsets = [0, 0], sizes = [16, 128], strides = [1, 1]} : vector<16x384xf32> to vector<16x128xf32>
      %253 = arith.addf %251, %252 : vector<16x128xf32>
      %254 = arith.negf %253 : vector<16x128xf32>
      %255 = math.exp %254 : vector<16x128xf32>
      %cst_85 = arith.constant 1.000000e+00 : f32
      %256 = vector.broadcast %cst_85 : f32 to vector<16x128xf32>
      %257 = arith.addf %256, %255 : vector<16x128xf32>
      %258 = arith.divf %256, %257 : vector<16x128xf32>
      %259 = vector.extract_strided_slice %246 {offsets = [0, 128], sizes = [16, 128], strides = [1, 1]} : vector<16x384xf32> to vector<16x128xf32>
      %260 = vector.extract_strided_slice %250 {offsets = [0, 128], sizes = [16, 128], strides = [1, 1]} : vector<16x384xf32> to vector<16x128xf32>
      %261 = arith.addf %259, %260 : vector<16x128xf32>
      %262 = arith.negf %261 : vector<16x128xf32>
      %263 = math.exp %262 : vector<16x128xf32>
      %cst_86 = arith.constant 1.000000e+00 : f32
      %264 = vector.broadcast %cst_86 : f32 to vector<16x128xf32>
      %265 = arith.addf %264, %263 : vector<16x128xf32>
      %266 = arith.divf %264, %265 : vector<16x128xf32>
      %267 = vector.extract_strided_slice %246 {offsets = [0, 256], sizes = [16, 128], strides = [1, 1]} : vector<16x384xf32> to vector<16x128xf32>
      %268 = vector.extract_strided_slice %250 {offsets = [0, 256], sizes = [16, 128], strides = [1, 1]} : vector<16x384xf32> to vector<16x128xf32>
      %269 = arith.mulf %258, %268 : vector<16x128xf32>
      %270 = arith.addf %267, %269 : vector<16x128xf32>
      %271 = math.tanh %270 : vector<16x128xf32>
      %cst_87 = arith.constant 1.000000e+00 : f32
      %272 = vector.broadcast %cst_87 : f32 to vector<16x128xf32>
      %273 = arith.subf %272, %266 : vector<16x128xf32>
      %274 = arith.mulf %273, %271 : vector<16x128xf32>
      %275 = arith.mulf %266, %206 : vector<16x128xf32>
      %276 = arith.addf %274, %275 : vector<16x128xf32>
      %277 = arith.truncf %276 : vector<16x128xf32> to vector<16x128xbf16>
      %c0_88 = arith.constant 0 : index
      %c0_89 = arith.constant 0 : index
      %278 = vector.load %arg8[%c0_88, %c0_89] : memref<128x384xbf16, #tpu.memory_space<vmem>>, vector<128x384xbf16>
      %cst_90 = arith.constant dense<0.000000e+00> : vector<16x384xf32>
      %279 = tpu.matmul %277, %278, %cst_90 {dimension_numbers = #tpu.dot_dimension_numbers<[1], [0], [0], [1], [0, 0, 1, 1], [], []>} : vector<16x128xbf16>, vector<128x384xbf16>, vector<16x384xf32> -> vector<16x384xf32>
      %280 = arith.addf %279, %11 : vector<16x384xf32>
      %281 = arith.truncf %240 : vector<16x128xf32> to vector<16x128xbf16>
      %c0_91 = arith.constant 0 : index
      %c0_92 = arith.constant 0 : index
      %282 = vector.load %arg9[%c0_91, %c0_92] : memref<128x384xbf16, #tpu.memory_space<vmem>>, vector<128x384xbf16>
      %cst_93 = arith.constant dense<0.000000e+00> : vector<16x384xf32>
      %283 = tpu.matmul %281, %282, %cst_93 {dimension_numbers = #tpu.dot_dimension_numbers<[1], [0], [0], [1], [0, 0, 1, 1], [], []>} : vector<16x128xbf16>, vector<128x384xbf16>, vector<16x384xf32> -> vector<16x384xf32>
      %284 = arith.addf %283, %8 : vector<16x384xf32>
      %285 = vector.extract_strided_slice %280 {offsets = [0, 0], sizes = [16, 128], strides = [1, 1]} : vector<16x384xf32> to vector<16x128xf32>
      %286 = vector.extract_strided_slice %284 {offsets = [0, 0], sizes = [16, 128], strides = [1, 1]} : vector<16x384xf32> to vector<16x128xf32>
      %287 = arith.addf %285, %286 : vector<16x128xf32>
      %288 = arith.negf %287 : vector<16x128xf32>
      %289 = math.exp %288 : vector<16x128xf32>
      %cst_94 = arith.constant 1.000000e+00 : f32
      %290 = vector.broadcast %cst_94 : f32 to vector<16x128xf32>
      %291 = arith.addf %290, %289 : vector<16x128xf32>
      %292 = arith.divf %290, %291 : vector<16x128xf32>
      %293 = vector.extract_strided_slice %280 {offsets = [0, 128], sizes = [16, 128], strides = [1, 1]} : vector<16x384xf32> to vector<16x128xf32>
      %294 = vector.extract_strided_slice %284 {offsets = [0, 128], sizes = [16, 128], strides = [1, 1]} : vector<16x384xf32> to vector<16x128xf32>
      %295 = arith.addf %293, %294 : vector<16x128xf32>
      %296 = arith.negf %295 : vector<16x128xf32>
      %297 = math.exp %296 : vector<16x128xf32>
      %cst_95 = arith.constant 1.000000e+00 : f32
      %298 = vector.broadcast %cst_95 : f32 to vector<16x128xf32>
      %299 = arith.addf %298, %297 : vector<16x128xf32>
      %300 = arith.divf %298, %299 : vector<16x128xf32>
      %301 = vector.extract_strided_slice %280 {offsets = [0, 256], sizes = [16, 128], strides = [1, 1]} : vector<16x384xf32> to vector<16x128xf32>
      %302 = vector.extract_strided_slice %284 {offsets = [0, 256], sizes = [16, 128], strides = [1, 1]} : vector<16x384xf32> to vector<16x128xf32>
      %303 = arith.mulf %292, %302 : vector<16x128xf32>
      %304 = arith.addf %301, %303 : vector<16x128xf32>
      %305 = math.tanh %304 : vector<16x128xf32>
      %cst_96 = arith.constant 1.000000e+00 : f32
      %306 = vector.broadcast %cst_96 : f32 to vector<16x128xf32>
      %307 = arith.subf %306, %300 : vector<16x128xf32>
      %308 = arith.mulf %307, %305 : vector<16x128xf32>
      %309 = arith.mulf %300, %240 : vector<16x128xf32>
      %310 = arith.addf %308, %309 : vector<16x128xf32>
      scf.yield %276, %310 : vector<16x128xf32>, vector<16x128xf32>
    }
    %c2_i32_20 = arith.constant 2 : i32
    %c0_21 = arith.constant 0 : index
    %c0_22 = arith.constant 0 : index
    %25 = vector.load %arg17[%c0_21, %c0_22] : memref<16x128xf32, #tpu.memory_space<vmem>>, vector<16x128xf32>
    tpu.vector_store %arg17[%c0_21, %c0_22], %24#0 {strides = array<i32>} : memref<16x128xf32, #tpu.memory_space<vmem>>, vector<16x128xf32>,
    %c0_23 = arith.constant 0 : index
    %c0_24 = arith.constant 0 : index
    %26 = vector.load %arg18[%c0_23, %c0_24] : memref<16x128xf32, #tpu.memory_space<vmem>>, vector<16x128xf32>
    tpu.vector_store %arg18[%c0_23, %c0_24], %24#1 {strides = array<i32>} : memref<16x128xf32, #tpu.memory_space<vmem>>, vector<16x128xf32>,
    %c0_i32_25 = arith.constant 0 : i32
    %27 = arith.cmpi eq, %arg1, %c0_i32_25 : i32
    %28 = arith.extui %27 : i1 to i32
    %c0_i32_26 = arith.constant 0 : i32
    %29 = arith.cmpi ne, %28, %c0_i32_26 : i32
    scf.if %29 {
      %c0_27 = arith.constant 0 : index
      %c0_28 = arith.constant 0 : index
      %c0_29 = arith.constant 0 : index
      %30 = vector.load %arg15[%c0_27, %c0_28, %c0_29] : memref<2x16x128xf32, #tpu.memory_space<vmem>>, vector<1x16x128xf32>
      %31 = vector.shape_cast %30 : vector<1x16x128xf32> to vector<16x128xf32>
      %32 = vector.shape_cast %24#0 : vector<16x128xf32> to vector<1x16x128xf32>
      tpu.vector_store %arg15[%c0_27, %c0_28, %c0_29], %32 {strides = array<i32>} : memref<2x16x128xf32, #tpu.memory_space<vmem>>, vector<1x16x128xf32>,
      %c1 = arith.constant 1 : index
      %c0_30 = arith.constant 0 : index
      %c0_31 = arith.constant 0 : index
      %33 = vector.load %arg15[%c1, %c0_30, %c0_31] : memref<2x16x128xf32, #tpu.memory_space<vmem>>, vector<1x16x128xf32>
      %34 = vector.shape_cast %33 : vector<1x16x128xf32> to vector<16x128xf32>
      %35 = vector.shape_cast %24#1 : vector<16x128xf32> to vector<1x16x128xf32>
      tpu.vector_store %arg15[%c1, %c0_30, %c0_31], %35 {strides = array<i32>} : memref<2x16x128xf32, #tpu.memory_space<vmem>>, vector<1x16x128xf32>,
      %cst_32 = arith.constant dense<0xFF800000> : vector<16xf32>
      %36 = vector.multi_reduction <maximumf>, %24#1, %cst_32 [1] : vector<16x128xf32> to vector<16xf32>
      %37 = vector.shape_cast %36 : vector<16xf32> to vector<16x1xf32>
      %38 = vector.broadcast %37 : vector<16x1xf32> to vector<16x128xf32>
      %39 = arith.subf %24#1, %38 : vector<16x128xf32>
      %40 = math.exp %39 : vector<16x128xf32>
      %cst_33 = arith.constant dense<0.000000e+00> : vector<16xf32>
      %41 = vector.multi_reduction <add>, %40, %cst_33 [1] : vector<16x128xf32> to vector<16xf32>
      %42 = vector.shape_cast %41 : vector<16xf32> to vector<16x1xf32>
      %43 = tpu.reciprocal %42 {approx = true} : vector<16x1xf32> -> vector<16x1xf32>
      %44 = vector.broadcast %43 : vector<16x1xf32> to vector<16x128xf32>
      %45 = arith.mulf %40, %44 : vector<16x128xf32>
      %c0_34 = arith.constant 0 : index
      %c0_35 = arith.constant 0 : index
      %46 = vector.load %arg12[%c0_34, %c0_35] : memref<128x128xf32, #tpu.memory_space<vmem>>, vector<128x128xf32>
      %cst_36 = arith.constant dense<0.000000e+00> : vector<16x128xf32>
      %47 = tpu.matmul %45, %46, %cst_36 {dimension_numbers = #tpu.dot_dimension_numbers<[1], [0], [0], [1], [0, 0, 1, 1], [], []>} : vector<16x128xf32>, vector<128x128xf32>, vector<16x128xf32> -> vector<16x128xf32>
      %c0_37 = arith.constant 0 : index
      %c0_38 = arith.constant 0 : index
      %48 = vector.load %arg13[%c0_37, %c0_38] : memref<1x128xf32, #tpu.memory_space<vmem>>, vector<1x128xf32>
      %49 = vector.broadcast %48 : vector<1x128xf32> to vector<16x128xf32>
      %50 = arith.addf %47, %49 : vector<16x128xf32>
      %c0_39 = arith.constant 0 : index
      %c0_40 = arith.constant 0 : index
      %51 = vector.load %arg14[%c0_39, %c0_40] : memref<16x128xf32, #tpu.memory_space<vmem>>, vector<16x128xf32>
      tpu.vector_store %arg14[%c0_39, %c0_40], %50 {strides = array<i32>} : memref<16x128xf32, #tpu.memory_space<vmem>>, vector<16x128xf32>,
    } else {
    }
    return
  }
  func.func @transform_0(%arg0: i32, %arg1: i32) -> (i32, i32, i32) {
    %c0_i32 = arith.constant 0 : i32
    %c0_i32_0 = arith.constant 0 : i32
    return %arg0, %arg1, %c0_i32 : i32, i32, i32
  }
  func.func @transform_1(%arg0: i32, %arg1: i32) -> (i32, i32, i32) {
    %c0_i32 = arith.constant 0 : i32
    %c0_i32_0 = arith.constant 0 : i32
    %c0_i32_1 = arith.constant 0 : i32
    return %c0_i32, %arg0, %c0_i32_0 : i32, i32, i32
  }
  func.func @transform_2(%arg0: i32, %arg1: i32) -> (i32, i32) {
    %c0_i32 = arith.constant 0 : i32
    %c0_i32_0 = arith.constant 0 : i32
    %c0_i32_1 = arith.constant 0 : i32
    return %c0_i32, %c0_i32_0 : i32, i32
  }
  func.func @transform_3(%arg0: i32, %arg1: i32) -> (i32, i32) {
    %c0_i32 = arith.constant 0 : i32
    %c0_i32_0 = arith.constant 0 : i32
    %c0_i32_1 = arith.constant 0 : i32
    return %c0_i32, %c0_i32_0 : i32, i32
  }
  func.func @transform_4(%arg0: i32, %arg1: i32) -> (i32, i32) {
    %c0_i32 = arith.constant 0 : i32
    %c0_i32_0 = arith.constant 0 : i32
    %c0_i32_1 = arith.constant 0 : i32
    return %c0_i32, %c0_i32_0 : i32, i32
  }
  func.func @transform_5(%arg0: i32, %arg1: i32) -> (i32, i32) {
    %c0_i32 = arith.constant 0 : i32
    %c0_i32_0 = arith.constant 0 : i32
    %c0_i32_1 = arith.constant 0 : i32
    return %c0_i32, %c0_i32_0 : i32, i32
  }
  func.func @transform_6(%arg0: i32, %arg1: i32) -> (i32, i32) {
    %c0_i32 = arith.constant 0 : i32
    %c0_i32_0 = arith.constant 0 : i32
    %c0_i32_1 = arith.constant 0 : i32
    return %c0_i32, %c0_i32_0 : i32, i32
  }
  func.func @transform_7(%arg0: i32, %arg1: i32) -> (i32, i32) {
    %c0_i32 = arith.constant 0 : i32
    %c0_i32_0 = arith.constant 0 : i32
    %c0_i32_1 = arith.constant 0 : i32
    return %c0_i32, %c0_i32_0 : i32, i32
  }
  func.func @transform_8(%arg0: i32, %arg1: i32) -> (i32, i32) {
    %c0_i32 = arith.constant 0 : i32
    %c0_i32_0 = arith.constant 0 : i32
    %c0_i32_1 = arith.constant 0 : i32
    return %c0_i32, %c0_i32_0 : i32, i32
  }
  func.func @transform_9(%arg0: i32, %arg1: i32) -> (i32, i32) {
    %c0_i32 = arith.constant 0 : i32
    %c0_i32_0 = arith.constant 0 : i32
    %c0_i32_1 = arith.constant 0 : i32
    return %c0_i32, %c0_i32_0 : i32, i32
  }
  func.func @transform_10(%arg0: i32, %arg1: i32) -> (i32, i32) {
    %c0_i32 = arith.constant 0 : i32
    %c0_i32_0 = arith.constant 0 : i32
    %c0_i32_1 = arith.constant 0 : i32
    return %c0_i32, %c0_i32_0 : i32, i32
  }
  func.func @transform_11(%arg0: i32, %arg1: i32) -> (i32, i32) {
    %c0_i32 = arith.constant 0 : i32
    %c0_i32_0 = arith.constant 0 : i32
    %c0_i32_1 = arith.constant 0 : i32
    return %c0_i32, %c0_i32_0 : i32, i32
  }
  func.func @transform_12(%arg0: i32, %arg1: i32) -> (i32, i32) {
    %c0_i32 = arith.constant 0 : i32
    %c0_i32_0 = arith.constant 0 : i32
    return %arg0, %c0_i32 : i32, i32
  }
  func.func @transform_13(%arg0: i32, %arg1: i32) -> (i32, i32, i32) {
    %c0_i32 = arith.constant 0 : i32
    %c0_i32_0 = arith.constant 0 : i32
    %c0_i32_1 = arith.constant 0 : i32
    return %c0_i32, %arg0, %c0_i32_0 : i32, i32, i32
  }
}

</mosaic_0001>

<llo_original>
// kernel: grunet_forward.1
$region0: #{grunet_forward.1}
  #allocation0 [shape = 'u32[]', space=smem, size = 0x4, offset = 0x4, fixed_abs, tag = 'smem constant byte address 0x4 - core index']
  #allocation1 [shape = 'u32[72,128]{1,0:T(1,128)}', space=vmem, size = 0x9000, scoped, tag = 'internal scratch']
  #allocation2 [shape = 'bf16[128,384]{1,0:T(8,128)(2,1)}', space=vmem, size = 0x18000, scoped, tag = 'scratch operand']
  #allocation3 [shape = 'f32[16,128]{1,0:T(8,128)}', space=vmem, size = 0x2000, scoped, tag = 'scratch operand']
  #allocation4 [shape = 'f32[16,128]{1,0:T(8,128)}', space=vmem, size = 0x2000, scoped, tag = 'scratch operand']
  %s0 = inlined_call_operand.vmem [shape: bf16[1,128,33], index: 0, kind: input, shape index: {}]
  %s1 = inlined_call_operand.vmem [shape: f32[2,16,128], index: 1, kind: input, shape index: {}]
  %s2 = inlined_call_operand.vmem [shape: bf16[33,384], index: 2, kind: input, shape index: {}]
  %s3 = inlined_call_operand.vmem [shape: bf16[128,384], index: 3, kind: input, shape index: {}]
  %s4 = inlined_call_operand.vmem [shape: f32[1,384], index: 4, kind: input, shape index: {}]
  %s5 = inlined_call_operand.vmem [shape: f32[1,384], index: 5, kind: input, shape index: {}]
  %s6 = inlined_call_operand.hbm [shape: bf16[128,384], index: 6, kind: input, shape index: {}]
  %s7 = inlined_call_operand.hbm [shape: bf16[128,384], index: 7, kind: input, shape index: {}]
  %s8 = inlined_call_operand.vmem [shape: f32[1,384], index: 8, kind: input, shape index: {}]
  %s9 = inlined_call_operand.hbm [shape: f32[1,384], index: 9, kind: input, shape index: {}]
  %s10 = inlined_call_operand.hbm [shape: f32[128,128], index: 10, kind: input, shape index: {}]
  %s11 = inlined_call_operand.vmem [shape: f32[1,128], index: 11, kind: input, shape index: {}]
  %s12 = inlined_call_operand.vmem [shape: f32[16,128], index: 12, kind: output, shape index: {0}]
  %s13 = inlined_call_operand.vmem [shape: f32[2,16,128], index: 13, kind: output, shape index: {1}]
  %14 = xla_tuple %s12, %s13
  %s15 = sld [smem:[#allocation0]]
  $region97: #{grunet_forward.1} parent=0
    _
  %s17 = ssub.s32 1, %s15
  %s18 = scalar_select 0, %s17, %s15
  $region1: #{grunet_forward.1} parent=0
    #allocation5 [shape = 'u8[98304]{0}', space=vmem, size = 0x18000, scoped, tag = 'input window, operand 6, single buffered']
    #allocation6 [shape = 's32[1]{0}', space=sflag, size = 0x4, scoped, tag = 'scoped memory for grunet_forward.1']
    #allocation7 [shape = 'u8[98304]{0}', space=vmem, size = 0x18000, scoped, tag = 'input window, operand 7, single buffered']
    #allocation8 [shape = 's32[1]{0}', space=sflag, size = 0x4, scoped, tag = 'scoped memory for grunet_forward.1']
    #allocation9 [shape = 'u8[1536]{0}', space=vmem, size = 0x800, scoped, tag = 'input window, operand 9, single buffered']
    #allocation10 [shape = 'u8[65536]{0}', space=vmem, size = 0x10000, scoped, tag = 'input window, operand 10, single buffered']
    #allocation11 [shape = 's32[1]{0}', space=sflag, size = 0x4, scoped, tag = 'scoped memory for grunet_forward.1']
    %19 = vsyncpa [#allocation6], 0
    %20 = vsyncpa [#allocation8], 0
    %21 = vsyncpa [#allocation11], 0
    // Predicated region
    $region2: #{grunet_forward.1} parent=1 // pred_check
      _
    $region3: #{grunet_forward.1} parent=1 // pred_check_branch
      %23 = sbr.rel (0) target = $region5
    $region4: #{grunet_forward.1} parent=1 // pred_region
      _
    $region5: #{grunet_forward.1} parent=1 // pred_fallthru
      _
    // Predicated region
    $region6: #{grunet_forward.1} parent=1 // pred_check
      _
    $region7: #{grunet_forward.1} parent=1 // pred_check_branch
      %25 = sbr.rel (0) target = $region9
    $region8: #{grunet_forward.1} parent=1 // pred_region
      _
    $region9: #{grunet_forward.1} parent=1 // pred_fallthru
      _
    // Predicated region
    $region10: #{grunet_forward.1} parent=1 // pred_check
      _
    $region11: #{grunet_forward.1} parent=1 // pred_check_branch
      %27 = sbr.rel (0) target = $region13
    $region12: #{grunet_forward.1} parent=1 // pred_region
      _
    $region13: #{grunet_forward.1} parent=1 // pred_fallthru
      _
    // Predicated region
    $region14: #{grunet_forward.1} parent=1 // pred_check
      _
    $region15: #{grunet_forward.1} parent=1 // pred_check_branch
      %29 = sbr.rel (0) target = $region17
    $region16: #{grunet_forward.1} parent=1 // pred_region
      _
    $region17: #{grunet_forward.1} parent=1 // pred_fallthru
      _
    // Predicated region
    $region18: #{grunet_forward.1} parent=1 // pred_check
      _
    $region19: #{grunet_forward.1} parent=1 // pred_check_branch
      %31 = sbr.rel (0) target = $region21
    $region20: #{grunet_forward.1} parent=1 // pred_region
      _
    $region21: #{grunet_forward.1} parent=1 // pred_fallthru
      _
    // Predicated region
    $region22: #{grunet_forward.1} parent=1 // pred_check
      _
    $region23: #{grunet_forward.1} parent=1 // pred_check_branch
      %33 = sbr.rel (0) target = $region25
    $region24: #{grunet_forward.1} parent=1 // pred_region
      _
    $region25: #{grunet_forward.1} parent=1 // pred_fallthru
      _
    // Predicated region
    $region26: #{grunet_forward.1} parent=1 // pred_check
      _
    $region27: #{grunet_forward.1} parent=1 // pred_check_branch
      %35 = sbr.rel (0) target = $region29
    $region28: #{grunet_forward.1} parent=1 // pred_region
      %37 = vsyncadd [#allocation6], 0
      %s38 = sshll.u32 %s6, 4
      %s39 = int_to_ptr.hbm [resolvable:$true] %s38
      %s40 = sshll.u32 [#allocation5], 4
      %s41 = int_to_ptr.vmem [resolvable:$true] %s40
      %46 = dma.hbm_to_vmem [thread:$0]  %s39, 3072, %s41, [#allocation6], 192, 192, 12
    $region29: #{grunet_forward.1} parent=1 // pred_fallthru
      _
    // Predicated region
    $region30: #{grunet_forward.1} parent=1 // pred_check
      _
    $region31: #{grunet_forward.1} parent=1 // pred_check_branch
      %48 = sbr.rel (0) target = $region33
    $region32: #{grunet_forward.1} parent=1 // pred_region
      %50 = vsyncadd [#allocation8], 0
      %s51 = sshll.u32 %s7, 4
      %s52 = int_to_ptr.hbm [resolvable:$true] %s51
      %s53 = sshll.u32 [#allocation7], 4
      %s54 = int_to_ptr.vmem [resolvable:$true] %s53
      %59 = dma.hbm_to_vmem [thread:$0]  %s52, 3072, %s54, [#allocation8], 192, 192, 12
    $region33: #{grunet_forward.1} parent=1 // pred_fallthru
      _
    // Predicated region
    $region34: #{grunet_forward.1} parent=1 // pred_check
      _
    $region35: #{grunet_forward.1} parent=1 // pred_check_branch
      %61 = sbr.rel (0) target = $region37
    $region36: #{grunet_forward.1} parent=1 // pred_region
      _
    $region37: #{grunet_forward.1} parent=1 // pred_fallthru
      _
    // Predicated region
    $region38: #{grunet_forward.1} parent=1 // pred_check
      _
    $region39: #{grunet_forward.1} parent=1 // pred_check_branch
      %63 = sbr.rel (0) target = $region41
    $region40: #{grunet_forward.1} parent=1 // pred_region
      %65 = vsyncadd [#allocation8], 0
      %s67 = sshll.u32 %s9, 4
      %s68 = int_to_ptr.hbm [resolvable:$true] %s67
      %s69 = sshll.u32 [#allocation9], 4
      %s70 = int_to_ptr.vmem [resolvable:$true] %s69
      %72 = dma.hbm_to_vmem [thread:$0]  %s68, 48, %s70, [#allocation8]
    $region41: #{grunet_forward.1} parent=1 // pred_fallthru
      _
    // Predicated region
    $region42: #{grunet_forward.1} parent=1 // pred_check
      _
    $region43: #{grunet_forward.1} parent=1 // pred_check_branch
      %74 = sbr.rel (0) target = $region45
    $region44: #{grunet_forward.1} parent=1 // pred_region
      %76 = vsyncadd [#allocation11], 0
      %s77 = sshll.u32 %s10, 4
      %s78 = int_to_ptr.hbm [resolvable:$true] %s77
      %s79 = sshll.u32 [#allocation10], 4
      %s80 = int_to_ptr.vmem [resolvable:$true] %s79
      %85 = dma.hbm_to_vmem [thread:$0]  %s78, 2048, %s80, [#allocation11], 128, 128, 8
    $region45: #{grunet_forward.1} parent=1 // pred_fallthru
      _
    // Predicated region
    $region46: #{grunet_forward.1} parent=1 // pred_check
      _
    $region47: #{grunet_forward.1} parent=1 // pred_check_branch
      %87 = sbr.rel (0) target = $region49
    $region48: #{grunet_forward.1} parent=1 // pred_region
      _
    $region49: #{grunet_forward.1} parent=1 // pred_fallthru
      _
    // Predicated region
    $region50: #{grunet_forward.1} parent=1 // pred_check
      _
    $region51: #{grunet_forward.1} parent=1 // pred_check_branch
      %89 = sbr.rel (0) target = $region53
    $region52: #{grunet_forward.1} parent=1 // pred_region
      %91 = dma.done [#allocation6], 3072
    $region53: #{grunet_forward.1} parent=1 // pred_fallthru
      _
    // Predicated region
    $region54: #{grunet_forward.1} parent=1 // pred_check
      _
    $region55: #{grunet_forward.1} parent=1 // pred_check_branch
      %93 = sbr.rel (0) target = $region57
    $region56: #{grunet_forward.1} parent=1 // pred_region
      %95 = dma.done [#allocation8], 3072
    $region57: #{grunet_forward.1} parent=1 // pred_fallthru
      _
    // Predicated region
    $region58: #{grunet_forward.1} parent=1 // pred_check
      _
    $region59: #{grunet_forward.1} parent=1 // pred_check_branch
      %97 = sbr.rel (0) target = $region61
    $region60: #{grunet_forward.1} parent=1 // pred_region
      %99 = dma.done [#allocation8], 48
    $region61: #{grunet_forward.1} parent=1 // pred_fallthru
      _
    // Predicated region
    $region62: #{grunet_forward.1} parent=1 // pred_check
      _
    $region63: #{grunet_forward.1} parent=1 // pred_check_branch
      %101 = sbr.rel (0) target = $region65
    $region64: #{grunet_forward.1} parent=1 // pred_region
      %103 = dma.done [#allocation11], 2048
    $region65: #{grunet_forward.1} parent=1 // pred_fallthru
      _
    %p105 = scmp.eq.s32.totalorder 0, 0
    // Predicated region
    $region66: #{grunet_forward.1} parent=1 // pred_check
      %p106 = pneg %p105
    $region67: #{grunet_forward.1} parent=1 // pred_check_branch
      %108 = sbr.rel (%p106) target = $region69
    $region68: #{grunet_forward.1} parent=1 // pred_region
      %v109 = vld [vmem:[%s1] sm:$0xff]
      %v110 = vld [vmem:[%s1 + $0x8] sm:$0xff]
      %111 = vst [vmem:[#allocation3] sm:$0xff] %v109
      %112 = vst [vmem:[#allocation3 + $0x8] sm:$0xff] %v110
      %s113 = scalar_lea.vmem %s1, 16
      %v114 = vld [vmem:[%s113] sm:$0xff]
      %v115 = vld [vmem:[%s113 + $0x8] sm:$0xff]
      %116 = vst [vmem:[#allocation4] sm:$0xff] %v114
      %117 = vst [vmem:[#allocation4 + $0x8] sm:$0xff] %v115
    $region69: #{grunet_forward.1} parent=1 // pred_fallthru
      _
    %v118 = vld [vmem:[%s5] sm:$0x7]
    %v120 = vperm.slane %v118, 0
    %v121 = vperm.slane %v118, 1
    %v122 = vperm.slane %v118, 2
    %v126 = vld [vmem:[#allocation9] sm:$0x7]
    %v128 = vperm.slane %v126, 0
    %v129 = vperm.slane %v126, 1
    %v130 = vperm.slane %v126, 2
    %v134 = vld [vmem:[%s8] sm:$0x7]
    %v136 = vperm.slane %v134, 0
    %v137 = vperm.slane %v134, 1
    %v138 = vperm.slane %v134, 2
    %v142 = vld [vmem:[%s0] sm:$0xf]
    %v143 = vld [vmem:[%s0 + $0x4] sm:$0xf]
    %v144 = vld [vmem:[%s0 + $0x8] sm:$0xf]
    %v145 = vld [vmem:[%s0 + $0xc] sm:$0xf]
    %v146 = vld [vmem:[%s0 + $0x10] sm:$0xf]
    %v147 = vld [vmem:[%s0 + $0x14] sm:$0xf]
    %v148 = vld [vmem:[%s0 + $0x18] sm:$0xf]
    %v149 = vld [vmem:[%s0 + $0x1c] sm:$0xf]
    %v150 = vld [vmem:[%s0 + $0x20] sm:$0xf]
    %v151 = vld [vmem:[%s0 + $0x24] sm:$0xf]
    %v152 = vld [vmem:[%s0 + $0x28] sm:$0xf]
    %v153 = vld [vmem:[%s0 + $0x2c] sm:$0xf]
    %v154 = vld [vmem:[%s0 + $0x30] sm:$0xf]
    %v155 = vld [vmem:[%s0 + $0x34] sm:$0xf]
    %v156 = vld [vmem:[%s0 + $0x38] sm:$0xf]
    %v157 = vld [vmem:[%s0 + $0x3c] sm:$0xf]
    %v158 = vld [vmem:[%s2] sm:$0xff]
    %v159 = vld [vmem:[%s2 + $0x8] sm:$0xf]
    %v160 = vld [vmem:[%s2 + $0xc] sm:$0xff]
    %v161 = vld [vmem:[%s2 + $0x14] sm:$0xf]
    %v162 = vld [vmem:[%s2 + $0x18] sm:$0xff]
    %v163 = vld [vmem:[%s2 + $0x20] sm:$0xf]
    %v164 = vld [vmem:[%s2 + $0x24] sm:$0xff]
    %v165 = vld [vmem:[%s2 + $0x2c] sm:$0xf]
    %v166 = vld [vmem:[%s2 + $0x30] sm:$0x11]
    %v167 = vld [vmem:[%s2 + $0x38] sm:$0x1]
    %v168 = vld [vmem:[%s4] sm:$0x7]
    %v170 = vperm.slane %v168, 0
    %v171 = vperm.slane %v168, 1
    %v172 = vperm.slane %v168, 2
    %v192 = vunpack.c.l.b16 %v142
    %v193 = vunpack.c.l.b16 %v143
    %v194 = vunpack.c.l.b16 %v144
    %v195 = vunpack.c.l.b16 %v145
    %v196 = vunpack.c.l.b16 %v146
    %v197 = vunpack.c.l.b16 %v147
    %v198 = vunpack.c.l.b16 %v148
    %v199 = vunpack.c.l.b16 %v149
    %v200 = vunpack.c.l.b16 %v150
    %v201 = vunpack.c.l.b16 %v151
    %v202 = vunpack.c.l.b16 %v152
    %v203 = vunpack.c.l.b16 %v153
    %v204 = vunpack.c.l.b16 %v154
    %v205 = vunpack.c.l.b16 %v155
    %v206 = vunpack.c.l.b16 %v156
    %v207 = vunpack.c.l.b16 %v157
    %v208 = vpack.c.b16 %v193, %v192
    %v209 = vpack.c.b16 %v195, %v194
    %v210 = vpack.c.b16 %v197, %v196
    %v211 = vpack.c.b16 %v199, %v198
    %v212 = vpack.c.b16 %v201, %v200
    %v213 = vpack.c.b16 %v203, %v202
    %v214 = vpack.c.b16 %v205, %v204
    %v215 = vpack.c.b16 %v207, %v206
    %v226 = vunpack.c.l.b16 %v158
    %v227 = vunpack.c.h.b16 %v158
    %v228 = vunpack.c.l.b16 %v159
    %v229 = vunpack.c.l.b16 %v160
    %v230 = vunpack.c.h.b16 %v160
    %v231 = vunpack.c.l.b16 %v161
    %v232 = vunpack.c.l.b16 %v162
    %v233 = vunpack.c.h.b16 %v162
    %v234 = vunpack.c.l.b16 %v163
    %v235 = vunpack.c.l.b16 %v164
    %v236 = vunpack.c.h.b16 %v164
    %v237 = vunpack.c.l.b16 %v165
    %v238 = vunpack.c.l.b16 %v166
    %v239 = vunpack.c.h.b16 %v166
    %v240 = vunpack.c.l.b16 %v167
    %v241 = vpack.c.b16 %v229, %v226
    %v242 = vpack.c.b16 %v230, %v227
    %v243 = vpack.c.b16 %v231, %v228
    %v244 = vpack.c.b16 %v235, %v232
    %v245 = vpack.c.b16 %v236, %v233
    %v246 = vpack.c.b16 %v237, %v234
    %v247 = vpack.c.b16 %v238, %v238
    %v248 = vpack.c.b16 %v239, %v239
    %v249 = vpack.c.b16 %v240, %v240
    %vm256 = vcmask 269312
    %v258 = vsel %vm256, %v208, 0
    %v261 = vsel %vm256, %v209, 0
    %v264 = vsel %vm256, %v210, 0
    %v267 = vsel %vm256, %v211, 0
    %v270 = vsel %vm256, %v212, 0
    %v273 = vsel %vm256, %v213, 0
    %v276 = vsel %vm256, %v214, 0
    %v279 = vsel %vm256, %v215, 0
    %vm281 = vcmask 1040384
    %v282 = vsel 0, 4294967295, 65535
    %v283 = vsel %vm281, %v282, 0
    %v285 = vand.u32 %v247, %v283
    %v288 = vand.u32 %v248, %v283
    %v291 = vand.u32 %v249, %v283
    %293 = vmatpush.bf16.msra.mxu0 0
    %294 = vmatpush.bf16.msra.mxu0 0
    %295 = vmatpush.bf16.msra.mxu0 0
    %296 = vmatpush.bf16.msra.mxu0 0
    %297 = vmatpush.bf16.msra.mxu0 0
    %298 = vmatpush.bf16.msra.mxu0 %v285
    %299 = vmatpush.bf16.msra.mxu0 %v244
    %300 = vmatpush.bf16.msra.mxu0 %v241
    %301 = vmatmul.bf16.gmra.mxu0 %v258
    %v302 = vpop.f32.mrf.mxu0
    %v303 = vadd.f32 %v170, %v302
    %v304 = vpop.f32.mrf.mxu0
    %v305 = vadd.f32 %v170, %v304
    %306 = vmatmul.bf16.gmra.mxu0 %v261
    %v307 = vpop.f32.mrf.mxu0
    %v308 = vadd.f32 %v170, %v307
    %v309 = vpop.f32.mrf.mxu0
    %v310 = vadd.f32 %v170, %v309
    %311 = vmatmul.bf16.gmra.mxu0 %v264
    %v312 = vpop.f32.mrf.mxu0
    %v313 = vadd.f32 %v170, %v312
    %v314 = vpop.f32.mrf.mxu0
    %v315 = vadd.f32 %v170, %v314
    %316 = vmatmul.bf16.gmra.mxu0 %v267
    %v317 = vpop.f32.mrf.mxu0
    %v318 = vadd.f32 %v170, %v317
    %v319 = vpop.f32.mrf.mxu0
    %v320 = vadd.f32 %v170, %v319
    %321 = vmatmul.bf16.gmra.mxu0 %v270
    %v322 = vpop.f32.mrf.mxu0
    %v323 = vadd.f32 %v170, %v322
    %v324 = vpop.f32.mrf.mxu0
    %v325 = vadd.f32 %v170, %v324
    %326 = vmatmul.bf16.gmra.mxu0 %v273
    %v327 = vpop.f32.mrf.mxu0
    %v328 = vadd.f32 %v170, %v327
    %v329 = vpop.f32.mrf.mxu0
    %v330 = vadd.f32 %v170, %v329
    %331 = vmatmul.bf16.gmra.mxu0 %v276
    %v332 = vpop.f32.mrf.mxu0
    %v333 = vadd.f32 %v170, %v332
    %v334 = vpop.f32.mrf.mxu0
    %v335 = vadd.f32 %v170, %v334
    %336 = vmatmul.bf16.gmra.mxu0 %v279
    %v337 = vpop.f32.mrf.mxu0
    %v338 = vadd.f32 %v170, %v337
    %v339 = vpop.f32.mrf.mxu0
    %v340 = vadd.f32 %v170, %v339
    %341 = vdwg.mxu0
    %342 = vmatpush.bf16.msra.mxu0 0
    %343 = vmatpush.bf16.msra.mxu0 0
    %344 = vmatpush.bf16.msra.mxu0 0
    %345 = vmatpush.bf16.msra.mxu0 0
    %346 = vmatpush.bf16.msra.mxu0 0
    %347 = vmatpush.bf16.msra.mxu0 %v288
    %348 = vmatpush.bf16.msra.mxu0 %v245
    %349 = vmatpush.bf16.msra.mxu0 %v242
    %350 = vmatmul.bf16.gmra.mxu0 %v258
    %v351 = vpop.f32.mrf.mxu0
    %v352 = vadd.f32 %v171, %v351
    %v353 = vpop.f32.mrf.mxu0
    %v354 = vadd.f32 %v171, %v353
    %355 = vmatmul.bf16.gmra.mxu0 %v261
    %v356 = vpop.f32.mrf.mxu0
    %v357 = vadd.f32 %v171, %v356
    %v358 = vpop.f32.mrf.mxu0
    %v359 = vadd.f32 %v171, %v358
    %360 = vmatmul.bf16.gmra.mxu0 %v264
    %v361 = vpop.f32.mrf.mxu0
    %v362 = vadd.f32 %v171, %v361
    %v363 = vpop.f32.mrf.mxu0
    %v364 = vadd.f32 %v171, %v363
    %365 = vmatmul.bf16.gmra.mxu0 %v267
    %v366 = vpop.f32.mrf.mxu0
    %v367 = vadd.f32 %v171, %v366
    %v368 = vpop.f32.mrf.mxu0
    %v369 = vadd.f32 %v171, %v368
    %370 = vmatmul.bf16.gmra.mxu0 %v270
    %v371 = vpop.f32.mrf.mxu0
    %v372 = vadd.f32 %v171, %v371
    %v373 = vpop.f32.mrf.mxu0
    %v374 = vadd.f32 %v171, %v373
    %375 = vmatmul.bf16.gmra.mxu0 %v273
    %v376 = vpop.f32.mrf.mxu0
    %v377 = vadd.f32 %v171, %v376
    %v378 = vpop.f32.mrf.mxu0
    %v379 = vadd.f32 %v171, %v378
    %380 = vmatmul.bf16.gmra.mxu0 %v276
    %v381 = vpop.f32.mrf.mxu0
    %v382 = vadd.f32 %v171, %v381
    %v383 = vpop.f32.mrf.mxu0
    %v384 = vadd.f32 %v171, %v383
    %385 = vmatmul.bf16.gmra.mxu0 %v279
    %v386 = vpop.f32.mrf.mxu0
    %v387 = vadd.f32 %v171, %v386
    %v388 = vpop.f32.mrf.mxu0
    %v389 = vadd.f32 %v171, %v388
    %390 = vdwg.mxu0
    %391 = vmatpush.bf16.msra.mxu0 0
    %392 = vmatpush.bf16.msra.mxu0 0
    %393 = vmatpush.bf16.msra.mxu0 0
    %394 = vmatpush.bf16.msra.mxu0 0
    %395 = vmatpush.bf16.msra.mxu0 0
    %396 = vmatpush.bf16.msra.mxu0 %v291
    %397 = vmatpush.bf16.msra.mxu0 %v246
    %398 = vmatpush.bf16.msra.mxu0 %v243
    %399 = vmatmul.bf16.gmra.mxu0 %v258
    %v400 = vpop.f32.mrf.mxu0
    %v401 = vadd.f32 %v172, %v400
    %v402 = vpop.f32.mrf.mxu0
    %v403 = vadd.f32 %v172, %v402
    %404 = vmatmul.bf16.gmra.mxu0 %v261
    %v405 = vpop.f32.mrf.mxu0
    %v406 = vadd.f32 %v172, %v405
    %v407 = vpop.f32.mrf.mxu0
    %v408 = vadd.f32 %v172, %v407
    %409 = vmatmul.bf16.gmra.mxu0 %v264
    %v410 = vpop.f32.mrf.mxu0
    %v411 = vadd.f32 %v172, %v410
    %v412 = vpop.f32.mrf.mxu0
    %v413 = vadd.f32 %v172, %v412
    %414 = vmatmul.bf16.gmra.mxu0 %v267
    %v415 = vpop.f32.mrf.mxu0
    %v416 = vadd.f32 %v172, %v415
    %v417 = vpop.f32.mrf.mxu0
    %v418 = vadd.f32 %v172, %v417
    %419 = vmatmul.bf16.gmra.mxu0 %v270
    %v420 = vpop.f32.mrf.mxu0
    %v421 = vadd.f32 %v172, %v420
    %v422 = vpop.f32.mrf.mxu0
    %v423 = vadd.f32 %v172, %v422
    %424 = vmatmul.bf16.gmra.mxu0 %v273
    %v425 = vpop.f32.mrf.mxu0
    %v426 = vadd.f32 %v172, %v425
    %v427 = vpop.f32.mrf.mxu0
    %v428 = vadd.f32 %v172, %v427
    %429 = vmatmul.bf16.gmra.mxu0 %v276
    %v430 = vpop.f32.mrf.mxu0
    %v431 = vadd.f32 %v172, %v430
    %v432 = vpop.f32.mrf.mxu0
    %v433 = vadd.f32 %v172, %v432
    %434 = vmatmul.bf16.gmra.mxu0 %v279
    %v435 = vpop.f32.mrf.mxu0
    %v436 = vadd.f32 %v172, %v435
    %v437 = vpop.f32.mrf.mxu0
    %v438 = vadd.f32 %v172, %v437
    %439 = vdwg.mxu0
    %v440 = vpack.c.bf16 %v352, %v303
    %v441 = vpack.c.bf16 %v401, %v401
    %v442 = vpack.c.bf16 %v354, %v305
    %v443 = vpack.c.bf16 %v403, %v403
    %v444 = vpack.c.bf16 %v357, %v308
    %v445 = vpack.c.bf16 %v406, %v406
    %v446 = vpack.c.bf16 %v359, %v310
    %v447 = vpack.c.bf16 %v408, %v408
    %v448 = vpack.c.bf16 %v362, %v313
    %v449 = vpack.c.bf16 %v411, %v411
    %v450 = vpack.c.bf16 %v364, %v315
    %v451 = vpack.c.bf16 %v413, %v413
    %v452 = vpack.c.bf16 %v367, %v318
    %v453 = vpack.c.bf16 %v416, %v416
    %v454 = vpack.c.bf16 %v369, %v320
    %v455 = vpack.c.bf16 %v418, %v418
    %v456 = vpack.c.bf16 %v372, %v323
    %v457 = vpack.c.bf16 %v421, %v421
    %v458 = vpack.c.bf16 %v374, %v325
    %v459 = vpack.c.bf16 %v423, %v423
    %v460 = vpack.c.bf16 %v377, %v328
    %v461 = vpack.c.bf16 %v426, %v426
    %v462 = vpack.c.bf16 %v379, %v330
    %v463 = vpack.c.bf16 %v428, %v428
    %v464 = vpack.c.bf16 %v382, %v333
    %v465 = vpack.c.bf16 %v431, %v431
    %v466 = vpack.c.bf16 %v384, %v335
    %v467 = vpack.c.bf16 %v433, %v433
    %v468 = vpack.c.bf16 %v387, %v338
    %v469 = vpack.c.bf16 %v436, %v436
    %v470 = vpack.c.bf16 %v389, %v340
    %v471 = vpack.c.bf16 %v438, %v438
    %472 = vst [vmem:[#allocation2] sm:$0xff] %v440
    %473 = vst [vmem:[#allocation2 + $0x8] sm:$0xf] %v441
    %474 = vst [vmem:[#allocation2 + $0xc] sm:$0xff] %v442
    %475 = vst [vmem:[#allocation2 + $0x14] sm:$0xf] %v443
    %476 = vst [vmem:[#allocation2 + $0x18] sm:$0xff] %v444
    %477 = vst [vmem:[#allocation2 + $0x20] sm:$0xf] %v445
    %478 = vst [vmem:[#allocation2 + $0x24] sm:$0xff] %v446
    %479 = vst [vmem:[#allocation2 + $0x2c] sm:$0xf] %v447
    %480 = vst [vmem:[#allocation2 + $0x30] sm:$0xff] %v448
    %481 = vst [vmem:[#allocation2 + $0x38] sm:$0xf] %v449
    %482 = vst [vmem:[#allocation2 + $0x3c] sm:$0xff] %v450
    %483 = vst [vmem:[#allocation2 + $0x44] sm:$0xf] %v451
    %484 = vst [vmem:[#allocation2 + $0x48] sm:$0xff] %v452
    %485 = vst [vmem:[#allocation2 + $0x50] sm:$0xf] %v453
    %486 = vst [vmem:[#allocation2 + $0x54] sm:$0xff] %v454
    %487 = vst [vmem:[#allocation2 + $0x5c] sm:$0xf] %v455
    %488 = vst [vmem:[#allocation2 + $0x60] sm:$0xff] %v456
    %489 = vst [vmem:[#allocation2 + $0x68] sm:$0xf] %v457
    %490 = vst [vmem:[#allocation2 + $0x6c] sm:$0xff] %v458
    %491 = vst [vmem:[#allocation2 + $0x74] sm:$0xf] %v459
    %492 = vst [vmem:[#allocation2 + $0x78] sm:$0xff] %v460
    %493 = vst [vmem:[#allocation2 + $0x80] sm:$0xf] %v461
    %494 = vst [vmem:[#allocation2 + $0x84] sm:$0xff] %v462
    %495 = vst [vmem:[#allocation2 + $0x8c] sm:$0xf] %v463
    %496 = vst [vmem:[#allocation2 + $0x90] sm:$0xff] %v464
    %497 = vst [vmem:[#allocation2 + $0x98] sm:$0xf] %v465
    %498 = vst [vmem:[#allocation2 + $0x9c] sm:$0xff] %v466
    %499 = vst [vmem:[#allocation2 + $0xa4] sm:$0xf] %v467
    %500 = vst [vmem:[#allocation2 + $0xa8] sm:$0xff] %v468
    %501 = vst [vmem:[#allocation2 + $0xb0] sm:$0xf] %v469
    %502 = vst [vmem:[#allocation2 + $0xb4] sm:$0xff] %v470
    %503 = vst [vmem:[#allocation2 + $0xbc] sm:$0xf] %v471
    %v504 = vld [vmem:[#allocation3] sm:$0xff]
    %v505 = vld [vmem:[#allocation3 + $0x8] sm:$0xff]
    %v506 = vld [vmem:[#allocation4] sm:$0xff]
    %v507 = vld [vmem:[#allocation4 + $0x8] sm:$0xff]
    loop: start=0, step=1, limit=2
    $region70: #{grunet_forward.1} parent=1 // loop_pre_header
      _
    $region71: #{grunet_forward.1} parent=1 // loop_header
      %s509 = sphi 0, %s513
      %p510 = scmp.ge.s32.totalorder %s509, 2
      %v514 = vphi %v504, %v2149
      %v515 = vphi %v505, %v2150
      %v516 = vphi %v506, %v2329
      %v517 = vphi %v507, %v2330
    $region72: #{grunet_forward.1} parent=1 // loop_header_branch
      %512 = sbr.rel (%p510) target = $region76
    $region73: #{grunet_forward.1} parent=1 // loop_body
      %s518 = smul.u32 %s509, 4
      %s519 = smul.u32 %s509, 64
      %s520 = sshra.s32 %s519, 3
      %s521 = sand.u32 %s519, 7
      %s522 = smul.u32 %s520, 3
      %s523 = smul.addr %s522, 4
      %s524 = scalar_lea.vmem [#allocation2], %s523
      %v525 = vld [vmem:[%s524] sm:$0xff]
      %v526 = vld [vmem:[%s524 + $0x8] sm:$0xf]
      %v527 = vld [vmem:[%s524 + $0xc] sm:$0xff]
      %v528 = vld [vmem:[%s524 + $0x14] sm:$0xf]
      %v529 = vunpack.c.l.bf16 %v525
      %v530 = vunpack.c.h.bf16 %v525
      %v531 = vunpack.c.l.bf16 %v526
      %v532 = vunpack.c.l.bf16 %v527
      %v533 = vunpack.c.h.bf16 %v527
      %v534 = vunpack.c.l.bf16 %v528
      %v535 = vpack.c.bf16 %v515, %v514
      %v536 = vld [vmem:[%s3] sm:$0xff]
      %v537 = vld [vmem:[%s3 + $0x8] sm:$0xf]
      %v538 = vld [vmem:[%s3 + $0xc] sm:$0xff]
      %v539 = vld [vmem:[%s3 + $0x14] sm:$0xf]
      %v540 = vld [vmem:[%s3 + $0x18] sm:$0xff]
      %v541 = vld [vmem:[%s3 + $0x20] sm:$0xf]
      %v542 = vld [vmem:[%s3 + $0x24] sm:$0xff]
      %v543 = vld [vmem:[%s3 + $0x2c] sm:$0xf]
      %v544 = vld [vmem:[%s3 + $0x30] sm:$0xff]
      %v545 = vld [vmem:[%s3 + $0x38] sm:$0xf]
      %v546 = vld [vmem:[%s3 + $0x3c] sm:$0xff]
      %v547 = vld [vmem:[%s3 + $0x44] sm:$0xf]
      %v548 = vld [vmem:[%s3 + $0x48] sm:$0xff]
      %v549 = vld [vmem:[%s3 + $0x50] sm:$0xf]
      %v550 = vld [vmem:[%s3 + $0x54] sm:$0xff]
      %v551 = vld [vmem:[%s3 + $0x5c] sm:$0xf]
      %v552 = vld [vmem:[%s3 + $0x60] sm:$0xff]
      %v553 = vld [vmem:[%s3 + $0x68] sm:$0xf]
      %v554 = vld [vmem:[%s3 + $0x6c] sm:$0xff]
      %v555 = vld [vmem:[%s3 + $0x74] sm:$0xf]
      %v556 = vld [vmem:[%s3 + $0x78] sm:$0xff]
      %v557 = vld [vmem:[%s3 + $0x80] sm:$0xf]
      %v558 = vld [vmem:[%s3 + $0x84] sm:$0xff]
      %v559 = vld [vmem:[%s3 + $0x8c] sm:$0xf]
      %v560 = vld [vmem:[%s3 + $0x90] sm:$0xff]
      %v561 = vld [vmem:[%s3 + $0x98] sm:$0xf]
      %v562 = vld [vmem:[%s3 + $0x9c] sm:$0xff]
      %v563 = vld [vmem:[%s3 + $0xa4] sm:$0xf]
      %v564 = vld [vmem:[%s3 + $0xa8] sm:$0xff]
      %v565 = vld [vmem:[%s3 + $0xb0] sm:$0xf]
      %v566 = vld [vmem:[%s3 + $0xb4] sm:$0xff]
      %v567 = vld [vmem:[%s3 + $0xbc] sm:$0xf]
      %v600 = vunpack.c.l.b16 %v536
      %v601 = vunpack.c.h.b16 %v536
      %v602 = vunpack.c.l.b16 %v537
      %v603 = vunpack.c.l.b16 %v538
      %v604 = vunpack.c.h.b16 %v538
      %v605 = vunpack.c.l.b16 %v539
      %v606 = vunpack.c.l.b16 %v540
      %v607 = vunpack.c.h.b16 %v540
      %v608 = vunpack.c.l.b16 %v541
      %v609 = vunpack.c.l.b16 %v542
      %v610 = vunpack.c.h.b16 %v542
      %v611 = vunpack.c.l.b16 %v543
      %v612 = vunpack.c.l.b16 %v544
      %v613 = vunpack.c.h.b16 %v544
      %v614 = vunpack.c.l.b16 %v545
      %v615 = vunpack.c.l.b16 %v546
      %v616 = vunpack.c.h.b16 %v546
      %v617 = vunpack.c.l.b16 %v547
      %v618 = vunpack.c.l.b16 %v548
      %v619 = vunpack.c.h.b16 %v548
      %v620 = vunpack.c.l.b16 %v549
      %v621 = vunpack.c.l.b16 %v550
      %v622 = vunpack.c.h.b16 %v550
      %v623 = vunpack.c.l.b16 %v551
      %v624 = vunpack.c.l.b16 %v552
      %v625 = vunpack.c.h.b16 %v552
      %v626 = vunpack.c.l.b16 %v553
      %v627 = vunpack.c.l.b16 %v554
      %v628 = vunpack.c.h.b16 %v554
      %v629 = vunpack.c.l.b16 %v555
      %v630 = vunpack.c.l.b16 %v556
      %v631 = vunpack.c.h.b16 %v556
      %v632 = vunpack.c.l.b16 %v557
      %v633 = vunpack.c.l.b16 %v558
      %v634 = vunpack.c.h.b16 %v558
      %v635 = vunpack.c.l.b16 %v559
      %v636 = vunpack.c.l.b16 %v560
      %v637 = vunpack.c.h.b16 %v560
      %v638 = vunpack.c.l.b16 %v561
      %v639 = vunpack.c.l.b16 %v562
      %v640 = vunpack.c.h.b16 %v562
      %v641 = vunpack.c.l.b16 %v563
      %v642 = vunpack.c.l.b16 %v564
      %v643 = vunpack.c.h.b16 %v564
      %v644 = vunpack.c.l.b16 %v565
      %v645 = vunpack.c.l.b16 %v566
      %v646 = vunpack.c.h.b16 %v566
      %v647 = vunpack.c.l.b16 %v567
      %v648 = vpack.c.b16 %v603, %v600
      %v649 = vpack.c.b16 %v604, %v601
      %v650 = vpack.c.b16 %v605, %v602
      %v651 = vpack.c.b16 %v609, %v606
      %v652 = vpack.c.b16 %v610, %v607
      %v653 = vpack.c.b16 %v611, %v608
      %v654 = vpack.c.b16 %v615, %v612
      %v655 = vpack.c.b16 %v616, %v613
      %v656 = vpack.c.b16 %v617, %v614
      %v657 = vpack.c.b16 %v621, %v618
      %v658 = vpack.c.b16 %v622, %v619
      %v659 = vpack.c.b16 %v623, %v620
      %v660 = vpack.c.b16 %v627, %v624
      %v661 = vpack.c.b16 %v628, %v625
      %v662 = vpack.c.b16 %v629, %v626
      %v663 = vpack.c.b16 %v633, %v630
      %v664 = vpack.c.b16 %v634, %v631
      %v665 = vpack.c.b16 %v635, %v632
      %v666 = vpack.c.b16 %v639, %v636
      %v667 = vpack.c.b16 %v640, %v637
      %v668 = vpack.c.b16 %v641, %v638
      %v669 = vpack.c.b16 %v645, %v642
      %v670 = vpack.c.b16 %v646, %v643
      %v671 = vpack.c.b16 %v647, %v644
      %696 = vmatpush.bf16.msra.mxu0 %v669
      %697 = vmatpush.bf16.msra.mxu0 %v666
      %698 = vmatpush.bf16.msra.mxu0 %v663
      %699 = vmatpush.bf16.msra.mxu0 %v660
      %700 = vmatpush.bf16.msra.mxu0 %v657
      %701 = vmatpush.bf16.msra.mxu0 %v654
      %702 = vmatpush.bf16.msra.mxu0 %v651
      %703 = vmatpush.bf16.msra.mxu0 %v648
      %704 = vmatmul.bf16.gmra.mxu0 %v535
      %v705 = vpop.f32.mrf.mxu0
      %v706 = vadd.f32 %v120, %v705
      %v707 = vpop.f32.mrf.mxu0
      %v708 = vadd.f32 %v120, %v707
      %709 = vdwg.mxu0
      %710 = vmatpush.bf16.msra.mxu0 %v670
      %711 = vmatpush.bf16.msra.mxu0 %v667
      %712 = vmatpush.bf16.msra.mxu0 %v664
      %713 = vmatpush.bf16.msra.mxu0 %v661
      %714 = vmatpush.bf16.msra.mxu0 %v658
      %715 = vmatpush.bf16.msra.mxu0 %v655
      %716 = vmatpush.bf16.msra.mxu0 %v652
      %717 = vmatpush.bf16.msra.mxu0 %v649
      %718 = vmatmul.bf16.gmra.mxu0 %v535
      %v719 = vpop.f32.mrf.mxu0
      %v720 = vadd.f32 %v121, %v719
      %v721 = vpop.f32.mrf.mxu0
      %v722 = vadd.f32 %v121, %v721
      %723 = vdwg.mxu0
      %724 = vmatpush.bf16.msra.mxu0 %v671
      %725 = vmatpush.bf16.msra.mxu0 %v668
      %726 = vmatpush.bf16.msra.mxu0 %v665
      %727 = vmatpush.bf16.msra.mxu0 %v662
      %728 = vmatpush.bf16.msra.mxu0 %v659
      %729 = vmatpush.bf16.msra.mxu0 %v656
      %730 = vmatpush.bf16.msra.mxu0 %v653
      %731 = vmatpush.bf16.msra.mxu0 %v650
      %732 = vmatmul.bf16.gmra.mxu0 %v535
      %v733 = vpop.f32.mrf.mxu0
      %v734 = vadd.f32 %v122, %v733
      %v735 = vpop.f32.mrf.mxu0
      %v736 = vadd.f32 %v122, %v735
      %737 = vdwg.mxu0
      %v738 = vadd.f32 %v529, %v706
      %v739 = vadd.f32 %v532, %v708
      %v740 = vxor.u32 %v738, 2147483648
      %v741 = vxor.u32 %v739, 2147483648
      %v742 = vmul.f32 %v740, 1.442695
      %v743 = vpow.pop %v742
      %v744 = vmul.f32 %v741, 1.442695
      %v745 = vpow.pop %v744
      %v746 = vadd.f32 %v743, 1.0
      %v747 = vadd.f32 %v745, 1.0
      %v748 = vrcp.pop %v746
      %v749 = vmul.f32 %v746, %v748
      %v750 = vsub.f32 1.0, %v749
      %v751 = vmul.f32 %v748, %v750
      %v752 = vadd.f32 %v748, %v751
      %vm753 = vweird.f32 %v746
      %vm754 = vweird.f32 %v748
      %vm755 = vmor %vm753, %vm754
      %v756 = vsel %vm755, %v748, %v752
      %v757 = vand.u32 2147483647, %v746
      %vm758 = vcmp.eq.f32.partialorder %v757, 8.507059e+37
      %v759 = vand.u32 %v746, 2147483648
      %v760 = vor.u32 1.1754944e-38, %v759
      %v761 = vsel %vm758, %v760, %v756
      %v762 = vmul.f32 1.0, %v761
      %v763 = vrcp.pop %v747
      %v764 = vmul.f32 %v747, %v763
      %v765 = vsub.f32 1.0, %v764
      %v766 = vmul.f32 %v763, %v765
      %v767 = vadd.f32 %v763, %v766
      %vm768 = vweird.f32 %v747
      %vm769 = vweird.f32 %v763
      %vm770 = vmor %vm768, %vm769
      %v771 = vsel %vm770, %v763, %v767
      %v772 = vand.u32 2147483647, %v747
      %vm773 = vcmp.eq.f32.partialorder %v772, 8.507059e+37
      %v774 = vand.u32 %v747, 2147483648
      %v775 = vor.u32 1.1754944e-38, %v774
      %v776 = vsel %vm773, %v775, %v771
      %v777 = vmul.f32 1.0, %v776
      %v778 = vadd.f32 %v530, %v720
      %v779 = vadd.f32 %v533, %v722
      %v780 = vxor.u32 %v778, 2147483648
      %v781 = vxor.u32 %v779, 2147483648
      %v782 = vmul.f32 %v780, 1.442695
      %v783 = vpow.pop %v782
      %v784 = vmul.f32 %v781, 1.442695
      %v785 = vpow.pop %v784
      %v786 = vadd.f32 %v783, 1.0
      %v787 = vadd.f32 %v785, 1.0
      %v788 = vrcp.pop %v786
      %v789 = vmul.f32 %v786, %v788
      %v790 = vsub.f32 1.0, %v789
      %v791 = vmul.f32 %v788, %v790
      %v792 = vadd.f32 %v788, %v791
      %vm793 = vweird.f32 %v786
      %vm794 = vweird.f32 %v788
      %vm795 = vmor %vm793, %vm794
      %v796 = vsel %vm795, %v788, %v792
      %v797 = vand.u32 2147483647, %v786
      %vm798 = vcmp.eq.f32.partialorder %v797, 8.507059e+37
      %v799 = vand.u32 %v786, 2147483648
      %v800 = vor.u32 1.1754944e-38, %v799
      %v801 = vsel %vm798, %v800, %v796
      %v802 = vmul.f32 1.0, %v801
      %v803 = vrcp.pop %v787
      %v804 = vmul.f32 %v787, %v803
      %v805 = vsub.f32 1.0, %v804
      %v806 = vmul.f32 %v803, %v805
      %v807 = vadd.f32 %v803, %v806
      %vm808 = vweird.f32 %v787
      %vm809 = vweird.f32 %v803
      %vm810 = vmor %vm808, %vm809
      %v811 = vsel %vm810, %v803, %v807
      %v812 = vand.u32 2147483647, %v787
      %vm813 = vcmp.eq.f32.partialorder %v812, 8.507059e+37
      %v814 = vand.u32 %v787, 2147483648
      %v815 = vor.u32 1.1754944e-38, %v814
      %v816 = vsel %vm813, %v815, %v811
      %v817 = vmul.f32 1.0, %v816
      %v818 = vmul.f32 %v762, %v734
      %v819 = vmul.f32 %v777, %v736
      %v820 = vadd.f32 %v531, %v818
      %v821 = vadd.f32 %v534, %v819
      %v822 = vtanh.pop %v820
      %v823 = vtanh.pop %v821
      %v824 = vsub.f32 1.0, %v802
      %v825 = vsub.f32 1.0, %v817
      %v826 = vmul.f32 %v824, %v822
      %v827 = vmul.f32 %v825, %v823
      %v828 = vmul.f32 %v802, %v514
      %v829 = vmul.f32 %v817, %v515
      %v830 = vadd.f32 %v826, %v828
      %v831 = vadd.f32 %v827, %v829
      %v832 = vpack.c.bf16 %v831, %v830
      %v833 = vld [vmem:[#allocation5] sm:$0xff]
      %v834 = vld [vmem:[#allocation5 + $0x8] sm:$0xf]
      %v835 = vld [vmem:[#allocation5 + $0xc] sm:$0xff]
      %v836 = vld [vmem:[#allocation5 + $0x14] sm:$0xf]
      %v837 = vld [vmem:[#allocation5 + $0x18] sm:$0xff]
      %v838 = vld [vmem:[#allocation5 + $0x20] sm:$0xf]
      %v839 = vld [vmem:[#allocation5 + $0x24] sm:$0xff]
      %v840 = vld [vmem:[#allocation5 + $0x2c] sm:$0xf]
      %v841 = vld [vmem:[#allocation5 + $0x30] sm:$0xff]
      %v842 = vld [vmem:[#allocation5 + $0x38] sm:$0xf]
      %v843 = vld [vmem:[#allocation5 + $0x3c] sm:$0xff]
      %v844 = vld [vmem:[#allocation5 + $0x44] sm:$0xf]
      %v845 = vld [vmem:[#allocation5 + $0x48] sm:$0xff]
      %v846 = vld [vmem:[#allocation5 + $0x50] sm:$0xf]
      %v847 = vld [vmem:[#allocation5 + $0x54] sm:$0xff]
      %v848 = vld [vmem:[#allocation5 + $0x5c] sm:$0xf]
      %v849 = vld [vmem:[#allocation5 + $0x60] sm:$0xff]
      %v850 = vld [vmem:[#allocation5 + $0x68] sm:$0xf]
      %v851 = vld [vmem:[#allocation5 + $0x6c] sm:$0xff]
      %v852 = vld [vmem:[#allocation5 + $0x74] sm:$0xf]
      %v853 = vld [vmem:[#allocation5 + $0x78] sm:$0xff]
      %v854 = vld [vmem:[#allocation5 + $0x80] sm:$0xf]
      %v855 = vld [vmem:[#allocation5 + $0x84] sm:$0xff]
      %v856 = vld [vmem:[#allocation5 + $0x8c] sm:$0xf]
      %v857 = vld [vmem:[#allocation5 + $0x90] sm:$0xff]
      %v858 = vld [vmem:[#allocation5 + $0x98] sm:$0xf]
      %v859 = vld [vmem:[#allocation5 + $0x9c] sm:$0xff]
      %v860 = vld [vmem:[#allocation5 + $0xa4] sm:$0xf]
      %v861 = vld [vmem:[#allocation5 + $0xa8] sm:$0xff]
      %v862 = vld [vmem:[#allocation5 + $0xb0] sm:$0xf]
      %v863 = vld [vmem:[#allocation5 + $0xb4] sm:$0xff]
      %v864 = vld [vmem:[#allocation5 + $0xbc] sm:$0xf]
      %v897 = vunpack.c.l.b16 %v833
      %v898 = vunpack.c.h.b16 %v833
      %v899 = vunpack.c.l.b16 %v834
      %v900 = vunpack.c.l.b16 %v835
      %v901 = vunpack.c.h.b16 %v835
      %v902 = vunpack.c.l.b16 %v836
      %v903 = vunpack.c.l.b16 %v837
      %v904 = vunpack.c.h.b16 %v837
      %v905 = vunpack.c.l.b16 %v838
      %v906 = vunpack.c.l.b16 %v839
      %v907 = vunpack.c.h.b16 %v839
      %v908 = vunpack.c.l.b16 %v840
      %v909 = vunpack.c.l.b16 %v841
      %v910 = vunpack.c.h.b16 %v841
      %v911 = vunpack.c.l.b16 %v842
      %v912 = vunpack.c.l.b16 %v843
      %v913 = vunpack.c.h.b16 %v843
      %v914 = vunpack.c.l.b16 %v844
      %v915 = vunpack.c.l.b16 %v845
      %v916 = vunpack.c.h.b16 %v845
      %v917 = vunpack.c.l.b16 %v846
      %v918 = vunpack.c.l.b16 %v847
      %v919 = vunpack.c.h.b16 %v847
      %v920 = vunpack.c.l.b16 %v848
      %v921 = vunpack.c.l.b16 %v849
      %v922 = vunpack.c.h.b16 %v849
      %v923 = vunpack.c.l.b16 %v850
      %v924 = vunpack.c.l.b16 %v851
      %v925 = vunpack.c.h.b16 %v851
      %v926 = vunpack.c.l.b16 %v852
      %v927 = vunpack.c.l.b16 %v853
      %v928 = vunpack.c.h.b16 %v853
      %v929 = vunpack.c.l.b16 %v854
      %v930 = vunpack.c.l.b16 %v855
      %v931 = vunpack.c.h.b16 %v855
      %v932 = vunpack.c.l.b16 %v856
      %v933 = vunpack.c.l.b16 %v857
      %v934 = vunpack.c.h.b16 %v857
      %v935 = vunpack.c.l.b16 %v858
      %v936 = vunpack.c.l.b16 %v859
      %v937 = vunpack.c.h.b16 %v859
      %v938 = vunpack.c.l.b16 %v860
      %v939 = vunpack.c.l.b16 %v861
      %v940 = vunpack.c.h.b16 %v861
      %v941 = vunpack.c.l.b16 %v862
      %v942 = vunpack.c.l.b16 %v863
      %v943 = vunpack.c.h.b16 %v863
      %v944 = vunpack.c.l.b16 %v864
      %v945 = vpack.c.b16 %v900, %v897
      %v946 = vpack.c.b16 %v901, %v898
      %v947 = vpack.c.b16 %v902, %v899
      %v948 = vpack.c.b16 %v906, %v903
      %v949 = vpack.c.b16 %v907, %v904
      %v950 = vpack.c.b16 %v908, %v905
      %v951 = vpack.c.b16 %v912, %v909
      %v952 = vpack.c.b16 %v913, %v910
      %v953 = vpack.c.b16 %v914, %v911
      %v954 = vpack.c.b16 %v918, %v915
      %v955 = vpack.c.b16 %v919, %v916
      %v956 = vpack.c.b16 %v920, %v917
      %v957 = vpack.c.b16 %v924, %v921
      %v958 = vpack.c.b16 %v925, %v922
      %v959 = vpack.c.b16 %v926, %v923
      %v960 = vpack.c.b16 %v930, %v927
      %v961 = vpack.c.b16 %v931, %v928
      %v962 = vpack.c.b16 %v932, %v929
      %v963 = vpack.c.b16 %v936, %v933
      %v964 = vpack.c.b16 %v937, %v934
      %v965 = vpack.c.b16 %v938, %v935
      %v966 = vpack.c.b16 %v942, %v939
      %v967 = vpack.c.b16 %v943, %v940
      %v968 = vpack.c.b16 %v944, %v941
      %993 = vmatpush.bf16.msra.mxu0 %v966
      %994 = vmatpush.bf16.msra.mxu0 %v963
      %995 = vmatpush.bf16.msra.mxu0 %v960
      %996 = vmatpush.bf16.msra.mxu0 %v957
      %997 = vmatpush.bf16.msra.mxu0 %v954
      %998 = vmatpush.bf16.msra.mxu0 %v951
      %999 = vmatpush.bf16.msra.mxu0 %v948
      %1000 = vmatpush.bf16.msra.mxu0 %v945
      %1001 = vmatmul.bf16.gmra.mxu0 %v832
      %v1002 = vpop.f32.mrf.mxu0
      %v1003 = vadd.f32 %v136, %v1002
      %v1004 = vpop.f32.mrf.mxu0
      %v1005 = vadd.f32 %v136, %v1004
      %1006 = vdwg.mxu0
      %1007 = vmatpush.bf16.msra.mxu0 %v967
      %1008 = vmatpush.bf16.msra.mxu0 %v964
      %1009 = vmatpush.bf16.msra.mxu0 %v961
      %1010 = vmatpush.bf16.msra.mxu0 %v958
      %1011 = vmatpush.bf16.msra.mxu0 %v955
      %1012 = vmatpush.bf16.msra.mxu0 %v952
      %1013 = vmatpush.bf16.msra.mxu0 %v949
      %1014 = vmatpush.bf16.msra.mxu0 %v946
      %1015 = vmatmul.bf16.gmra.mxu0 %v832
      %v1016 = vpop.f32.mrf.mxu0
      %v1017 = vadd.f32 %v137, %v1016
      %v1018 = vpop.f32.mrf.mxu0
      %v1019 = vadd.f32 %v137, %v1018
      %1020 = vdwg.mxu0
      %1021 = vmatpush.bf16.msra.mxu0 %v968
      %1022 = vmatpush.bf16.msra.mxu0 %v965
      %1023 = vmatpush.bf16.msra.mxu0 %v962
      %1024 = vmatpush.bf16.msra.mxu0 %v959
      %1025 = vmatpush.bf16.msra.mxu0 %v956
      %1026 = vmatpush.bf16.msra.mxu0 %v953
      %1027 = vmatpush.bf16.msra.mxu0 %v950
      %1028 = vmatpush.bf16.msra.mxu0 %v947
      %1029 = vmatmul.bf16.gmra.mxu0 %v832
      %v1030 = vpop.f32.mrf.mxu0
      %v1031 = vadd.f32 %v138, %v1030
      %v1032 = vpop.f32.mrf.mxu0
      %v1033 = vadd.f32 %v138, %v1032
      %1034 = vdwg.mxu0
      %v1035 = vpack.c.bf16 %v517, %v516
      %v1036 = vld [vmem:[#allocation7] sm:$0xff]
      %v1037 = vld [vmem:[#allocation7 + $0x8] sm:$0xf]
      %v1038 = vld [vmem:[#allocation7 + $0xc] sm:$0xff]
      %v1039 = vld [vmem:[#allocation7 + $0x14] sm:$0xf]
      %v1040 = vld [vmem:[#allocation7 + $0x18] sm:$0xff]
      %v1041 = vld [vmem:[#allocation7 + $0x20] sm:$0xf]
      %v1042 = vld [vmem:[#allocation7 + $0x24] sm:$0xff]
      %v1043 = vld [vmem:[#allocation7 + $0x2c] sm:$0xf]
      %v1044 = vld [vmem:[#allocation7 + $0x30] sm:$0xff]
      %v1045 = vld [vmem:[#allocation7 + $0x38] sm:$0xf]
      %v1046 = vld [vmem:[#allocation7 + $0x3c] sm:$0xff]
      %v1047 = vld [vmem:[#allocation7 + $0x44] sm:$0xf]
      %v1048 = vld [vmem:[#allocation7 + $0x48] sm:$0xff]
      %v1049 = vld [vmem:[#allocation7 + $0x50] sm:$0xf]
      %v1050 = vld [vmem:[#allocation7 + $0x54] sm:$0xff]
      %v1051 = vld [vmem:[#allocation7 + $0x5c] sm:$0xf]
      %v1052 = vld [vmem:[#allocation7 + $0x60] sm:$0xff]
      %v1053 = vld [vmem:[#allocation7 + $0x68] sm:$0xf]
      %v1054 = vld [vmem:[#allocation7 + $0x6c] sm:$0xff]
      %v1055 = vld [vmem:[#allocation7 + $0x74] sm:$0xf]
      %v1056 = vld [vmem:[#allocation7 + $0x78] sm:$0xff]
      %v1057 = vld [vmem:[#allocation7 + $0x80] sm:$0xf]
      %v1058 = vld [vmem:[#allocation7 + $0x84] sm:$0xff]
      %v1059 = vld [vmem:[#allocation7 + $0x8c] sm:$0xf]
      %v1060 = vld [vmem:[#allocation7 + $0x90] sm:$0xff]
      %v1061 = vld [vmem:[#allocation7 + $0x98] sm:$0xf]
      %v1062 = vld [vmem:[#allocation7 + $0x9c] sm:$0xff]
      %v1063 = vld [vmem:[#allocation7 + $0xa4] sm:$0xf]
      %v1064 = vld [vmem:[#allocation7 + $0xa8] sm:$0xff]
      %v1065 = vld [vmem:[#allocation7 + $0xb0] sm:$0xf]
      %v1066 = vld [vmem:[#allocation7 + $0xb4] sm:$0xff]
      %v1067 = vld [vmem:[#allocation7 + $0xbc] sm:$0xf]
      %v1100 = vunpack.c.l.b16 %v1036
      %v1101 = vunpack.c.h.b16 %v1036
      %v1102 = vunpack.c.l.b16 %v1037
      %v1103 = vunpack.c.l.b16 %v1038
      %v1104 = vunpack.c.h.b16 %v1038
      %v1105 = vunpack.c.l.b16 %v1039
      %v1106 = vunpack.c.l.b16 %v1040
      %v1107 = vunpack.c.h.b16 %v1040
      %v1108 = vunpack.c.l.b16 %v1041
      %v1109 = vunpack.c.l.b16 %v1042
      %v1110 = vunpack.c.h.b16 %v1042
      %v1111 = vunpack.c.l.b16 %v1043
      %v1112 = vunpack.c.l.b16 %v1044
      %v1113 = vunpack.c.h.b16 %v1044
      %v1114 = vunpack.c.l.b16 %v1045
      %v1115 = vunpack.c.l.b16 %v1046
      %v1116 = vunpack.c.h.b16 %v1046
      %v1117 = vunpack.c.l.b16 %v1047
      %v1118 = vunpack.c.l.b16 %v1048
      %v1119 = vunpack.c.h.b16 %v1048
      %v1120 = vunpack.c.l.b16 %v1049
      %v1121 = vunpack.c.l.b16 %v1050
      %v1122 = vunpack.c.h.b16 %v1050
      %v1123 = vunpack.c.l.b16 %v1051
      %v1124 = vunpack.c.l.b16 %v1052
      %v1125 = vunpack.c.h.b16 %v1052
      %v1126 = vunpack.c.l.b16 %v1053
      %v1127 = vunpack.c.l.b16 %v1054
      %v1128 = vunpack.c.h.b16 %v1054
      %v1129 = vunpack.c.l.b16 %v1055
      %v1130 = vunpack.c.l.b16 %v1056
      %v1131 = vunpack.c.h.b16 %v1056
      %v1132 = vunpack.c.l.b16 %v1057
      %v1133 = vunpack.c.l.b16 %v1058
      %v1134 = vunpack.c.h.b16 %v1058
      %v1135 = vunpack.c.l.b16 %v1059
      %v1136 = vunpack.c.l.b16 %v1060
      %v1137 = vunpack.c.h.b16 %v1060
      %v1138 = vunpack.c.l.b16 %v1061
      %v1139 = vunpack.c.l.b16 %v1062
      %v1140 = vunpack.c.h.b16 %v1062
      %v1141 = vunpack.c.l.b16 %v1063
      %v1142 = vunpack.c.l.b16 %v1064
      %v1143 = vunpack.c.h.b16 %v1064
      %v1144 = vunpack.c.l.b16 %v1065
      %v1145 = vunpack.c.l.b16 %v1066
      %v1146 = vunpack.c.h.b16 %v1066
      %v1147 = vunpack.c.l.b16 %v1067
      %v1148 = vpack.c.b16 %v1103, %v1100
      %v1149 = vpack.c.b16 %v1104, %v1101
      %v1150 = vpack.c.b16 %v1105, %v1102
      %v1151 = vpack.c.b16 %v1109, %v1106
      %v1152 = vpack.c.b16 %v1110, %v1107
      %v1153 = vpack.c.b16 %v1111, %v1108
      %v1154 = vpack.c.b16 %v1115, %v1112
      %v1155 = vpack.c.b16 %v1116, %v1113
      %v1156 = vpack.c.b16 %v1117, %v1114
      %v1157 = vpack.c.b16 %v1121, %v1118
      %v1158 = vpack.c.b16 %v1122, %v1119
      %v1159 = vpack.c.b16 %v1123, %v1120
      %v1160 = vpack.c.b16 %v1127, %v1124
      %v1161 = vpack.c.b16 %v1128, %v1125
      %v1162 = vpack.c.b16 %v1129, %v1126
      %v1163 = vpack.c.b16 %v1133, %v1130
      %v1164 = vpack.c.b16 %v1134, %v1131
      %v1165 = vpack.c.b16 %v1135, %v1132
      %v1166 = vpack.c.b16 %v1139, %v1136
      %v1167 = vpack.c.b16 %v1140, %v1137
      %v1168 = vpack.c.b16 %v1141, %v1138
      %v1169 = vpack.c.b16 %v1145, %v1142
      %v1170 = vpack.c.b16 %v1146, %v1143
      %v1171 = vpack.c.b16 %v1147, %v1144
      %1196 = vmatpush.bf16.msra.mxu0 %v1169
      %1197 = vmatpush.bf16.msra.mxu0 %v1166
      %1198 = vmatpush.bf16.msra.mxu0 %v1163
      %1199 = vmatpush.bf16.msra.mxu0 %v1160
      %1200 = vmatpush.bf16.msra.mxu0 %v1157
      %1201 = vmatpush.bf16.msra.mxu0 %v1154
      %1202 = vmatpush.bf16.msra.mxu0 %v1151
      %1203 = vmatpush.bf16.msra.mxu0 %v1148
      %1204 = vmatmul.bf16.gmra.mxu0 %v1035
      %v1205 = vpop.f32.mrf.mxu0
      %v1206 = vadd.f32 %v128, %v1205
      %v1207 = vpop.f32.mrf.mxu0
      %v1208 = vadd.f32 %v128, %v1207
      %1209 = vdwg.mxu0
      %1210 = vmatpush.bf16.msra.mxu0 %v1170
      %1211 = vmatpush.bf16.msra.mxu0 %v1167
      %1212 = vmatpush.bf16.msra.mxu0 %v1164
      %1213 = vmatpush.bf16.msra.mxu0 %v1161
      %1214 = vmatpush.bf16.msra.mxu0 %v1158
      %1215 = vmatpush.bf16.msra.mxu0 %v1155
      %1216 = vmatpush.bf16.msra.mxu0 %v1152
      %1217 = vmatpush.bf16.msra.mxu0 %v1149
      %1218 = vmatmul.bf16.gmra.mxu0 %v1035
      %v1219 = vpop.f32.mrf.mxu0
      %v1220 = vadd.f32 %v129, %v1219
      %v1221 = vpop.f32.mrf.mxu0
      %v1222 = vadd.f32 %v129, %v1221
      %1223 = vdwg.mxu0
      %1224 = vmatpush.bf16.msra.mxu0 %v1171
      %1225 = vmatpush.bf16.msra.mxu0 %v1168
      %1226 = vmatpush.bf16.msra.mxu0 %v1165
      %1227 = vmatpush.bf16.msra.mxu0 %v1162
      %1228 = vmatpush.bf16.msra.mxu0 %v1159
      %1229 = vmatpush.bf16.msra.mxu0 %v1156
      %1230 = vmatpush.bf16.msra.mxu0 %v1153
      %1231 = vmatpush.bf16.msra.mxu0 %v1150
      %1232 = vmatmul.bf16.gmra.mxu0 %v1035
      %v1233 = vpop.f32.mrf.mxu0
      %v1234 = vadd.f32 %v130, %v1233
      %v1235 = vpop.f32.mrf.mxu0
      %v1236 = vadd.f32 %v130, %v1235
      %1237 = vdwg.mxu0
      %v1238 = vadd.f32 %v1003, %v1206
      %v1239 = vadd.f32 %v1005, %v1208
      %v1240 = vxor.u32 %v1238, 2147483648
      %v1241 = vxor.u32 %v1239, 2147483648
      %v1242 = vmul.f32 %v1240, 1.442695
      %v1243 = vpow.pop %v1242
      %v1244 = vmul.f32 %v1241, 1.442695
      %v1245 = vpow.pop %v1244
      %v1246 = vadd.f32 %v1243, 1.0
      %v1247 = vadd.f32 %v1245, 1.0
      %v1248 = vrcp.pop %v1246
      %v1249 = vmul.f32 %v1246, %v1248
      %v1250 = vsub.f32 1.0, %v1249
      %v1251 = vmul.f32 %v1248, %v1250
      %v1252 = vadd.f32 %v1248, %v1251
      %vm1253 = vweird.f32 %v1246
      %vm1254 = vweird.f32 %v1248
      %vm1255 = vmor %vm1253, %vm1254
      %v1256 = vsel %vm1255, %v1248, %v1252
      %v1257 = vand.u32 2147483647, %v1246
      %vm1258 = vcmp.eq.f32.partialorder %v1257, 8.507059e+37
      %v1259 = vand.u32 %v1246, 2147483648
      %v1260 = vor.u32 1.1754944e-38, %v1259
      %v1261 = vsel %vm1258, %v1260, %v1256
      %v1262 = vmul.f32 1.0, %v1261
      %v1263 = vrcp.pop %v1247
      %v1264 = vmul.f32 %v1247, %v1263
      %v1265 = vsub.f32 1.0, %v1264
      %v1266 = vmul.f32 %v1263, %v1265
      %v1267 = vadd.f32 %v1263, %v1266
      %vm1268 = vweird.f32 %v1247
      %vm1269 = vweird.f32 %v1263
      %vm1270 = vmor %vm1268, %vm1269
      %v1271 = vsel %vm1270, %v1263, %v1267
      %v1272 = vand.u32 2147483647, %v1247
      %vm1273 = vcmp.eq.f32.partialorder %v1272, 8.507059e+37
      %v1274 = vand.u32 %v1247, 2147483648
      %v1275 = vor.u32 1.1754944e-38, %v1274
      %v1276 = vsel %vm1273, %v1275, %v1271
      %v1277 = vmul.f32 1.0, %v1276
      %v1278 = vadd.f32 %v1017, %v1220
      %v1279 = vadd.f32 %v1019, %v1222
      %v1280 = vxor.u32 %v1278, 2147483648
      %v1281 = vxor.u32 %v1279, 2147483648
      %v1282 = vmul.f32 %v1280, 1.442695
      %v1283 = vpow.pop %v1282
      %v1284 = vmul.f32 %v1281, 1.442695
      %v1285 = vpow.pop %v1284
      %v1286 = vadd.f32 %v1283, 1.0
      %v1287 = vadd.f32 %v1285, 1.0
      %v1288 = vrcp.pop %v1286
      %v1289 = vmul.f32 %v1286, %v1288
      %v1290 = vsub.f32 1.0, %v1289
      %v1291 = vmul.f32 %v1288, %v1290
      %v1292 = vadd.f32 %v1288, %v1291
      %vm1293 = vweird.f32 %v1286
      %vm1294 = vweird.f32 %v1288
      %vm1295 = vmor %vm1293, %vm1294
      %v1296 = vsel %vm1295, %v1288, %v1292
      %v1297 = vand.u32 2147483647, %v1286
      %vm1298 = vcmp.eq.f32.partialorder %v1297, 8.507059e+37
      %v1299 = vand.u32 %v1286, 2147483648
      %v1300 = vor.u32 1.1754944e-38, %v1299
      %v1301 = vsel %vm1298, %v1300, %v1296
      %v1302 = vmul.f32 1.0, %v1301
      %v1303 = vrcp.pop %v1287
      %v1304 = vmul.f32 %v1287, %v1303
      %v1305 = vsub.f32 1.0, %v1304
      %v1306 = vmul.f32 %v1303, %v1305
      %v1307 = vadd.f32 %v1303, %v1306
      %vm1308 = vweird.f32 %v1287
      %vm1309 = vweird.f32 %v1303
      %vm1310 = vmor %vm1308, %vm1309
      %v1311 = vsel %vm1310, %v1303, %v1307
      %v1312 = vand.u32 2147483647, %v1287
      %vm1313 = vcmp.eq.f32.partialorder %v1312, 8.507059e+37
      %v1314 = vand.u32 %v1287, 2147483648
      %v1315 = vor.u32 1.1754944e-38, %v1314
      %v1316 = vsel %vm1313, %v1315, %v1311
      %v1317 = vmul.f32 1.0, %v1316
      %v1318 = vmul.f32 %v1262, %v1234
      %v1319 = vmul.f32 %v1277, %v1236
      %v1320 = vadd.f32 %v1031, %v1318
      %v1321 = vadd.f32 %v1033, %v1319
      %v1322 = vtanh.pop %v1320
      %v1323 = vtanh.pop %v1321
      %v1324 = vsub.f32 1.0, %v1302
      %v1325 = vsub.f32 1.0, %v1317
      %v1326 = vmul.f32 %v1324, %v1322
      %v1327 = vmul.f32 %v1325, %v1323
      %v1328 = vmul.f32 %v1302, %v516
      %v1329 = vmul.f32 %v1317, %v517
      %v1330 = vadd.f32 %v1326, %v1328
      %v1331 = vadd.f32 %v1327, %v1329
      %s1332 = sadd.s32 %s518, 1
      %s1333 = smul.u32 %s1332, 16
      %s1334 = sshra.s32 %s1333, 3
      %s1335 = sand.u32 %s1333, 7
      %s1336 = smul.u32 %s1334, 3
      %s1337 = smul.addr %s1336, 4
      %s1338 = scalar_lea.vmem [#allocation2], %s1337
      %v1339 = vld [vmem:[%s1338] sm:$0xff]
      %v1340 = vld [vmem:[%s1338 + $0x8] sm:$0xf]
      %v1341 = vld [vmem:[%s1338 + $0xc] sm:$0xff]
      %v1342 = vld [vmem:[%s1338 + $0x14] sm:$0xf]
      %v1343 = vunpack.c.l.bf16 %v1339
      %v1344 = vunpack.c.h.bf16 %v1339
      %v1345 = vunpack.c.l.bf16 %v1340
      %v1346 = vunpack.c.l.bf16 %v1341
      %v1347 = vunpack.c.h.bf16 %v1341
      %v1348 = vunpack.c.l.bf16 %v1342
      %1349 = vmatpush.bf16.msra.mxu0 %v669
      %1350 = vmatpush.bf16.msra.mxu0 %v666
      %1351 = vmatpush.bf16.msra.mxu0 %v663
      %1352 = vmatpush.bf16.msra.mxu0 %v660
      %1353 = vmatpush.bf16.msra.mxu0 %v657
      %1354 = vmatpush.bf16.msra.mxu0 %v654
      %1355 = vmatpush.bf16.msra.mxu0 %v651
      %1356 = vmatpush.bf16.msra.mxu0 %v648
      %1357 = vmatmul.bf16.gmra.mxu0 %v832
      %v1358 = vpop.f32.mrf.mxu0
      %v1359 = vadd.f32 %v120, %v1358
      %v1360 = vpop.f32.mrf.mxu0
      %v1361 = vadd.f32 %v120, %v1360
      %1362 = vdwg.mxu0
      %1363 = vmatpush.bf16.msra.mxu0 %v670
      %1364 = vmatpush.bf16.msra.mxu0 %v667
      %1365 = vmatpush.bf16.msra.mxu0 %v664
      %1366 = vmatpush.bf16.msra.mxu0 %v661
      %1367 = vmatpush.bf16.msra.mxu0 %v658
      %1368 = vmatpush.bf16.msra.mxu0 %v655
      %1369 = vmatpush.bf16.msra.mxu0 %v652
      %1370 = vmatpush.bf16.msra.mxu0 %v649
      %1371 = vmatmul.bf16.gmra.mxu0 %v832
      %v1372 = vpop.f32.mrf.mxu0
      %v1373 = vadd.f32 %v121, %v1372
      %v1374 = vpop.f32.mrf.mxu0
      %v1375 = vadd.f32 %v121, %v1374
      %1376 = vdwg.mxu0
      %1377 = vmatpush.bf16.msra.mxu0 %v671
      %1378 = vmatpush.bf16.msra.mxu0 %v668
      %1379 = vmatpush.bf16.msra.mxu0 %v665
      %1380 = vmatpush.bf16.msra.mxu0 %v662
      %1381 = vmatpush.bf16.msra.mxu0 %v659
      %1382 = vmatpush.bf16.msra.mxu0 %v656
      %1383 = vmatpush.bf16.msra.mxu0 %v653
      %1384 = vmatpush.bf16.msra.mxu0 %v650
      %1385 = vmatmul.bf16.gmra.mxu0 %v832
      %v1386 = vpop.f32.mrf.mxu0
      %v1387 = vadd.f32 %v122, %v1386
      %v1388 = vpop.f32.mrf.mxu0
      %v1389 = vadd.f32 %v122, %v1388
      %1390 = vdwg.mxu0
      %v1391 = vadd.f32 %v1343, %v1359
      %v1392 = vadd.f32 %v1346, %v1361
      %v1393 = vxor.u32 %v1391, 2147483648
      %v1394 = vxor.u32 %v1392, 2147483648
      %v1395 = vmul.f32 %v1393, 1.442695
      %v1396 = vpow.pop %v1395
      %v1397 = vmul.f32 %v1394, 1.442695
      %v1398 = vpow.pop %v1397
      %v1399 = vadd.f32 %v1396, 1.0
      %v1400 = vadd.f32 %v1398, 1.0
      %v1401 = vrcp.pop %v1399
      %v1402 = vmul.f32 %v1399, %v1401
      %v1403 = vsub.f32 1.0, %v1402
      %v1404 = vmul.f32 %v1401, %v1403
      %v1405 = vadd.f32 %v1401, %v1404
      %vm1406 = vweird.f32 %v1399
      %vm1407 = vweird.f32 %v1401
      %vm1408 = vmor %vm1406, %vm1407
      %v1409 = vsel %vm1408, %v1401, %v1405
      %v1410 = vand.u32 2147483647, %v1399
      %vm1411 = vcmp.eq.f32.partialorder %v1410, 8.507059e+37
      %v1412 = vand.u32 %v1399, 2147483648
      %v1413 = vor.u32 1.1754944e-38, %v1412
      %v1414 = vsel %vm1411, %v1413, %v1409
      %v1415 = vmul.f32 1.0, %v1414
      %v1416 = vrcp.pop %v1400
      %v1417 = vmul.f32 %v1400, %v1416
      %v1418 = vsub.f32 1.0, %v1417
      %v1419 = vmul.f32 %v1416, %v1418
      %v1420 = vadd.f32 %v1416, %v1419
      %vm1421 = vweird.f32 %v1400
      %vm1422 = vweird.f32 %v1416
      %vm1423 = vmor %vm1421, %vm1422
      %v1424 = vsel %vm1423, %v1416, %v1420
      %v1425 = vand.u32 2147483647, %v1400
      %vm1426 = vcmp.eq.f32.partialorder %v1425, 8.507059e+37
      %v1427 = vand.u32 %v1400, 2147483648
      %v1428 = vor.u32 1.1754944e-38, %v1427
      %v1429 = vsel %vm1426, %v1428, %v1424
      %v1430 = vmul.f32 1.0, %v1429
      %v1431 = vadd.f32 %v1344, %v1373
      %v1432 = vadd.f32 %v1347, %v1375
      %v1433 = vxor.u32 %v1431, 2147483648
      %v1434 = vxor.u32 %v1432, 2147483648
      %v1435 = vmul.f32 %v1433, 1.442695
      %v1436 = vpow.pop %v1435
      %v1437 = vmul.f32 %v1434, 1.442695
      %v1438 = vpow.pop %v1437
      %v1439 = vadd.f32 %v1436, 1.0
      %v1440 = vadd.f32 %v1438, 1.0
      %v1441 = vrcp.pop %v1439
      %v1442 = vmul.f32 %v1439, %v1441
      %v1443 = vsub.f32 1.0, %v1442
      %v1444 = vmul.f32 %v1441, %v1443
      %v1445 = vadd.f32 %v1441, %v1444
      %vm1446 = vweird.f32 %v1439
      %vm1447 = vweird.f32 %v1441
      %vm1448 = vmor %vm1446, %vm1447
      %v1449 = vsel %vm1448, %v1441, %v1445
      %v1450 = vand.u32 2147483647, %v1439
      %vm1451 = vcmp.eq.f32.partialorder %v1450, 8.507059e+37
      %v1452 = vand.u32 %v1439, 2147483648
      %v1453 = vor.u32 1.1754944e-38, %v1452
      %v1454 = vsel %vm1451, %v1453, %v1449
      %v1455 = vmul.f32 1.0, %v1454
      %v1456 = vrcp.pop %v1440
      %v1457 = vmul.f32 %v1440, %v1456
      %v1458 = vsub.f32 1.0, %v1457
      %v1459 = vmul.f32 %v1456, %v1458
      %v1460 = vadd.f32 %v1456, %v1459
      %vm1461 = vweird.f32 %v1440
      %vm1462 = vweird.f32 %v1456
      %vm1463 = vmor %vm1461, %vm1462
      %v1464 = vsel %vm1463, %v1456, %v1460
      %v1465 = vand.u32 2147483647, %v1440
      %vm1466 = vcmp.eq.f32.partialorder %v1465, 8.507059e+37
      %v1467 = vand.u32 %v1440, 2147483648
      %v1468 = vor.u32 1.1754944e-38, %v1467
      %v1469 = vsel %vm1466, %v1468, %v1464
      %v1470 = vmul.f32 1.0, %v1469
      %v1471 = vmul.f32 %v1415, %v1387
      %v1472 = vmul.f32 %v1430, %v1389
      %v1473 = vadd.f32 %v1345, %v1471
      %v1474 = vadd.f32 %v1348, %v1472
      %v1475 = vtanh.pop %v1473
      %v1476 = vtanh.pop %v1474
      %v1477 = vsub.f32 1.0, %v1455
      %v1478 = vsub.f32 1.0, %v1470
      %v1479 = vmul.f32 %v1477, %v1475
      %v1480 = vmul.f32 %v1478, %v1476
      %v1481 = vmul.f32 %v1455, %v830
      %v1482 = vmul.f32 %v1470, %v831
      %v1483 = vadd.f32 %v1479, %v1481
      %v1484 = vadd.f32 %v1480, %v1482
      %v1485 = vpack.c.bf16 %v1484, %v1483
      %1486 = vmatpush.bf16.msra.mxu0 %v966
      %1487 = vmatpush.bf16.msra.mxu0 %v963
      %1488 = vmatpush.bf16.msra.mxu0 %v960
      %1489 = vmatpush.bf16.msra.mxu0 %v957
      %1490 = vmatpush.bf16.msra.mxu0 %v954
      %1491 = vmatpush.bf16.msra.mxu0 %v951
      %1492 = vmatpush.bf16.msra.mxu0 %v948
      %1493 = vmatpush.bf16.msra.mxu0 %v945
      %1494 = vmatmul.bf16.gmra.mxu0 %v1485
      %v1495 = vpop.f32.mrf.mxu0
      %v1496 = vadd.f32 %v136, %v1495
      %v1497 = vpop.f32.mrf.mxu0
      %v1498 = vadd.f32 %v136, %v1497
      %1499 = vdwg.mxu0
      %1500 = vmatpush.bf16.msra.mxu0 %v967
      %1501 = vmatpush.bf16.msra.mxu0 %v964
      %1502 = vmatpush.bf16.msra.mxu0 %v961
      %1503 = vmatpush.bf16.msra.mxu0 %v958
      %1504 = vmatpush.bf16.msra.mxu0 %v955
      %1505 = vmatpush.bf16.msra.mxu0 %v952
      %1506 = vmatpush.bf16.msra.mxu0 %v949
      %1507 = vmatpush.bf16.msra.mxu0 %v946
      %1508 = vmatmul.bf16.gmra.mxu0 %v1485
      %v1509 = vpop.f32.mrf.mxu0
      %v1510 = vadd.f32 %v137, %v1509
      %v1511 = vpop.f32.mrf.mxu0
      %v1512 = vadd.f32 %v137, %v1511
      %1513 = vdwg.mxu0
      %1514 = vmatpush.bf16.msra.mxu0 %v968
      %1515 = vmatpush.bf16.msra.mxu0 %v965
      %1516 = vmatpush.bf16.msra.mxu0 %v962
      %1517 = vmatpush.bf16.msra.mxu0 %v959
      %1518 = vmatpush.bf16.msra.mxu0 %v956
      %1519 = vmatpush.bf16.msra.mxu0 %v953
      %1520 = vmatpush.bf16.msra.mxu0 %v950
      %1521 = vmatpush.bf16.msra.mxu0 %v947
      %1522 = vmatmul.bf16.gmra.mxu0 %v1485
      %v1523 = vpop.f32.mrf.mxu0
      %v1524 = vadd.f32 %v138, %v1523
      %v1525 = vpop.f32.mrf.mxu0
      %v1526 = vadd.f32 %v138, %v1525
      %1527 = vdwg.mxu0
      %v1528 = vpack.c.bf16 %v1331, %v1330
      %1529 = vmatpush.bf16.msra.mxu0 %v1169
      %1530 = vmatpush.bf16.msra.mxu0 %v1166
      %1531 = vmatpush.bf16.msra.mxu0 %v1163
      %1532 = vmatpush.bf16.msra.mxu0 %v1160
      %1533 = vmatpush.bf16.msra.mxu0 %v1157
      %1534 = vmatpush.bf16.msra.mxu0 %v1154
      %1535 = vmatpush.bf16.msra.mxu0 %v1151
      %1536 = vmatpush.bf16.msra.mxu0 %v1148
      %1537 = vmatmul.bf16.gmra.mxu0 %v1528
      %v1538 = vpop.f32.mrf.mxu0
      %v1539 = vadd.f32 %v128, %v1538
      %v1540 = vpop.f32.mrf.mxu0
      %v1541 = vadd.f32 %v128, %v1540
      %1542 = vdwg.mxu0
      %1543 = vmatpush.bf16.msra.mxu0 %v1170
      %1544 = vmatpush.bf16.msra.mxu0 %v1167
      %1545 = vmatpush.bf16.msra.mxu0 %v1164
      %1546 = vmatpush.bf16.msra.mxu0 %v1161
      %1547 = vmatpush.bf16.msra.mxu0 %v1158
      %1548 = vmatpush.bf16.msra.mxu0 %v1155
      %1549 = vmatpush.bf16.msra.mxu0 %v1152
      %1550 = vmatpush.bf16.msra.mxu0 %v1149
      %1551 = vmatmul.bf16.gmra.mxu0 %v1528
      %v1552 = vpop.f32.mrf.mxu0
      %v1553 = vadd.f32 %v129, %v1552
      %v1554 = vpop.f32.mrf.mxu0
      %v1555 = vadd.f32 %v129, %v1554
      %1556 = vdwg.mxu0
      %1557 = vmatpush.bf16.msra.mxu0 %v1171
      %1558 = vmatpush.bf16.msra.mxu0 %v1168
      %1559 = vmatpush.bf16.msra.mxu0 %v1165
      %1560 = vmatpush.bf16.msra.mxu0 %v1162
      %1561 = vmatpush.bf16.msra.mxu0 %v1159
      %1562 = vmatpush.bf16.msra.mxu0 %v1156
      %1563 = vmatpush.bf16.msra.mxu0 %v1153
      %1564 = vmatpush.bf16.msra.mxu0 %v1150
      %1565 = vmatmul.bf16.gmra.mxu0 %v1528
      %v1566 = vpop.f32.mrf.mxu0
      %v1567 = vadd.f32 %v130, %v1566
      %v1568 = vpop.f32.mrf.mxu0
      %v1569 = vadd.f32 %v130, %v1568
      %1570 = vdwg.mxu0
      %v1571 = vadd.f32 %v1496, %v1539
      %v1572 = vadd.f32 %v1498, %v1541
      %v1573 = vxor.u32 %v1571, 2147483648
      %v1574 = vxor.u32 %v1572, 2147483648
      %v1575 = vmul.f32 %v1573, 1.442695
      %v1576 = vpow.pop %v1575
      %v1577 = vmul.f32 %v1574, 1.442695
      %v1578 = vpow.pop %v1577
      %v1579 = vadd.f32 %v1576, 1.0
      %v1580 = vadd.f32 %v1578, 1.0
      %v1581 = vrcp.pop %v1579
      %v1582 = vmul.f32 %v1579, %v1581
      %v1583 = vsub.f32 1.0, %v1582
      %v1584 = vmul.f32 %v1581, %v1583
      %v1585 = vadd.f32 %v1581, %v1584
      %vm1586 = vweird.f32 %v1579
      %vm1587 = vweird.f32 %v1581
      %vm1588 = vmor %vm1586, %vm1587
      %v1589 = vsel %vm1588, %v1581, %v1585
      %v1590 = vand.u32 2147483647, %v1579
      %vm1591 = vcmp.eq.f32.partialorder %v1590, 8.507059e+37
      %v1592 = vand.u32 %v1579, 2147483648
      %v1593 = vor.u32 1.1754944e-38, %v1592
      %v1594 = vsel %vm1591, %v1593, %v1589
      %v1595 = vmul.f32 1.0, %v1594
      %v1596 = vrcp.pop %v1580
      %v1597 = vmul.f32 %v1580, %v1596
      %v1598 = vsub.f32 1.0, %v1597
      %v1599 = vmul.f32 %v1596, %v1598
      %v1600 = vadd.f32 %v1596, %v1599
      %vm1601 = vweird.f32 %v1580
      %vm1602 = vweird.f32 %v1596
      %vm1603 = vmor %vm1601, %vm1602
      %v1604 = vsel %vm1603, %v1596, %v1600
      %v1605 = vand.u32 2147483647, %v1580
      %vm1606 = vcmp.eq.f32.partialorder %v1605, 8.507059e+37
      %v1607 = vand.u32 %v1580, 2147483648
      %v1608 = vor.u32 1.1754944e-38, %v1607
      %v1609 = vsel %vm1606, %v1608, %v1604
      %v1610 = vmul.f32 1.0, %v1609
      %v1611 = vadd.f32 %v1510, %v1553
      %v1612 = vadd.f32 %v1512, %v1555
      %v1613 = vxor.u32 %v1611, 2147483648
      %v1614 = vxor.u32 %v1612, 2147483648
      %v1615 = vmul.f32 %v1613, 1.442695
      %v1616 = vpow.pop %v1615
      %v1617 = vmul.f32 %v1614, 1.442695
      %v1618 = vpow.pop %v1617
      %v1619 = vadd.f32 %v1616, 1.0
      %v1620 = vadd.f32 %v1618, 1.0
      %v1621 = vrcp.pop %v1619
      %v1622 = vmul.f32 %v1619, %v1621
      %v1623 = vsub.f32 1.0, %v1622
      %v1624 = vmul.f32 %v1621, %v1623
      %v1625 = vadd.f32 %v1621, %v1624
      %vm1626 = vweird.f32 %v1619
      %vm1627 = vweird.f32 %v1621
      %vm1628 = vmor %vm1626, %vm1627
      %v1629 = vsel %vm1628, %v1621, %v1625
      %v1630 = vand.u32 2147483647, %v1619
      %vm1631 = vcmp.eq.f32.partialorder %v1630, 8.507059e+37
      %v1632 = vand.u32 %v1619, 2147483648
      %v1633 = vor.u32 1.1754944e-38, %v1632
      %v1634 = vsel %vm1631, %v1633, %v1629
      %v1635 = vmul.f32 1.0, %v1634
      %v1636 = vrcp.pop %v1620
      %v1637 = vmul.f32 %v1620, %v1636
      %v1638 = vsub.f32 1.0, %v1637
      %v1639 = vmul.f32 %v1636, %v1638
      %v1640 = vadd.f32 %v1636, %v1639
      %vm1641 = vweird.f32 %v1620
      %vm1642 = vweird.f32 %v1636
      %vm1643 = vmor %vm1641, %vm1642
      %v1644 = vsel %vm1643, %v1636, %v1640
      %v1645 = vand.u32 2147483647, %v1620
      %vm1646 = vcmp.eq.f32.partialorder %v1645, 8.507059e+37
      %v1647 = vand.u32 %v1620, 2147483648
      %v1648 = vor.u32 1.1754944e-38, %v1647
      %v1649 = vsel %vm1646, %v1648, %v1644
      %v1650 = vmul.f32 1.0, %v1649
      %v1651 = vmul.f32 %v1595, %v1567
      %v1652 = vmul.f32 %v1610, %v1569
      %v1653 = vadd.f32 %v1524, %v1651
      %v1654 = vadd.f32 %v1526, %v1652
      %v1655 = vtanh.pop %v1653
      %v1656 = vtanh.pop %v1654
      %v1657 = vsub.f32 1.0, %v1635
      %v1658 = vsub.f32 1.0, %v1650
      %v1659 = vmul.f32 %v1657, %v1655
      %v1660 = vmul.f32 %v1658, %v1656
      %v1661 = vmul.f32 %v1635, %v1330
      %v1662 = vmul.f32 %v1650, %v1331
      %v1663 = vadd.f32 %v1659, %v1661
      %v1664 = vadd.f32 %v1660, %v1662
      %s1665 = sadd.s32 %s518, 2
      %s1666 = smul.u32 %s1665, 16
      %s1667 = sshra.s32 %s1666, 3
      %s1668 = sand.u32 %s1666, 7
      %s1669 = smul.u32 %s1667, 3
      %s1670 = smul.addr %s1669, 4
      %s1671 = scalar_lea.vmem [#allocation2], %s1670
      %v1672 = vld [vmem:[%s1671] sm:$0xff]
      %v1673 = vld [vmem:[%s1671 + $0x8] sm:$0xf]
      %v1674 = vld [vmem:[%s1671 + $0xc] sm:$0xff]
      %v1675 = vld [vmem:[%s1671 + $0x14] sm:$0xf]
      %v1676 = vunpack.c.l.bf16 %v1672
      %v1677 = vunpack.c.h.bf16 %v1672
      %v1678 = vunpack.c.l.bf16 %v1673
      %v1679 = vunpack.c.l.bf16 %v1674
      %v1680 = vunpack.c.h.bf16 %v1674
      %v1681 = vunpack.c.l.bf16 %v1675
      %1682 = vmatpush.bf16.msra.mxu0 %v669
      %1683 = vmatpush.bf16.msra.mxu0 %v666
      %1684 = vmatpush.bf16.msra.mxu0 %v663
      %1685 = vmatpush.bf16.msra.mxu0 %v660
      %1686 = vmatpush.bf16.msra.mxu0 %v657
      %1687 = vmatpush.bf16.msra.mxu0 %v654
      %1688 = vmatpush.bf16.msra.mxu0 %v651
      %1689 = vmatpush.bf16.msra.mxu0 %v648
      %1690 = vmatmul.bf16.gmra.mxu0 %v1485
      %v1691 = vpop.f32.mrf.mxu0
      %v1692 = vadd.f32 %v120, %v1691
      %v1693 = vpop.f32.mrf.mxu0
      %v1694 = vadd.f32 %v120, %v1693
      %1695 = vdwg.mxu0
      %1696 = vmatpush.bf16.msra.mxu0 %v670
      %1697 = vmatpush.bf16.msra.mxu0 %v667
      %1698 = vmatpush.bf16.msra.mxu0 %v664
      %1699 = vmatpush.bf16.msra.mxu0 %v661
      %1700 = vmatpush.bf16.msra.mxu0 %v658
      %1701 = vmatpush.bf16.msra.mxu0 %v655
      %1702 = vmatpush.bf16.msra.mxu0 %v652
      %1703 = vmatpush.bf16.msra.mxu0 %v649
      %1704 = vmatmul.bf16.gmra.mxu0 %v1485
      %v1705 = vpop.f32.mrf.mxu0
      %v1706 = vadd.f32 %v121, %v1705
      %v1707 = vpop.f32.mrf.mxu0
      %v1708 = vadd.f32 %v121, %v1707
      %1709 = vdwg.mxu0
      %1710 = vmatpush.bf16.msra.mxu0 %v671
      %1711 = vmatpush.bf16.msra.mxu0 %v668
      %1712 = vmatpush.bf16.msra.mxu0 %v665
      %1713 = vmatpush.bf16.msra.mxu0 %v662
      %1714 = vmatpush.bf16.msra.mxu0 %v659
      %1715 = vmatpush.bf16.msra.mxu0 %v656
      %1716 = vmatpush.bf16.msra.mxu0 %v653
      %1717 = vmatpush.bf16.msra.mxu0 %v650
      %1718 = vmatmul.bf16.gmra.mxu0 %v1485
      %v1719 = vpop.f32.mrf.mxu0
      %v1720 = vadd.f32 %v122, %v1719
      %v1721 = vpop.f32.mrf.mxu0
      %v1722 = vadd.f32 %v122, %v1721
      %1723 = vdwg.mxu0
      %v1724 = vadd.f32 %v1676, %v1692
      %v1725 = vadd.f32 %v1679, %v1694
      %v1726 = vxor.u32 %v1724, 2147483648
      %v1727 = vxor.u32 %v1725, 2147483648
      %v1728 = vmul.f32 %v1726, 1.442695
      %v1729 = vpow.pop %v1728
      %v1730 = vmul.f32 %v1727, 1.442695
      %v1731 = vpow.pop %v1730
      %v1732 = vadd.f32 %v1729, 1.0
      %v1733 = vadd.f32 %v1731, 1.0
      %v1734 = vrcp.pop %v1732
      %v1735 = vmul.f32 %v1732, %v1734
      %v1736 = vsub.f32 1.0, %v1735
      %v1737 = vmul.f32 %v1734, %v1736
      %v1738 = vadd.f32 %v1734, %v1737
      %vm1739 = vweird.f32 %v1732
      %vm1740 = vweird.f32 %v1734
      %vm1741 = vmor %vm1739, %vm1740
      %v1742 = vsel %vm1741, %v1734, %v1738
      %v1743 = vand.u32 2147483647, %v1732
      %vm1744 = vcmp.eq.f32.partialorder %v1743, 8.507059e+37
      %v1745 = vand.u32 %v1732, 2147483648
      %v1746 = vor.u32 1.1754944e-38, %v1745
      %v1747 = vsel %vm1744, %v1746, %v1742
      %v1748 = vmul.f32 1.0, %v1747
      %v1749 = vrcp.pop %v1733
      %v1750 = vmul.f32 %v1733, %v1749
      %v1751 = vsub.f32 1.0, %v1750
      %v1752 = vmul.f32 %v1749, %v1751
      %v1753 = vadd.f32 %v1749, %v1752
      %vm1754 = vweird.f32 %v1733
      %vm1755 = vweird.f32 %v1749
      %vm1756 = vmor %vm1754, %vm1755
      %v1757 = vsel %vm1756, %v1749, %v1753
      %v1758 = vand.u32 2147483647, %v1733
      %vm1759 = vcmp.eq.f32.partialorder %v1758, 8.507059e+37
      %v1760 = vand.u32 %v1733, 2147483648
      %v1761 = vor.u32 1.1754944e-38, %v1760
      %v1762 = vsel %vm1759, %v1761, %v1757
      %v1763 = vmul.f32 1.0, %v1762
      %v1764 = vadd.f32 %v1677, %v1706
      %v1765 = vadd.f32 %v1680, %v1708
      %v1766 = vxor.u32 %v1764, 2147483648
      %v1767 = vxor.u32 %v1765, 2147483648
      %v1768 = vmul.f32 %v1766, 1.442695
      %v1769 = vpow.pop %v1768
      %v1770 = vmul.f32 %v1767, 1.442695
      %v1771 = vpow.pop %v1770
      %v1772 = vadd.f32 %v1769, 1.0
      %v1773 = vadd.f32 %v1771, 1.0
      %v1774 = vrcp.pop %v1772
      %v1775 = vmul.f32 %v1772, %v1774
      %v1776 = vsub.f32 1.0, %v1775
      %v1777 = vmul.f32 %v1774, %v1776
      %v1778 = vadd.f32 %v1774, %v1777
      %vm1779 = vweird.f32 %v1772
      %vm1780 = vweird.f32 %v1774
      %vm1781 = vmor %vm1779, %vm1780
      %v1782 = vsel %vm1781, %v1774, %v1778
      %v1783 = vand.u32 2147483647, %v1772
      %vm1784 = vcmp.eq.f32.partialorder %v1783, 8.507059e+37
      %v1785 = vand.u32 %v1772, 2147483648
      %v1786 = vor.u32 1.1754944e-38, %v1785
      %v1787 = vsel %vm1784, %v1786, %v1782
      %v1788 = vmul.f32 1.0, %v1787
      %v1789 = vrcp.pop %v1773
      %v1790 = vmul.f32 %v1773, %v1789
      %v1791 = vsub.f32 1.0, %v1790
      %v1792 = vmul.f32 %v1789, %v1791
      %v1793 = vadd.f32 %v1789, %v1792
      %vm1794 = vweird.f32 %v1773
      %vm1795 = vweird.f32 %v1789
      %vm1796 = vmor %vm1794, %vm1795
      %v1797 = vsel %vm1796, %v1789, %v1793
      %v1798 = vand.u32 2147483647, %v1773
      %vm1799 = vcmp.eq.f32.partialorder %v1798, 8.507059e+37
      %v1800 = vand.u32 %v1773, 2147483648
      %v1801 = vor.u32 1.1754944e-38, %v1800
      %v1802 = vsel %vm1799, %v1801, %v1797
      %v1803 = vmul.f32 1.0, %v1802
      %v1804 = vmul.f32 %v1748, %v1720
      %v1805 = vmul.f32 %v1763, %v1722
      %v1806 = vadd.f32 %v1678, %v1804
      %v1807 = vadd.f32 %v1681, %v1805
      %v1808 = vtanh.pop %v1806
      %v1809 = vtanh.pop %v1807
      %v1810 = vsub.f32 1.0, %v1788
      %v1811 = vsub.f32 1.0, %v1803
      %v1812 = vmul.f32 %v1810, %v1808
      %v1813 = vmul.f32 %v1811, %v1809
      %v1814 = vmul.f32 %v1788, %v1483
      %v1815 = vmul.f32 %v1803, %v1484
      %v1816 = vadd.f32 %v1812, %v1814
      %v1817 = vadd.f32 %v1813, %v1815
      %v1818 = vpack.c.bf16 %v1817, %v1816
      %1819 = vmatpush.bf16.msra.mxu0 %v966
      %1820 = vmatpush.bf16.msra.mxu0 %v963
      %1821 = vmatpush.bf16.msra.mxu0 %v960
      %1822 = vmatpush.bf16.msra.mxu0 %v957
      %1823 = vmatpush.bf16.msra.mxu0 %v954
      %1824 = vmatpush.bf16.msra.mxu0 %v951
      %1825 = vmatpush.bf16.msra.mxu0 %v948
      %1826 = vmatpush.bf16.msra.mxu0 %v945
      %1827 = vmatmul.bf16.gmra.mxu0 %v1818
      %v1828 = vpop.f32.mrf.mxu0
      %v1829 = vadd.f32 %v136, %v1828
      %v1830 = vpop.f32.mrf.mxu0
      %v1831 = vadd.f32 %v136, %v1830
      %1832 = vdwg.mxu0
      %1833 = vmatpush.bf16.msra.mxu0 %v967
      %1834 = vmatpush.bf16.msra.mxu0 %v964
      %1835 = vmatpush.bf16.msra.mxu0 %v961
      %1836 = vmatpush.bf16.msra.mxu0 %v958
      %1837 = vmatpush.bf16.msra.mxu0 %v955
      %1838 = vmatpush.bf16.msra.mxu0 %v952
      %1839 = vmatpush.bf16.msra.mxu0 %v949
      %1840 = vmatpush.bf16.msra.mxu0 %v946
      %1841 = vmatmul.bf16.gmra.mxu0 %v1818
      %v1842 = vpop.f32.mrf.mxu0
      %v1843 = vadd.f32 %v137, %v1842
      %v1844 = vpop.f32.mrf.mxu0
      %v1845 = vadd.f32 %v137, %v1844
      %1846 = vdwg.mxu0
      %1847 = vmatpush.bf16.msra.mxu0 %v968
      %1848 = vmatpush.bf16.msra.mxu0 %v965
      %1849 = vmatpush.bf16.msra.mxu0 %v962
      %1850 = vmatpush.bf16.msra.mxu0 %v959
      %1851 = vmatpush.bf16.msra.mxu0 %v956
      %1852 = vmatpush.bf16.msra.mxu0 %v953
      %1853 = vmatpush.bf16.msra.mxu0 %v950
      %1854 = vmatpush.bf16.msra.mxu0 %v947
      %1855 = vmatmul.bf16.gmra.mxu0 %v1818
      %v1856 = vpop.f32.mrf.mxu0
      %v1857 = vadd.f32 %v138, %v1856
      %v1858 = vpop.f32.mrf.mxu0
      %v1859 = vadd.f32 %v138, %v1858
      %1860 = vdwg.mxu0
      %v1861 = vpack.c.bf16 %v1664, %v1663
      %1862 = vmatpush.bf16.msra.mxu0 %v1169
      %1863 = vmatpush.bf16.msra.mxu0 %v1166
      %1864 = vmatpush.bf16.msra.mxu0 %v1163
      %1865 = vmatpush.bf16.msra.mxu0 %v1160
      %1866 = vmatpush.bf16.msra.mxu0 %v1157
      %1867 = vmatpush.bf16.msra.mxu0 %v1154
      %1868 = vmatpush.bf16.msra.mxu0 %v1151
      %1869 = vmatpush.bf16.msra.mxu0 %v1148
      %1870 = vmatmul.bf16.gmra.mxu0 %v1861
      %v1871 = vpop.f32.mrf.mxu0
      %v1872 = vadd.f32 %v128, %v1871
      %v1873 = vpop.f32.mrf.mxu0
      %v1874 = vadd.f32 %v128, %v1873
      %1875 = vdwg.mxu0
      %1876 = vmatpush.bf16.msra.mxu0 %v1170
      %1877 = vmatpush.bf16.msra.mxu0 %v1167
      %1878 = vmatpush.bf16.msra.mxu0 %v1164
      %1879 = vmatpush.bf16.msra.mxu0 %v1161
      %1880 = vmatpush.bf16.msra.mxu0 %v1158
      %1881 = vmatpush.bf16.msra.mxu0 %v1155
      %1882 = vmatpush.bf16.msra.mxu0 %v1152
      %1883 = vmatpush.bf16.msra.mxu0 %v1149
      %1884 = vmatmul.bf16.gmra.mxu0 %v1861
      %v1885 = vpop.f32.mrf.mxu0
      %v1886 = vadd.f32 %v129, %v1885
      %v1887 = vpop.f32.mrf.mxu0
      %v1888 = vadd.f32 %v129, %v1887
      %1889 = vdwg.mxu0
      %1890 = vmatpush.bf16.msra.mxu0 %v1171
      %1891 = vmatpush.bf16.msra.mxu0 %v1168
      %1892 = vmatpush.bf16.msra.mxu0 %v1165
      %1893 = vmatpush.bf16.msra.mxu0 %v1162
      %1894 = vmatpush.bf16.msra.mxu0 %v1159
      %1895 = vmatpush.bf16.msra.mxu0 %v1156
      %1896 = vmatpush.bf16.msra.mxu0 %v1153
      %1897 = vmatpush.bf16.msra.mxu0 %v1150
      %1898 = vmatmul.bf16.gmra.mxu0 %v1861
      %v1899 = vpop.f32.mrf.mxu0
      %v1900 = vadd.f32 %v130, %v1899
      %v1901 = vpop.f32.mrf.mxu0
      %v1902 = vadd.f32 %v130, %v1901
      %1903 = vdwg.mxu0
      %v1904 = vadd.f32 %v1829, %v1872
      %v1905 = vadd.f32 %v1831, %v1874
      %v1906 = vxor.u32 %v1904, 2147483648
      %v1907 = vxor.u32 %v1905, 2147483648
      %v1908 = vmul.f32 %v1906, 1.442695
      %v1909 = vpow.pop %v1908
      %v1910 = vmul.f32 %v1907, 1.442695
      %v1911 = vpow.pop %v1910
      %v1912 = vadd.f32 %v1909, 1.0
      %v1913 = vadd.f32 %v1911, 1.0
      %v1914 = vrcp.pop %v1912
      %v1915 = vmul.f32 %v1912, %v1914
      %v1916 = vsub.f32 1.0, %v1915
      %v1917 = vmul.f32 %v1914, %v1916
      %v1918 = vadd.f32 %v1914, %v1917
      %vm1919 = vweird.f32 %v1912
      %vm1920 = vweird.f32 %v1914
      %vm1921 = vmor %vm1919, %vm1920
      %v1922 = vsel %vm1921, %v1914, %v1918
      %v1923 = vand.u32 2147483647, %v1912
      %vm1924 = vcmp.eq.f32.partialorder %v1923, 8.507059e+37
      %v1925 = vand.u32 %v1912, 2147483648
      %v1926 = vor.u32 1.1754944e-38, %v1925
      %v1927 = vsel %vm1924, %v1926, %v1922
      %v1928 = vmul.f32 1.0, %v1927
      %v1929 = vrcp.pop %v1913
      %v1930 = vmul.f32 %v1913, %v1929
      %v1931 = vsub.f32 1.0, %v1930
      %v1932 = vmul.f32 %v1929, %v1931
      %v1933 = vadd.f32 %v1929, %v1932
      %vm1934 = vweird.f32 %v1913
      %vm1935 = vweird.f32 %v1929
      %vm1936 = vmor %vm1934, %vm1935
      %v1937 = vsel %vm1936, %v1929, %v1933
      %v1938 = vand.u32 2147483647, %v1913
      %vm1939 = vcmp.eq.f32.partialorder %v1938, 8.507059e+37
      %v1940 = vand.u32 %v1913, 2147483648
      %v1941 = vor.u32 1.1754944e-38, %v1940
      %v1942 = vsel %vm1939, %v1941, %v1937
      %v1943 = vmul.f32 1.0, %v1942
      %v1944 = vadd.f32 %v1843, %v1886
      %v1945 = vadd.f32 %v1845, %v1888
      %v1946 = vxor.u32 %v1944, 2147483648
      %v1947 = vxor.u32 %v1945, 2147483648
      %v1948 = vmul.f32 %v1946, 1.442695
      %v1949 = vpow.pop %v1948
      %v1950 = vmul.f32 %v1947, 1.442695
      %v1951 = vpow.pop %v1950
      %v1952 = vadd.f32 %v1949, 1.0
      %v1953 = vadd.f32 %v1951, 1.0
      %v1954 = vrcp.pop %v1952
      %v1955 = vmul.f32 %v1952, %v1954
      %v1956 = vsub.f32 1.0, %v1955
      %v1957 = vmul.f32 %v1954, %v1956
      %v1958 = vadd.f32 %v1954, %v1957
      %vm1959 = vweird.f32 %v1952
      %vm1960 = vweird.f32 %v1954
      %vm1961 = vmor %vm1959, %vm1960
      %v1962 = vsel %vm1961, %v1954, %v1958
      %v1963 = vand.u32 2147483647, %v1952
      %vm1964 = vcmp.eq.f32.partialorder %v1963, 8.507059e+37
      %v1965 = vand.u32 %v1952, 2147483648
      %v1966 = vor.u32 1.1754944e-38, %v1965
      %v1967 = vsel %vm1964, %v1966, %v1962
      %v1968 = vmul.f32 1.0, %v1967
      %v1969 = vrcp.pop %v1953
      %v1970 = vmul.f32 %v1953, %v1969
      %v1971 = vsub.f32 1.0, %v1970
      %v1972 = vmul.f32 %v1969, %v1971
      %v1973 = vadd.f32 %v1969, %v1972
      %vm1974 = vweird.f32 %v1953
      %vm1975 = vweird.f32 %v1969
      %vm1976 = vmor %vm1974, %vm1975
      %v1977 = vsel %vm1976, %v1969, %v1973
      %v1978 = vand.u32 2147483647, %v1953
      %vm1979 = vcmp.eq.f32.partialorder %v1978, 8.507059e+37
      %v1980 = vand.u32 %v1953, 2147483648
      %v1981 = vor.u32 1.1754944e-38, %v1980
      %v1982 = vsel %vm1979, %v1981, %v1977
      %v1983 = vmul.f32 1.0, %v1982
      %v1984 = vmul.f32 %v1928, %v1900
      %v1985 = vmul.f32 %v1943, %v1902
      %v1986 = vadd.f32 %v1857, %v1984
      %v1987 = vadd.f32 %v1859, %v1985
      %v1988 = vtanh.pop %v1986
      %v1989 = vtanh.pop %v1987
      %v1990 = vsub.f32 1.0, %v1968
      %v1991 = vsub.f32 1.0, %v1983
      %v1992 = vmul.f32 %v1990, %v1988
      %v1993 = vmul.f32 %v1991, %v1989
      %v1994 = vmul.f32 %v1968, %v1663
      %v1995 = vmul.f32 %v1983, %v1664
      %v1996 = vadd.f32 %v1992, %v1994
      %v1997 = vadd.f32 %v1993, %v1995
      %s1998 = sadd.s32 %s518, 3
      %s1999 = smul.u32 %s1998, 16
      %s2000 = sshra.s32 %s1999, 3
      %s2001 = sand.u32 %s1999, 7
      %s2002 = smul.u32 %s2000, 3
      %s2003 = smul.addr %s2002, 4
      %s2004 = scalar_lea.vmem [#allocation2], %s2003
      %v2005 = vld [vmem:[%s2004] sm:$0xff]
      %v2006 = vld [vmem:[%s2004 + $0x8] sm:$0xf]
      %v2007 = vld [vmem:[%s2004 + $0xc] sm:$0xff]
      %v2008 = vld [vmem:[%s2004 + $0x14] sm:$0xf]
      %v2009 = vunpack.c.l.bf16 %v2005
      %v2010 = vunpack.c.h.bf16 %v2005
      %v2011 = vunpack.c.l.bf16 %v2006
      %v2012 = vunpack.c.l.bf16 %v2007
      %v2013 = vunpack.c.h.bf16 %v2007
      %v2014 = vunpack.c.l.bf16 %v2008
      %2015 = vmatpush.bf16.msra.mxu0 %v669
      %2016 = vmatpush.bf16.msra.mxu0 %v666
      %2017 = vmatpush.bf16.msra.mxu0 %v663
      %2018 = vmatpush.bf16.msra.mxu0 %v660
      %2019 = vmatpush.bf16.msra.mxu0 %v657
      %2020 = vmatpush.bf16.msra.mxu0 %v654
      %2021 = vmatpush.bf16.msra.mxu0 %v651
      %2022 = vmatpush.bf16.msra.mxu0 %v648
      %2023 = vmatmul.bf16.gmra.mxu0 %v1818
      %v2024 = vpop.f32.mrf.mxu0
      %v2025 = vadd.f32 %v120, %v2024
      %v2026 = vpop.f32.mrf.mxu0
      %v2027 = vadd.f32 %v120, %v2026
      %2028 = vdwg.mxu0
      %2029 = vmatpush.bf16.msra.mxu0 %v670
      %2030 = vmatpush.bf16.msra.mxu0 %v667
      %2031 = vmatpush.bf16.msra.mxu0 %v664
      %2032 = vmatpush.bf16.msra.mxu0 %v661
      %2033 = vmatpush.bf16.msra.mxu0 %v658
      %2034 = vmatpush.bf16.msra.mxu0 %v655
      %2035 = vmatpush.bf16.msra.mxu0 %v652
      %2036 = vmatpush.bf16.msra.mxu0 %v649
      %2037 = vmatmul.bf16.gmra.mxu0 %v1818
      %v2038 = vpop.f32.mrf.mxu0
      %v2039 = vadd.f32 %v121, %v2038
      %v2040 = vpop.f32.mrf.mxu0
      %v2041 = vadd.f32 %v121, %v2040
      %2042 = vdwg.mxu0
      %2043 = vmatpush.bf16.msra.mxu0 %v671
      %2044 = vmatpush.bf16.msra.mxu0 %v668
      %2045 = vmatpush.bf16.msra.mxu0 %v665
      %2046 = vmatpush.bf16.msra.mxu0 %v662
      %2047 = vmatpush.bf16.msra.mxu0 %v659
      %2048 = vmatpush.bf16.msra.mxu0 %v656
      %2049 = vmatpush.bf16.msra.mxu0 %v653
      %2050 = vmatpush.bf16.msra.mxu0 %v650
      %2051 = vmatmul.bf16.gmra.mxu0 %v1818
      %v2052 = vpop.f32.mrf.mxu0
      %v2053 = vadd.f32 %v122, %v2052
      %v2054 = vpop.f32.mrf.mxu0
      %v2055 = vadd.f32 %v122, %v2054
      %2056 = vdwg.mxu0
      %v2057 = vadd.f32 %v2009, %v2025
      %v2058 = vadd.f32 %v2012, %v2027
      %v2059 = vxor.u32 %v2057, 2147483648
      %v2060 = vxor.u32 %v2058, 2147483648
      %v2061 = vmul.f32 %v2059, 1.442695
      %v2062 = vpow.pop %v2061
      %v2063 = vmul.f32 %v2060, 1.442695
      %v2064 = vpow.pop %v2063
      %v2065 = vadd.f32 %v2062, 1.0
      %v2066 = vadd.f32 %v2064, 1.0
      %v2067 = vrcp.pop %v2065
      %v2068 = vmul.f32 %v2065, %v2067
      %v2069 = vsub.f32 1.0, %v2068
      %v2070 = vmul.f32 %v2067, %v2069
      %v2071 = vadd.f32 %v2067, %v2070
      %vm2072 = vweird.f32 %v2065
      %vm2073 = vweird.f32 %v2067
      %vm2074 = vmor %vm2072, %vm2073
      %v2075 = vsel %vm2074, %v2067, %v2071
      %v2076 = vand.u32 2147483647, %v2065
      %vm2077 = vcmp.eq.f32.partialorder %v2076, 8.507059e+37
      %v2078 = vand.u32 %v2065, 2147483648
      %v2079 = vor.u32 1.1754944e-38, %v2078
      %v2080 = vsel %vm2077, %v2079, %v2075
      %v2081 = vmul.f32 1.0, %v2080
      %v2082 = vrcp.pop %v2066
      %v2083 = vmul.f32 %v2066, %v2082
      %v2084 = vsub.f32 1.0, %v2083
      %v2085 = vmul.f32 %v2082, %v2084
      %v2086 = vadd.f32 %v2082, %v2085
      %vm2087 = vweird.f32 %v2066
      %vm2088 = vweird.f32 %v2082
      %vm2089 = vmor %vm2087, %vm2088
      %v2090 = vsel %vm2089, %v2082, %v2086
      %v2091 = vand.u32 2147483647, %v2066
      %vm2092 = vcmp.eq.f32.partialorder %v2091, 8.507059e+37
      %v2093 = vand.u32 %v2066, 2147483648
      %v2094 = vor.u32 1.1754944e-38, %v2093
      %v2095 = vsel %vm2092, %v2094, %v2090
      %v2096 = vmul.f32 1.0, %v2095
      %v2097 = vadd.f32 %v2010, %v2039
      %v2098 = vadd.f32 %v2013, %v2041
      %v2099 = vxor.u32 %v2097, 2147483648
      %v2100 = vxor.u32 %v2098, 2147483648
      %v2101 = vmul.f32 %v2099, 1.442695
      %v2102 = vpow.pop %v2101
      %v2103 = vmul.f32 %v2100, 1.442695
      %v2104 = vpow.pop %v2103
      %v2105 = vadd.f32 %v2102, 1.0
      %v2106 = vadd.f32 %v2104, 1.0
      %v2107 = vrcp.pop %v2105
      %v2108 = vmul.f32 %v2105, %v2107
      %v2109 = vsub.f32 1.0, %v2108
      %v2110 = vmul.f32 %v2107, %v2109
      %v2111 = vadd.f32 %v2107, %v2110
      %vm2112 = vweird.f32 %v2105
      %vm2113 = vweird.f32 %v2107
      %vm2114 = vmor %vm2112, %vm2113
      %v2115 = vsel %vm2114, %v2107, %v2111
      %v2116 = vand.u32 2147483647, %v2105
      %vm2117 = vcmp.eq.f32.partialorder %v2116, 8.507059e+37
      %v2118 = vand.u32 %v2105, 2147483648
      %v2119 = vor.u32 1.1754944e-38, %v2118
      %v2120 = vsel %vm2117, %v2119, %v2115
      %v2121 = vmul.f32 1.0, %v2120
      %v2122 = vrcp.pop %v2106
      %v2123 = vmul.f32 %v2106, %v2122
      %v2124 = vsub.f32 1.0, %v2123
      %v2125 = vmul.f32 %v2122, %v2124
      %v2126 = vadd.f32 %v2122, %v2125
      %vm2127 = vweird.f32 %v2106
      %vm2128 = vweird.f32 %v2122
      %vm2129 = vmor %vm2127, %vm2128
      %v2130 = vsel %vm2129, %v2122, %v2126
      %v2131 = vand.u32 2147483647, %v2106
      %vm2132 = vcmp.eq.f32.partialorder %v2131, 8.507059e+37
      %v2133 = vand.u32 %v2106, 2147483648
      %v2134 = vor.u32 1.1754944e-38, %v2133
      %v2135 = vsel %vm2132, %v2134, %v2130
      %v2136 = vmul.f32 1.0, %v2135
      %v2137 = vmul.f32 %v2081, %v2053
      %v2138 = vmul.f32 %v2096, %v2055
      %v2139 = vadd.f32 %v2011, %v2137
      %v2140 = vadd.f32 %v2014, %v2138
      %v2141 = vtanh.pop %v2139
      %v2142 = vtanh.pop %v2140
      %v2143 = vsub.f32 1.0, %v2121
      %v2144 = vsub.f32 1.0, %v2136
      %v2145 = vmul.f32 %v2143, %v2141
      %v2146 = vmul.f32 %v2144, %v2142
      %v2147 = vmul.f32 %v2121, %v1816
      %v2148 = vmul.f32 %v2136, %v1817
      %v2149 = vadd.f32 %v2145, %v2147
      %v2150 = vadd.f32 %v2146, %v2148
      %v2151 = vpack.c.bf16 %v2150, %v2149
      %2152 = vmatpush.bf16.msra.mxu0 %v966
      %2153 = vmatpush.bf16.msra.mxu0 %v963
      %2154 = vmatpush.bf16.msra.mxu0 %v960
      %2155 = vmatpush.bf16.msra.mxu0 %v957
      %2156 = vmatpush.bf16.msra.mxu0 %v954
      %2157 = vmatpush.bf16.msra.mxu0 %v951
      %2158 = vmatpush.bf16.msra.mxu0 %v948
      %2159 = vmatpush.bf16.msra.mxu0 %v945
      %2160 = vmatmul.bf16.gmra.mxu0 %v2151
      %v2161 = vpop.f32.mrf.mxu0
      %v2162 = vadd.f32 %v136, %v2161
      %v2163 = vpop.f32.mrf.mxu0
      %v2164 = vadd.f32 %v136, %v2163
      %2165 = vdwg.mxu0
      %2166 = vmatpush.bf16.msra.mxu0 %v967
      %2167 = vmatpush.bf16.msra.mxu0 %v964
      %2168 = vmatpush.bf16.msra.mxu0 %v961
      %2169 = vmatpush.bf16.msra.mxu0 %v958
      %2170 = vmatpush.bf16.msra.mxu0 %v955
      %2171 = vmatpush.bf16.msra.mxu0 %v952
      %2172 = vmatpush.bf16.msra.mxu0 %v949
      %2173 = vmatpush.bf16.msra.mxu0 %v946
      %2174 = vmatmul.bf16.gmra.mxu0 %v2151
      %v2175 = vpop.f32.mrf.mxu0
      %v2176 = vadd.f32 %v137, %v2175
      %v2177 = vpop.f32.mrf.mxu0
      %v2178 = vadd.f32 %v137, %v2177
      %2179 = vdwg.mxu0
      %2180 = vmatpush.bf16.msra.mxu0 %v968
      %2181 = vmatpush.bf16.msra.mxu0 %v965
      %2182 = vmatpush.bf16.msra.mxu0 %v962
      %2183 = vmatpush.bf16.msra.mxu0 %v959
      %2184 = vmatpush.bf16.msra.mxu0 %v956
      %2185 = vmatpush.bf16.msra.mxu0 %v953
      %2186 = vmatpush.bf16.msra.mxu0 %v950
      %2187 = vmatpush.bf16.msra.mxu0 %v947
      %2188 = vmatmul.bf16.gmra.mxu0 %v2151
      %v2189 = vpop.f32.mrf.mxu0
      %v2190 = vadd.f32 %v138, %v2189
      %v2191 = vpop.f32.mrf.mxu0
      %v2192 = vadd.f32 %v138, %v2191
      %2193 = vdwg.mxu0
      %v2194 = vpack.c.bf16 %v1997, %v1996
      %2195 = vmatpush.bf16.msra.mxu0 %v1169
      %2196 = vmatpush.bf16.msra.mxu0 %v1166
      %2197 = vmatpush.bf16.msra.mxu0 %v1163
      %2198 = vmatpush.bf16.msra.mxu0 %v1160
      %2199 = vmatpush.bf16.msra.mxu0 %v1157
      %2200 = vmatpush.bf16.msra.mxu0 %v1154
      %2201 = vmatpush.bf16.msra.mxu0 %v1151
      %2202 = vmatpush.bf16.msra.mxu0 %v1148
      %2203 = vmatmul.bf16.gmra.mxu0 %v2194
      %v2204 = vpop.f32.mrf.mxu0
      %v2205 = vadd.f32 %v128, %v2204
      %v2206 = vpop.f32.mrf.mxu0
      %v2207 = vadd.f32 %v128, %v2206
      %2208 = vdwg.mxu0
      %2209 = vmatpush.bf16.msra.mxu0 %v1170
      %2210 = vmatpush.bf16.msra.mxu0 %v1167
      %2211 = vmatpush.bf16.msra.mxu0 %v1164
      %2212 = vmatpush.bf16.msra.mxu0 %v1161
      %2213 = vmatpush.bf16.msra.mxu0 %v1158
      %2214 = vmatpush.bf16.msra.mxu0 %v1155
      %2215 = vmatpush.bf16.msra.mxu0 %v1152
      %2216 = vmatpush.bf16.msra.mxu0 %v1149
      %2217 = vmatmul.bf16.gmra.mxu0 %v2194
      %v2218 = vpop.f32.mrf.mxu0
      %v2219 = vadd.f32 %v129, %v2218
      %v2220 = vpop.f32.mrf.mxu0
      %v2221 = vadd.f32 %v129, %v2220
      %2222 = vdwg.mxu0
      %2223 = vmatpush.bf16.msra.mxu0 %v1171
      %2224 = vmatpush.bf16.msra.mxu0 %v1168
      %2225 = vmatpush.bf16.msra.mxu0 %v1165
      %2226 = vmatpush.bf16.msra.mxu0 %v1162
      %2227 = vmatpush.bf16.msra.mxu0 %v1159
      %2228 = vmatpush.bf16.msra.mxu0 %v1156
      %2229 = vmatpush.bf16.msra.mxu0 %v1153
      %2230 = vmatpush.bf16.msra.mxu0 %v1150
      %2231 = vmatmul.bf16.gmra.mxu0 %v2194
      %v2232 = vpop.f32.mrf.mxu0
      %v2233 = vadd.f32 %v130, %v2232
      %v2234 = vpop.f32.mrf.mxu0
      %v2235 = vadd.f32 %v130, %v2234
      %2236 = vdwg.mxu0
      %v2237 = vadd.f32 %v2162, %v2205
      %v2238 = vadd.f32 %v2164, %v2207
      %v2239 = vxor.u32 %v2237, 2147483648
      %v2240 = vxor.u32 %v2238, 2147483648
      %v2241 = vmul.f32 %v2239, 1.442695
      %v2242 = vpow.pop %v2241
      %v2243 = vmul.f32 %v2240, 1.442695
      %v2244 = vpow.pop %v2243
      %v2245 = vadd.f32 %v2242, 1.0
      %v2246 = vadd.f32 %v2244, 1.0
      %v2247 = vrcp.pop %v2245
      %v2248 = vmul.f32 %v2245, %v2247
      %v2249 = vsub.f32 1.0, %v2248
      %v2250 = vmul.f32 %v2247, %v2249
      %v2251 = vadd.f32 %v2247, %v2250
      %vm2252 = vweird.f32 %v2245
      %vm2253 = vweird.f32 %v2247
      %vm2254 = vmor %vm2252, %vm2253
      %v2255 = vsel %vm2254, %v2247, %v2251
      %v2256 = vand.u32 2147483647, %v2245
      %vm2257 = vcmp.eq.f32.partialorder %v2256, 8.507059e+37
      %v2258 = vand.u32 %v2245, 2147483648
      %v2259 = vor.u32 1.1754944e-38, %v2258
      %v2260 = vsel %vm2257, %v2259, %v2255
      %v2261 = vmul.f32 1.0, %v2260
      %v2262 = vrcp.pop %v2246
      %v2263 = vmul.f32 %v2246, %v2262
      %v2264 = vsub.f32 1.0, %v2263
      %v2265 = vmul.f32 %v2262, %v2264
      %v2266 = vadd.f32 %v2262, %v2265
      %vm2267 = vweird.f32 %v2246
      %vm2268 = vweird.f32 %v2262
      %vm2269 = vmor %vm2267, %vm2268
      %v2270 = vsel %vm2269, %v2262, %v2266
      %v2271 = vand.u32 2147483647, %v2246
      %vm2272 = vcmp.eq.f32.partialorder %v2271, 8.507059e+37
      %v2273 = vand.u32 %v2246, 2147483648
      %v2274 = vor.u32 1.1754944e-38, %v2273
      %v2275 = vsel %vm2272, %v2274, %v2270
      %v2276 = vmul.f32 1.0, %v2275
      %v2277 = vadd.f32 %v2176, %v2219
      %v2278 = vadd.f32 %v2178, %v2221
      %v2279 = vxor.u32 %v2277, 2147483648
      %v2280 = vxor.u32 %v2278, 2147483648
      %v2281 = vmul.f32 %v2279, 1.442695
      %v2282 = vpow.pop %v2281
      %v2283 = vmul.f32 %v2280, 1.442695
      %v2284 = vpow.pop %v2283
      %v2285 = vadd.f32 %v2282, 1.0
      %v2286 = vadd.f32 %v2284, 1.0
      %v2287 = vrcp.pop %v2285
      %v2288 = vmul.f32 %v2285, %v2287
      %v2289 = vsub.f32 1.0, %v2288
      %v2290 = vmul.f32 %v2287, %v2289
      %v2291 = vadd.f32 %v2287, %v2290
      %vm2292 = vweird.f32 %v2285
      %vm2293 = vweird.f32 %v2287
      %vm2294 = vmor %vm2292, %vm2293
      %v2295 = vsel %vm2294, %v2287, %v2291
      %v2296 = vand.u32 2147483647, %v2285
      %vm2297 = vcmp.eq.f32.partialorder %v2296, 8.507059e+37
      %v2298 = vand.u32 %v2285, 2147483648
      %v2299 = vor.u32 1.1754944e-38, %v2298
      %v2300 = vsel %vm2297, %v2299, %v2295
      %v2301 = vmul.f32 1.0, %v2300
      %v2302 = vrcp.pop %v2286
      %v2303 = vmul.f32 %v2286, %v2302
      %v2304 = vsub.f32 1.0, %v2303
      %v2305 = vmul.f32 %v2302, %v2304
      %v2306 = vadd.f32 %v2302, %v2305
      %vm2307 = vweird.f32 %v2286
      %vm2308 = vweird.f32 %v2302
      %vm2309 = vmor %vm2307, %vm2308
      %v2310 = vsel %vm2309, %v2302, %v2306
      %v2311 = vand.u32 2147483647, %v2286
      %vm2312 = vcmp.eq.f32.partialorder %v2311, 8.507059e+37
      %v2313 = vand.u32 %v2286, 2147483648
      %v2314 = vor.u32 1.1754944e-38, %v2313
      %v2315 = vsel %vm2312, %v2314, %v2310
      %v2316 = vmul.f32 1.0, %v2315
      %v2317 = vmul.f32 %v2261, %v2233
      %v2318 = vmul.f32 %v2276, %v2235
      %v2319 = vadd.f32 %v2190, %v2317
      %v2320 = vadd.f32 %v2192, %v2318
      %v2321 = vtanh.pop %v2319
      %v2322 = vtanh.pop %v2320
      %v2323 = vsub.f32 1.0, %v2301
      %v2324 = vsub.f32 1.0, %v2316
      %v2325 = vmul.f32 %v2323, %v2321
      %v2326 = vmul.f32 %v2324, %v2322
      %v2327 = vmul.f32 %v2301, %v1996
      %v2328 = vmul.f32 %v2316, %v1997
      %v2329 = vadd.f32 %v2325, %v2327
      %v2330 = vadd.f32 %v2326, %v2328
    $region74: #{grunet_forward.1} parent=1 // loop_footer
      %s513 = sadd.s32 1, %s509
    $region75: #{grunet_forward.1} parent=1 // loop_footer_branch
      %508 = sbr.rel target = $region71
    $region76: #{grunet_forward.1} parent=1 // loop_exit
      _
    %2331 = vst [vmem:[#allocation3] sm:$0xff] %v514
    %2332 = vst [vmem:[#allocation3 + $0x8] sm:$0xff] %v515
    %2333 = vst [vmem:[#allocation4] sm:$0xff] %v516
    %2334 = vst [vmem:[#allocation4 + $0x8] sm:$0xff] %v517
    // Predicated region
    $region77: #{grunet_forward.1} parent=1 // pred_check
      %p2335 = pneg %p105
    $region78: #{grunet_forward.1} parent=1 // pred_check_branch
      %2337 = sbr.rel (%p2335) target = $region80
    $region79: #{grunet_forward.1} parent=1 // pred_region
      %2338 = vst [vmem:[%s13] sm:$0xff] %v514
      %2339 = vst [vmem:[%s13 + $0x8] sm:$0xff] %v515
      %s2340 = scalar_lea.vmem %s13, 16
      %2341 = vst [vmem:[%s2340] sm:$0xff] %v516
      %2342 = vst [vmem:[%s2340 + $0x8] sm:$0xff] %v517
      %2343 = vmax.xlane.f32.xlu0 %v516
      %v2344 = vpop.xlane.xlu0 %2343
      %2345 = vmax.xlane.f32.xlu0 %v517
      %v2346 = vpop.xlane.xlu0 %2345
      %v2347 = vsub.f32 %v516, %v2344
      %v2348 = vsub.f32 %v517, %v2346
      %v2349 = vmul.f32 %v2347, 1.442695
      %v2350 = vpow.pop %v2349
      %v2351 = vmul.f32 %v2348, 1.442695
      %v2352 = vpow.pop %v2351
      %2353 = vadd.xlane.f32.xlu0 %v2350
      %v2354 = vpop.xlane.xlu0 %2353
      %2355 = vadd.xlane.f32.xlu0 %v2352
      %v2356 = vpop.xlane.xlu0 %2355
      %v2357 = vrcp.pop %v2354
      %v2358 = vrcp.pop %v2356
      %v2359 = vmul.f32 %v2350, %v2357
      %v2360 = vmul.f32 %v2352, %v2358
      %v2361 = vld [vmem:[#allocation10] sm:$0xff]
      %v2362 = vld [vmem:[#allocation10 + $0x8] sm:$0xff]
      %v2363 = vld [vmem:[#allocation10 + $0x10] sm:$0xff]
      %v2364 = vld [vmem:[#allocation10 + $0x18] sm:$0xff]
      %v2365 = vld [vmem:[#allocation10 + $0x20] sm:$0xff]
      %v2366 = vld [vmem:[#allocation10 + $0x28] sm:$0xff]
      %v2367 = vld [vmem:[#allocation10 + $0x30] sm:$0xff]
      %v2368 = vld [vmem:[#allocation10 + $0x38] sm:$0xff]
      %v2369 = vld [vmem:[#allocation10 + $0x40] sm:$0xff]
      %v2370 = vld [vmem:[#allocation10 + $0x48] sm:$0xff]
      %v2371 = vld [vmem:[#allocation10 + $0x50] sm:$0xff]
      %v2372 = vld [vmem:[#allocation10 + $0x58] sm:$0xff]
      %v2373 = vld [vmem:[#allocation10 + $0x60] sm:$0xff]
      %v2374 = vld [vmem:[#allocation10 + $0x68] sm:$0xff]
      %v2375 = vld [vmem:[#allocation10 + $0x70] sm:$0xff]
      %v2376 = vld [vmem:[#allocation10 + $0x78] sm:$0xff]
      %v2377 = vld [vmem:[%s11] sm:$0x1]
      %v2379 = vperm.slane %v2377, 0
      %2381 = vmatpush.msra.mxu0 %v2376
      %2382 = vmatpush.msra.mxu0 %v2375
      %2383 = vmatpush.msra.mxu0 %v2374
      %2384 = vmatpush.msra.mxu0 %v2373
      %2385 = vmatpush.msra.mxu0 %v2372
      %2386 = vmatpush.msra.mxu0 %v2371
      %2387 = vmatpush.msra.mxu0 %v2370
      %2388 = vmatpush.msra.mxu0 %v2369
      %2389 = vmatpush.msra.mxu0 %v2368
      %2390 = vmatpush.msra.mxu0 %v2367
      %2391 = vmatpush.msra.mxu0 %v2366
      %2392 = vmatpush.msra.mxu0 %v2365
      %2393 = vmatpush.msra.mxu0 %v2364
      %2394 = vmatpush.msra.mxu0 %v2363
      %2395 = vmatpush.msra.mxu0 %v2362
      %2396 = vmatpush.msra.mxu0 %v2361
      %2397 = vmatmul.f32.gmra.mxu0 %v2359
      %v2398 = vpop.f32.mrf.mxu0
      %v2399 = vadd.f32 %v2379, %v2398
      %2400 = vmatmul.f32.gmra.mxu0 %v2360
      %v2401 = vpop.f32.mrf.mxu0
      %v2402 = vadd.f32 %v2379, %v2401
      %2403 = vdwg.mxu0
      %2404 = vst [vmem:[%s12] sm:$0xff] %v2399
      %2405 = vst [vmem:[%s12 + $0x8] sm:$0xff] %v2402
    $region80: #{grunet_forward.1} parent=1 // pred_fallthru
      _
    // Predicated region
    $region81: #{grunet_forward.1} parent=1 // pred_check
      _
    $region82: #{grunet_forward.1} parent=1 // pred_check_branch
      %2407 = sbr.rel (0) target = $region84
    $region83: #{grunet_forward.1} parent=1 // pred_region
      _
    $region84: #{grunet_forward.1} parent=1 // pred_fallthru
      _
    // Predicated region
    $region85: #{grunet_forward.1} parent=1 // pred_check
      _
    $region86: #{grunet_forward.1} parent=1 // pred_check_branch
      %2409 = sbr.rel (0) target = $region88
    $region87: #{grunet_forward.1} parent=1 // pred_region
      _
    $region88: #{grunet_forward.1} parent=1 // pred_fallthru
      _
    // Predicated region
    $region89: #{grunet_forward.1} parent=1 // pred_check
      _
    $region90: #{grunet_forward.1} parent=1 // pred_check_branch
      %2411 = sbr.rel (0) target = $region92
    $region91: #{grunet_forward.1} parent=1 // pred_region
      _
    $region92: #{grunet_forward.1} parent=1 // pred_fallthru
      _
    // Predicated region
    $region93: #{grunet_forward.1} parent=1 // pred_check
      _
    $region94: #{grunet_forward.1} parent=1 // pred_check_branch
      %2413 = sbr.rel (0) target = $region96
    $region95: #{grunet_forward.1} parent=1 // pred_region
      _
    $region96: #{grunet_forward.1} parent=1 // pred_fallthru
      _
    %2414 = vsyncpa [#allocation6], 1
    %2415 = vsyncpa [#allocation8], 1
    %2416 = vsyncpa [#allocation11], 1

</llo_original>
